<compile_context>
chip_gen: v7x
topology: tpu7x:2x2x1
jax: 0.10.0
libtpu: 0.0.40
codegen_flags: <defaults>
</compile_context>

<pallas_src>
import functools

import jax
import jax.numpy as jnp
import numpy as np
from jax.experimental import pallas as pl
from jax.experimental.pallas import tpu as pltpu

FC1_K = 7 * 7 * 64          # 3136, hardcoded by the module's first Linear
FC1_K_PAD = 3200            # padded to a multiple of the 640 K-tile (and of 128)
FC_TK = 640                 # FC1 K-tile (5 grid steps, double-buffered weight DMA)
FC_OUT_LANES = 128          # lane-dense padded width of the Q output


# ----------------------------- Pallas kernels -----------------------------

def _matmul_bias_kernel(x_ref, w_ref, b_ref, o_ref, *, relu):
    acc = jnp.dot(x_ref[...].astype(jnp.bfloat16),
                  w_ref[...].astype(jnp.bfloat16),
                  preferred_element_type=jnp.float32)
    acc = acc + b_ref[...]
    if relu:
        acc = jnp.maximum(acc, 0.0)
    o_ref[...] = acc.astype(o_ref.dtype)


def pallas_matmul_bias(x, w, b, *, relu, tm=None):
    """y = relu?(x @ w + b). x:(M,K) f32, w:(K,N) bf16, b:(1,N) f32 -> (M,N) f32.

    If tm divides M, the matmul is gridded over M (parallel -> shards across
    v7x's two TensorCores); otherwise it runs as a single block.
    """
    M, K = x.shape
    Kw, N = w.shape
    assert K == Kw, (K, Kw)
    if tm is None or M % tm != 0:
        tm = M
    return pl.pallas_call(
        functools.partial(_matmul_bias_kernel, relu=relu),
        out_shape=jax.ShapeDtypeStruct((M, N), jnp.float32),
        grid=(M // tm,),
        in_specs=[
            pl.BlockSpec((tm, K), lambda i: (i, 0)),
            pl.BlockSpec((K, N), lambda i: (0, 0)),
            pl.BlockSpec((1, N), lambda i: (0, 0)),
        ],
        out_specs=pl.BlockSpec((tm, N), lambda i: (i, 0)),
        compiler_params=pltpu.CompilerParams(
            dimension_semantics=("parallel",)),
    )(x, w, b.reshape(1, N))


def _fc_fused_kernel(x_ref, w1_ref, b1_ref, w2_ref, b2_ref, o_ref, acc_ref):
    k = pl.program_id(0)

    @pl.when(k == 0)
    def _init():
        acc_ref[...] = jnp.zeros_like(acc_ref)

    acc_ref[...] += jnp.dot(x_ref[...].astype(jnp.bfloat16),
                            w1_ref[...].astype(jnp.bfloat16),
                            preferred_element_type=jnp.float32)

    @pl.when(k == pl.num_programs(0) - 1)
    def _finalize():
        h = jnp.maximum(acc_ref[...] + b1_ref[...], 0.0)       # FC1 bias + ReLU
        q = jnp.dot(h.astype(jnp.bfloat16), w2_ref[...].astype(jnp.bfloat16),
                    preferred_element_type=jnp.float32) + b2_ref[...]
        o_ref[...] = q.astype(o_ref.dtype)


def pallas_fc_fused(x_pad, w1, b1, w2, b2, *, tk=FC_TK):
    """Fused FC1(+ReLU)+FC2. x_pad:(B,Kp) f32, w1:(Kp,H) bf16, w2:(H,128) bf16."""
    B, Kp = x_pad.shape
    _, H = w1.shape
    _, Np = w2.shape
    assert Kp % tk == 0, (Kp, tk)
    return pl.pallas_call(
        _fc_fused_kernel,
        out_shape=jax.ShapeDtypeStruct((B, Np), jnp.float32),
        grid=(Kp // tk,),
        in_specs=[
            pl.BlockSpec((B, tk), lambda k: (0, k)),
            pl.BlockSpec((tk, H), lambda k: (k, 0)),
            pl.BlockSpec((1, H), lambda k: (0, 0)),
            pl.BlockSpec((H, Np), lambda k: (0, 0)),
            pl.BlockSpec((1, Np), lambda k: (0, 0)),
        ],
        out_specs=pl.BlockSpec((B, Np), lambda k: (0, 0)),
        scratch_shapes=[pltpu.VMEM((B, H), jnp.float32)],
        compiler_params=pltpu.CompilerParams(
            dimension_semantics=("arbitrary",)),
    )(x_pad, w1, b1, w2, b2)


# ------------------------------ JAX glue ----------------------------------

def im2col_nhwc(x, kh, kw, stride):
    """(N,H,W,C) -> (N*OH*OW, KH*KW*C) with (KH,KW,C) row ordering (no big transpose)."""
    N, H, W, C = x.shape
    oh = (H - kh) // stride + 1
    ow = (W - kw) // stride + 1
    cols = []
    for i in range(kh):
        for j in range(kw):
            cols.append(x[:, i:i + stride * oh:stride,
                          j:j + stride * ow:stride, :])
    p = jnp.concatenate(cols, axis=-1)          # (N, OH, OW, KH*KW*C)
    return p.reshape(N * oh * ow, kh * kw * C), oh, ow


def dqn_forward(p, x_nchw, num_actions):
    n = x_nchw.shape[0]
    x = jnp.transpose(x_nchw, (0, 2, 3, 1))     # NCHW -> NHWC once, at the input
    conv_cfg = (("w1m", "b1", 8, 4, 200),       # conv1: M=800 -> 4 parallel blocks
                ("w2m", "b2", 4, 2, None),      # conv2: M=162 single block
                ("w3m", "b3", 3, 1, None))      # conv3: M=98  single block
    for wk, bk, ksz, stride, tm in conv_cfg:
        patches, oh, ow = im2col_nhwc(x, ksz, ksz, stride)
        y = pallas_matmul_bias(patches, p[wk], p[bk], relu=True, tm=tm)
        x = y.reshape(n, oh, ow, p[wk].shape[1])
    flat = x.reshape(n, -1)                     # NHWC flatten; wfc1 pre-permuted to match
    flat = jnp.pad(flat, ((0, 0), (0, FC1_K_PAD - flat.shape[1])))
    q = pallas_fc_fused(flat, p["wfc1m"], p["bfc1"], p["wfc2m"], p["bfc2m"])
    return q[:, :num_actions]


# ---------------------- one-time parameter preparation ---------------------

def prepare_params(params, num_actions):
    """Reorder / pre-transpose / pad / bf16-cast PyTorch-layout params (done once)."""
    def conv_w(w):
        oc, c, kh, kw = w.shape
        return (jnp.transpose(w, (2, 3, 1, 0))               # (KH,KW,C,OutC)
                .reshape(kh * kw * c, oc).astype(jnp.bfloat16))

    hidden = params["wfc1"].shape[0]                          # 512
    # FC1 weight columns are indexed by the NCHW flatten (c*49 + h*7 + w);
    # permute once so rows match the NHWC flatten (h*7*64 + w*64 + c).
    wfc1 = params["wfc1"].reshape(hidden, 64, 7, 7)
    wfc1 = jnp.transpose(wfc1, (2, 3, 1, 0)).reshape(FC1_K, hidden)
    wfc1 = jnp.pad(wfc1, ((0, FC1_K_PAD - FC1_K), (0, 0))).astype(jnp.bfloat16)

    wfc2 = jnp.transpose(params["wfc2"])                      # (hidden, A)
    wfc2 = jnp.pad(wfc2, ((0, 0), (0, FC_OUT_LANES - num_actions))).astype(jnp.bfloat16)
    bfc2 = jnp.pad(params["bfc2"], (0, FC_OUT_LANES - num_actions)).reshape(1, FC_OUT_LANES)

    return {
        "w1m": conv_w(params["w1"]), "b1": params["b1"].reshape(1, -1),
        "w2m": conv_w(params["w2"]), "b2": params["b2"].reshape(1, -1),
        "w3m": conv_w(params["w3"]), "b3": params["b3"].reshape(1, -1),
        "wfc1m": wfc1, "bfc1": params["bfc1"].reshape(1, -1),
        "wfc2m": wfc2, "bfc2m": bfc2,
    }


# ------------------------- deterministic params ----------------------------

def init_params(key, input_shape, num_actions):
    c, _, _ = input_shape

    def uni(k, shape, fan_in):
        bound = 1.0 / float(np.sqrt(fan_in))
        return jax.random.uniform(k, shape, jnp.float32, -bound, bound)

    ks = jax.random.split(key, 10)
    return {
        "w1": uni(ks[0], (32, c, 8, 8), c * 8 * 8),
        "b1": uni(ks[1], (32,), c * 8 * 8),
        "w2": uni(ks[2], (64, 32, 4, 4), 32 * 4 * 4),
        "b2": uni(ks[3], (64,), 32 * 4 * 4),
        "w3": uni(ks[4], (64, 64, 3, 3), 64 * 3 * 3),
        "b3": uni(ks[5], (64,), 64 * 3 * 3),
        "wfc1": uni(ks[6], (512, 7 * 7 * 64), 7 * 7 * 64),
        "bfc1": uni(ks[7], (512,), 7 * 7 * 64),
        "wfc2": uni(ks[8], (num_actions, 512), 512),
        "bfc2": uni(ks[9], (num_actions,), 512),
    }


# ------------------------- pure-JAX reference ------------------------------

def dqn_reference(params, x):
    dn = ("NCHW", "OIHW", "NCHW")

    def conv(x, w, b, s):
        y = jax.lax.conv_general_dilated(x, w, (s, s), "VALID",
                                         dimension_numbers=dn)
        return jnp.maximum(y + b[None, :, None, None], 0.0)

    x = conv(x, params["w1"], params["b1"], 4)
    x = conv(x, params["w2"], params["b2"], 2)
    x = conv(x, params["w3"], params["b3"], 1)
    flat = x.reshape(x.shape[0], -1)
    h = jnp.maximum(flat @ params["wfc1"].T + params["bfc1"], 0.0)
    return h @ params["wfc2"].T + params["bfc2"]


# ---------------------------------- main -----------------------------------

if __name__ == "__main__":
    # The module hardcodes 7*7*64 for the first Linear => input spatial must be 84.
    batch, c, h, w = 2, 4, 84, 84
    num_actions = 4

    key = jax.random.PRNGKey(0)
    k_params, k_x = jax.random.split(key)
    params = init_params(k_params, (c, h, w), num_actions)
    x = jax.random.normal(k_x, (batch, c, h, w), jnp.float32)

    # One-time weight reorder / pad / bf16 cast (outside the jitted forward).
    prepped = jax.tree_util.tree_map(jax.block_until_ready,
                                     prepare_params(params, num_actions))

    fwd = jax.jit(dqn_forward, static_argnums=2)
    q = jax.block_until_ready(fwd(prepped, x, num_actions))
    assert q.shape == (batch, num_actions), q.shape

    q_ref = jax.block_until_ready(dqn_reference(params, x))
    np.testing.assert_allclose(np.asarray(q), np.asarray(q_ref),
                               rtol=2e-2, atol=2e-2)

    print("KERNEL_OK")
</pallas_src>

<mosaic_0001>
module attributes {stable_mosaic.version = 11 : i64} {
  func.func @_matmul_bias_kernel(%arg0: i32, %arg1: memref<200x256xf32, #tpu.memory_space<vmem>>, %arg2: memref<256x32xbf16, #tpu.memory_space<vmem>>, %arg3: memref<1x32xf32, #tpu.memory_space<vmem>>, %arg4: memref<200x32xf32, #tpu.memory_space<vmem>>) attributes {dimension_semantics = [#tpu.dimension_semantics<parallel>], iteration_bounds = array<i64: 4>, scalar_prefetch = 0 : i64, scratch_operands = 0 : i64, tpu.core_type = #tpu.core_type<tc>, window_params = [{transform_indices = @transform_0, window_bounds = array<i64: 200, 256>}, {pipeline_mode = #tpu.pipeline_mode<synchronous>, transform_indices = @transform_1, window_bounds = array<i64: 256, 32>}, {pipeline_mode = #tpu.pipeline_mode<synchronous>, transform_indices = @transform_2, window_bounds = array<i64: 1, 32>}, {transform_indices = @transform_3, window_bounds = array<i64: 200, 32>}]} {
    %c0 = arith.constant 0 : index
    %c0_0 = arith.constant 0 : index
    %0 = vector.load %arg1[%c0, %c0_0] : memref<200x256xf32, #tpu.memory_space<vmem>>, vector<200x256xf32>
    %1 = arith.truncf %0 : vector<200x256xf32> to vector<200x256xbf16>
    %c0_1 = arith.constant 0 : index
    %c0_2 = arith.constant 0 : index
    %2 = vector.load %arg2[%c0_1, %c0_2] : memref<256x32xbf16, #tpu.memory_space<vmem>>, vector<256x32xbf16>
    %cst = arith.constant dense<0.000000e+00> : vector<200x32xf32>
    %3 = tpu.matmul %1, %2, %cst {dimension_numbers = #tpu.dot_dimension_numbers<[1], [0], [0], [1], [0, 0, 1, 1], [], []>} : vector<200x256xbf16>, vector<256x32xbf16>, vector<200x32xf32> -> vector<200x32xf32>
    %c0_3 = arith.constant 0 : index
    %c0_4 = arith.constant 0 : index
    %4 = vector.load %arg3[%c0_3, %c0_4] : memref<1x32xf32, #tpu.memory_space<vmem>>, vector<1x32xf32>
    %5 = vector.broadcast %4 : vector<1x32xf32> to vector<200x32xf32>
    %6 = arith.addf %3, %5 : vector<200x32xf32>
    %cst_5 = arith.constant 0.000000e+00 : f32
    %7 = vector.broadcast %cst_5 : f32 to vector<200x32xf32>
    %8 = arith.maximumf %6, %7 : vector<200x32xf32>
    %c0_6 = arith.constant 0 : index
    %c0_7 = arith.constant 0 : index
    %9 = vector.load %arg4[%c0_6, %c0_7] : memref<200x32xf32, #tpu.memory_space<vmem>>, vector<200x32xf32>
    tpu.vector_store %arg4[%c0_6, %c0_7], %8 {strides = array<i32>} : memref<200x32xf32, #tpu.memory_space<vmem>>, vector<200x32xf32>,
    return
  }
  func.func @transform_0(%arg0: i32) -> (i32, i32) {
    %c0_i32 = arith.constant 0 : i32
    %c0_i32_0 = arith.constant 0 : i32
    return %arg0, %c0_i32 : i32, i32
  }
  func.func @transform_1(%arg0: i32) -> (i32, i32) {
    %c0_i32 = arith.constant 0 : i32
    %c0_i32_0 = arith.constant 0 : i32
    %c0_i32_1 = arith.constant 0 : i32
    return %c0_i32, %c0_i32_0 : i32, i32
  }
  func.func @transform_2(%arg0: i32) -> (i32, i32) {
    %c0_i32 = arith.constant 0 : i32
    %c0_i32_0 = arith.constant 0 : i32
    %c0_i32_1 = arith.constant 0 : i32
    return %c0_i32, %c0_i32_0 : i32, i32
  }
  func.func @transform_3(%arg0: i32) -> (i32, i32) {
    %c0_i32 = arith.constant 0 : i32
    %c0_i32_0 = arith.constant 0 : i32
    return %arg0, %c0_i32 : i32, i32
  }
}

module attributes {stable_mosaic.version = 11 : i64} {
  func.func @_matmul_bias_kernel(%arg0: i32, %arg1: memref<162x512xf32, #tpu.memory_space<vmem>>, %arg2: memref<512x64xbf16, #tpu.memory_space<vmem>>, %arg3: memref<1x64xf32, #tpu.memory_space<vmem>>, %arg4: memref<162x64xf32, #tpu.memory_space<vmem>>) attributes {dimension_semantics = [#tpu.dimension_semantics<parallel>], iteration_bounds = array<i64: 1>, scalar_prefetch = 0 : i64, scratch_operands = 0 : i64, tpu.core_type = #tpu.core_type<tc>, window_params = [{transform_indices = @transform_0, window_bounds = array<i64: 162, 512>}, {pipeline_mode = #tpu.pipeline_mode<synchronous>, transform_indices = @transform_1, window_bounds = array<i64: 512, 64>}, {pipeline_mode = #tpu.pipeline_mode<synchronous>, transform_indices = @transform_2, window_bounds = array<i64: 1, 64>}, {transform_indices = @transform_3, window_bounds = array<i64: 162, 64>}]} {
    %c0 = arith.constant 0 : index
    %c0_0 = arith.constant 0 : index
    %0 = vector.load %arg1[%c0, %c0_0] : memref<162x512xf32, #tpu.memory_space<vmem>>, vector<162x512xf32>
    %1 = arith.truncf %0 : vector<162x512xf32> to vector<162x512xbf16>
    %c0_1 = arith.constant 0 : index
    %c0_2 = arith.constant 0 : index
    %2 = vector.load %arg2[%c0_1, %c0_2] : memref<512x64xbf16, #tpu.memory_space<vmem>>, vector<512x64xbf16>
    %cst = arith.constant dense<0.000000e+00> : vector<162x64xf32>
    %3 = tpu.matmul %1, %2, %cst {dimension_numbers = #tpu.dot_dimension_numbers<[1], [0], [0], [1], [0, 0, 1, 1], [], []>} : vector<162x512xbf16>, vector<512x64xbf16>, vector<162x64xf32> -> vector<162x64xf32>
    %c0_3 = arith.constant 0 : index
    %c0_4 = arith.constant 0 : index
    %4 = vector.load %arg3[%c0_3, %c0_4] : memref<1x64xf32, #tpu.memory_space<vmem>>, vector<1x64xf32>
    %5 = vector.broadcast %4 : vector<1x64xf32> to vector<162x64xf32>
    %6 = arith.addf %3, %5 : vector<162x64xf32>
    %cst_5 = arith.constant 0.000000e+00 : f32
    %7 = vector.broadcast %cst_5 : f32 to vector<162x64xf32>
    %8 = arith.maximumf %6, %7 : vector<162x64xf32>
    %c0_6 = arith.constant 0 : index
    %c0_7 = arith.constant 0 : index
    %9 = vector.load %arg4[%c0_6, %c0_7] : memref<162x64xf32, #tpu.memory_space<vmem>>, vector<162x64xf32>
    tpu.vector_store %arg4[%c0_6, %c0_7], %8 {strides = array<i32>} : memref<162x64xf32, #tpu.memory_space<vmem>>, vector<162x64xf32>,
    return
  }
  func.func @transform_0(%arg0: i32) -> (i32, i32) {
    %c0_i32 = arith.constant 0 : i32
    %c0_i32_0 = arith.constant 0 : i32
    return %arg0, %c0_i32 : i32, i32
  }
  func.func @transform_1(%arg0: i32) -> (i32, i32) {
    %c0_i32 = arith.constant 0 : i32
    %c0_i32_0 = arith.constant 0 : i32
    %c0_i32_1 = arith.constant 0 : i32
    return %c0_i32, %c0_i32_0 : i32, i32
  }
  func.func @transform_2(%arg0: i32) -> (i32, i32) {
    %c0_i32 = arith.constant 0 : i32
    %c0_i32_0 = arith.constant 0 : i32
    %c0_i32_1 = arith.constant 0 : i32
    return %c0_i32, %c0_i32_0 : i32, i32
  }
  func.func @transform_3(%arg0: i32) -> (i32, i32) {
    %c0_i32 = arith.constant 0 : i32
    %c0_i32_0 = arith.constant 0 : i32
    return %arg0, %c0_i32 : i32, i32
  }
}

module attributes {stable_mosaic.version = 11 : i64} {
  func.func @_matmul_bias_kernel(%arg0: i32, %arg1: memref<98x576xf32, #tpu.memory_space<vmem>>, %arg2: memref<576x64xbf16, #tpu.memory_space<vmem>>, %arg3: memref<1x64xf32, #tpu.memory_space<vmem>>, %arg4: memref<98x64xf32, #tpu.memory_space<vmem>>) attributes {dimension_semantics = [#tpu.dimension_semantics<parallel>], iteration_bounds = array<i64: 1>, scalar_prefetch = 0 : i64, scratch_operands = 0 : i64, tpu.core_type = #tpu.core_type<tc>, window_params = [{transform_indices = @transform_0, window_bounds = array<i64: 98, 576>}, {pipeline_mode = #tpu.pipeline_mode<synchronous>, transform_indices = @transform_1, window_bounds = array<i64: 576, 64>}, {pipeline_mode = #tpu.pipeline_mode<synchronous>, transform_indices = @transform_2, window_bounds = array<i64: 1, 64>}, {transform_indices = @transform_3, window_bounds = array<i64: 98, 64>}]} {
    %c0 = arith.constant 0 : index
    %c0_0 = arith.constant 0 : index
    %0 = vector.load %arg1[%c0, %c0_0] : memref<98x576xf32, #tpu.memory_space<vmem>>, vector<98x576xf32>
    %1 = arith.truncf %0 : vector<98x576xf32> to vector<98x576xbf16>
    %c0_1 = arith.constant 0 : index
    %c0_2 = arith.constant 0 : index
    %2 = vector.load %arg2[%c0_1, %c0_2] : memref<576x64xbf16, #tpu.memory_space<vmem>>, vector<576x64xbf16>
    %cst = arith.constant dense<0.000000e+00> : vector<98x64xf32>
    %3 = tpu.matmul %1, %2, %cst {dimension_numbers = #tpu.dot_dimension_numbers<[1], [0], [0], [1], [0, 0, 1, 1], [], []>} : vector<98x576xbf16>, vector<576x64xbf16>, vector<98x64xf32> -> vector<98x64xf32>
    %c0_3 = arith.constant 0 : index
    %c0_4 = arith.constant 0 : index
    %4 = vector.load %arg3[%c0_3, %c0_4] : memref<1x64xf32, #tpu.memory_space<vmem>>, vector<1x64xf32>
    %5 = vector.broadcast %4 : vector<1x64xf32> to vector<98x64xf32>
    %6 = arith.addf %3, %5 : vector<98x64xf32>
    %cst_5 = arith.constant 0.000000e+00 : f32
    %7 = vector.broadcast %cst_5 : f32 to vector<98x64xf32>
    %8 = arith.maximumf %6, %7 : vector<98x64xf32>
    %c0_6 = arith.constant 0 : index
    %c0_7 = arith.constant 0 : index
    %9 = vector.load %arg4[%c0_6, %c0_7] : memref<98x64xf32, #tpu.memory_space<vmem>>, vector<98x64xf32>
    tpu.vector_store %arg4[%c0_6, %c0_7], %8 {strides = array<i32>} : memref<98x64xf32, #tpu.memory_space<vmem>>, vector<98x64xf32>,
    return
  }
  func.func @transform_0(%arg0: i32) -> (i32, i32) {
    %c0_i32 = arith.constant 0 : i32
    %c0_i32_0 = arith.constant 0 : i32
    return %arg0, %c0_i32 : i32, i32
  }
  func.func @transform_1(%arg0: i32) -> (i32, i32) {
    %c0_i32 = arith.constant 0 : i32
    %c0_i32_0 = arith.constant 0 : i32
    %c0_i32_1 = arith.constant 0 : i32
    return %c0_i32, %c0_i32_0 : i32, i32
  }
  func.func @transform_2(%arg0: i32) -> (i32, i32) {
    %c0_i32 = arith.constant 0 : i32
    %c0_i32_0 = arith.constant 0 : i32
    %c0_i32_1 = arith.constant 0 : i32
    return %c0_i32, %c0_i32_0 : i32, i32
  }
  func.func @transform_3(%arg0: i32) -> (i32, i32) {
    %c0_i32 = arith.constant 0 : i32
    %c0_i32_0 = arith.constant 0 : i32
    return %arg0, %c0_i32 : i32, i32
  }
}

module attributes {stable_mosaic.version = 11 : i64} {
  func.func @_fc_fused_kernel(%arg0: i32, %arg1: memref<2x640xf32, #tpu.memory_space<vmem>>, %arg2: memref<640x512xbf16, #tpu.memory_space<vmem>>, %arg3: memref<1x512xf32, #tpu.memory_space<vmem>>, %arg4: memref<512x128xbf16, #tpu.memory_space<vmem>>, %arg5: memref<1x128xf32, #tpu.memory_space<vmem>>, %arg6: memref<2x128xf32, #tpu.memory_space<vmem>>, %arg7: memref<2x512xf32, #tpu.memory_space<vmem>>) attributes {dimension_semantics = [#tpu.dimension_semantics<arbitrary>], iteration_bounds = array<i64: 5>, scalar_prefetch = 0 : i64, scratch_operands = 1 : i64, tpu.core_type = #tpu.core_type<tc>, window_params = [{transform_indices = @transform_0, window_bounds = array<i64: 2, 640>}, {transform_indices = @transform_1, window_bounds = array<i64: 640, 512>}, {pipeline_mode = #tpu.pipeline_mode<synchronous>, transform_indices = @transform_2, window_bounds = array<i64: 1, 512>}, {pipeline_mode = #tpu.pipeline_mode<synchronous>, transform_indices = @transform_3, window_bounds = array<i64: 512, 128>}, {pipeline_mode = #tpu.pipeline_mode<synchronous>, transform_indices = @transform_4, window_bounds = array<i64: 1, 128>}, {pipeline_mode = #tpu.pipeline_mode<synchronous>, transform_indices = @transform_5, window_bounds = array<i64: 2, 128>}]} {
    %c0_i32 = arith.constant 0 : i32
    %0 = arith.cmpi eq, %arg0, %c0_i32 : i32
    %1 = arith.extui %0 : i1 to i32
    %c0_i32_0 = arith.constant 0 : i32
    %2 = arith.cmpi ne, %1, %c0_i32_0 : i32
    scf.if %2 {
      %cst_9 = arith.constant 0.000000e+00 : f32
      %13 = vector.broadcast %cst_9 : f32 to vector<2x512xf32>
      %c0_10 = arith.constant 0 : index
      %c0_11 = arith.constant 0 : index
      %14 = vector.load %arg7[%c0_10, %c0_11] : memref<2x512xf32, #tpu.memory_space<vmem>>, vector<2x512xf32>
      tpu.vector_store %arg7[%c0_10, %c0_11], %13 {strides = array<i32>} : memref<2x512xf32, #tpu.memory_space<vmem>>, vector<2x512xf32>,
    } else {
    }
    %c0 = arith.constant 0 : index
    %c0_1 = arith.constant 0 : index
    %3 = vector.load %arg7[%c0, %c0_1] : memref<2x512xf32, #tpu.memory_space<vmem>>, vector<2x512xf32>
    %c0_2 = arith.constant 0 : index
    %c0_3 = arith.constant 0 : index
    %4 = vector.load %arg1[%c0_2, %c0_3] : memref<2x640xf32, #tpu.memory_space<vmem>>, vector<2x640xf32>
    %5 = arith.truncf %4 : vector<2x640xf32> to vector<2x640xbf16>
    %c0_4 = arith.constant 0 : index
    %c0_5 = arith.constant 0 : index
    %6 = vector.load %arg2[%c0_4, %c0_5] : memref<640x512xbf16, #tpu.memory_space<vmem>>, vector<640x512xbf16>
    %cst = arith.constant dense<0.000000e+00> : vector<2x512xf32>
    %7 = tpu.matmul %5, %6, %cst {dimension_numbers = #tpu.dot_dimension_numbers<[1], [0], [0], [1], [0, 0, 1, 1], [], []>} : vector<2x640xbf16>, vector<640x512xbf16>, vector<2x512xf32> -> vector<2x512xf32>
    %8 = arith.addf %3, %7 : vector<2x512xf32>
    %c0_6 = arith.constant 0 : index
    %c0_7 = arith.constant 0 : index
    %9 = vector.load %arg7[%c0_6, %c0_7] : memref<2x512xf32, #tpu.memory_space<vmem>>, vector<2x512xf32>
    tpu.vector_store %arg7[%c0_6, %c0_7], %8 {strides = array<i32>} : memref<2x512xf32, #tpu.memory_space<vmem>>, vector<2x512xf32>,
    %c4_i32 = arith.constant 4 : i32
    %10 = arith.cmpi eq, %arg0, %c4_i32 : i32
    %11 = arith.extui %10 : i1 to i32
    %c0_i32_8 = arith.constant 0 : i32
    %12 = arith.cmpi ne, %11, %c0_i32_8 : i32
    scf.if %12 {
      %c0_9 = arith.constant 0 : index
      %c0_10 = arith.constant 0 : index
      %13 = vector.load %arg7[%c0_9, %c0_10] : memref<2x512xf32, #tpu.memory_space<vmem>>, vector<2x512xf32>
      %c0_11 = arith.constant 0 : index
      %c0_12 = arith.constant 0 : index
      %14 = vector.load %arg3[%c0_11, %c0_12] : memref<1x512xf32, #tpu.memory_space<vmem>>, vector<1x512xf32>
      %15 = vector.broadcast %14 : vector<1x512xf32> to vector<2x512xf32>
      %16 = arith.addf %13, %15 : vector<2x512xf32>
      %cst_13 = arith.constant 0.000000e+00 : f32
      %17 = vector.broadcast %cst_13 : f32 to vector<2x512xf32>
      %18 = arith.maximumf %16, %17 : vector<2x512xf32>
      %19 = arith.truncf %18 : vector<2x512xf32> to vector<2x512xbf16>
      %c0_14 = arith.constant 0 : index
      %c0_15 = arith.constant 0 : index
      %20 = vector.load %arg4[%c0_14, %c0_15] : memref<512x128xbf16, #tpu.memory_space<vmem>>, vector<512x128xbf16>
      %cst_16 = arith.constant dense<0.000000e+00> : vector<2x128xf32>
      %21 = tpu.matmul %19, %20, %cst_16 {dimension_numbers = #tpu.dot_dimension_numbers<[1], [0], [0], [1], [0, 0, 1, 1], [], []>} : vector<2x512xbf16>, vector<512x128xbf16>, vector<2x128xf32> -> vector<2x128xf32>
      %c0_17 = arith.constant 0 : index
      %c0_18 = arith.constant 0 : index
      %22 = vector.load %arg5[%c0_17, %c0_18] : memref<1x128xf32, #tpu.memory_space<vmem>>, vector<1x128xf32>
      %23 = vector.broadcast %22 : vector<1x128xf32> to vector<2x128xf32>
      %24 = arith.addf %21, %23 : vector<2x128xf32>
      %c0_19 = arith.constant 0 : index
      %c0_20 = arith.constant 0 : index
      %25 = vector.load %arg6[%c0_19, %c0_20] : memref<2x128xf32, #tpu.memory_space<vmem>>, vector<2x128xf32>
      tpu.vector_store %arg6[%c0_19, %c0_20], %24 {strides = array<i32>} : memref<2x128xf32, #tpu.memory_space<vmem>>, vector<2x128xf32>,
    } else {
    }
    return
  }
  func.func @transform_0(%arg0: i32) -> (i32, i32) {
    %c0_i32 = arith.constant 0 : i32
    %c0_i32_0 = arith.constant 0 : i32
    return %c0_i32, %arg0 : i32, i32
  }
  func.func @transform_1(%arg0: i32) -> (i32, i32) {
    %c0_i32 = arith.constant 0 : i32
    %c0_i32_0 = arith.constant 0 : i32
    return %arg0, %c0_i32 : i32, i32
  }
  func.func @transform_2(%arg0: i32) -> (i32, i32) {
    %c0_i32 = arith.constant 0 : i32
    %c0_i32_0 = arith.constant 0 : i32
    %c0_i32_1 = arith.constant 0 : i32
    return %c0_i32, %c0_i32_0 : i32, i32
  }
  func.func @transform_3(%arg0: i32) -> (i32, i32) {
    %c0_i32 = arith.constant 0 : i32
    %c0_i32_0 = arith.constant 0 : i32
    %c0_i32_1 = arith.constant 0 : i32
    return %c0_i32, %c0_i32_0 : i32, i32
  }
  func.func @transform_4(%arg0: i32) -> (i32, i32) {
    %c0_i32 = arith.constant 0 : i32
    %c0_i32_0 = arith.constant 0 : i32
    %c0_i32_1 = arith.constant 0 : i32
    return %c0_i32, %c0_i32_0 : i32, i32
  }
  func.func @transform_5(%arg0: i32) -> (i32, i32) {
    %c0_i32 = arith.constant 0 : i32
    %c0_i32_0 = arith.constant 0 : i32
    %c0_i32_1 = arith.constant 0 : i32
    return %c0_i32, %c0_i32_0 : i32, i32
  }
}

</mosaic_0001>

<llo_original>
// kernel: dqn_forward.4
$region0: #{dqn_forward.4}
  #allocation0 [shape = 'u32[]', space=smem, size = 0x4, offset = 0x4, fixed_abs, tag = 'smem constant byte address 0x4 - core index']
  #allocation1 [shape = 'u32[144,128]{1,0:T(1,128)}', space=vmem, size = 0x12000, scoped, tag = 'internal scratch']
  %s0 = inlined_call_operand.vmem [shape: f32[800,256], index: 0, kind: input, shape index: {}]
  %s1 = inlined_call_operand.vmem [shape: bf16[256,32], index: 1, kind: input, shape index: {}]
  %s2 = inlined_call_operand.vmem [shape: f32[1,32], index: 2, kind: input, shape index: {}]
  %s3 = inlined_call_operand.vmem [shape: f32[800,32], index: 3, kind: output, shape index: {}]
  %s4 = sld [smem:[#allocation0]]
  $region45: #{dqn_forward.4} parent=0
    _
  %s6 = ssub.s32 1, %s4
  %s7 = scalar_select 0, %s6, %s4
  loop: start=0, step=1, limit=6
  $region2: #{dqn_forward.4} parent=0 // loop_pre_header
    _
  $region3: #{dqn_forward.4} parent=0 // loop_header
    %s9 = sphi 0, %s13
    %p10 = scmp.ge.s32.totalorder %s9, 6
    %s19 = sphi 0, %s21
    %s22 = sphi 0, %s19
    %s23 = sphi 0, %s22
    %s39 = sphi 0, %s23
    %s43 = sphi 0, %s43
    %s45 = sphi 0, %s43
    %s46 = sphi 0, %s45
    %s60 = sphi 0, %s46
    %s64 = sphi 0, %s64
    %s66 = sphi 0, %s64
    %s67 = sphi 0, %s66
    %s81 = sphi 0, %s67
    %s87 = sphi 0, %s89
    %s90 = sphi 0, %s87
    %s91 = sphi 0, %s90
    %s107 = sphi 0, %s91
  $region4: #{dqn_forward.4} parent=0 // loop_header_branch
    %12 = sbr.rel (%p10) target = $region8
  $region5: #{dqn_forward.4} parent=0 // loop_body
    %s14 = ssub.s32 %s9, 1
    %s15 = ssub.s32 %s9, 2
    %s16 = sadd.s32 %s9, 1
    %s17 = ssub.s32 %s9, %s16
    %p18 = scmp.eq.s32.totalorder %s17, 0
    %s20 = sadd.s32 %s19, 1
    %s21 = scalar_select %p18, %s19, %s20
    %p24 = pneg %p18
    %p25 = scmp.eq.s32.totalorder %s9, 3
    %p26 = por %p24, %p25
    %p27 = scmp.ne.s32.totalorder %s19, %s22
    %p28 = scmp.eq.s32.totalorder %s9, 0
    %p29 = por %p27, %p28
    %p30 = scmp.ne.s32.totalorder %s19, %s22
    %p31 = scmp.eq.s32.totalorder %s14, 3
    %p32 = por %p30, %p31
    %p33 = scmp.ne.s32.totalorder %s22, %s23
    %p34 = scmp.eq.s32.totalorder %s14, 0
    %p35 = por %p33, %p34
    %p36 = scmp.ne.s32.totalorder %s22, %s23
    %p37 = scmp.eq.s32.totalorder %s15, 3
    %p38 = por %p36, %p37
    %p40 = scmp.ne.s32.totalorder %s23, %s39
    %p41 = scmp.eq.s32.totalorder %s15, 0
    %p42 = por %p40, %p41
    %s44 = sadd.s32 %s43, 1
    %p47 = scmp.eq.s32.totalorder %s9, 3
    %p48 = scmp.ne.s32.totalorder %s43, %s45
    %p49 = scmp.eq.s32.totalorder %s9, 0
    %p50 = por %p48, %p49
    %p51 = scmp.ne.s32.totalorder %s43, %s45
    %p52 = scmp.eq.s32.totalorder %s14, 3
    %p53 = por %p51, %p52
    %p54 = scmp.ne.s32.totalorder %s45, %s46
    %p55 = scmp.eq.s32.totalorder %s14, 0
    %p56 = por %p54, %p55
    %p57 = scmp.ne.s32.totalorder %s45, %s46
    %p58 = scmp.eq.s32.totalorder %s15, 3
    %p59 = por %p57, %p58
    %p61 = scmp.ne.s32.totalorder %s46, %s60
    %p62 = scmp.eq.s32.totalorder %s15, 0
    %p63 = por %p61, %p62
    %s65 = sadd.s32 %s64, 1
    %p68 = scmp.eq.s32.totalorder %s9, 3
    %p69 = scmp.ne.s32.totalorder %s64, %s66
    %p70 = scmp.eq.s32.totalorder %s9, 0
    %p71 = por %p69, %p70
    %p72 = scmp.ne.s32.totalorder %s64, %s66
    %p73 = scmp.eq.s32.totalorder %s14, 3
    %p74 = por %p72, %p73
    %p75 = scmp.ne.s32.totalorder %s66, %s67
    %p76 = scmp.eq.s32.totalorder %s14, 0
    %p77 = por %p75, %p76
    %p78 = scmp.ne.s32.totalorder %s66, %s67
    %p79 = scmp.eq.s32.totalorder %s15, 3
    %p80 = por %p78, %p79
    %p82 = scmp.ne.s32.totalorder %s67, %s81
    %p83 = scmp.eq.s32.totalorder %s15, 0
    %p84 = por %p82, %p83
    %s85 = ssub.s32 %s9, %s16
    %p86 = scmp.eq.s32.totalorder %s85, 0
    %s88 = sadd.s32 %s87, 1
    %s89 = scalar_select %p86, %s87, %s88
    %p92 = pneg %p86
    %p93 = scmp.eq.s32.totalorder %s9, 3
    %p94 = por %p92, %p93
    %p95 = scmp.ne.s32.totalorder %s87, %s90
    %p96 = scmp.eq.s32.totalorder %s9, 0
    %p97 = por %p95, %p96
    %p98 = scmp.ne.s32.totalorder %s87, %s90
    %p99 = scmp.eq.s32.totalorder %s14, 3
    %p100 = por %p98, %p99
    %p101 = scmp.ne.s32.totalorder %s90, %s91
    %p102 = scmp.eq.s32.totalorder %s14, 0
    %p103 = por %p101, %p102
    %p104 = scmp.ne.s32.totalorder %s90, %s91
    %p105 = scmp.eq.s32.totalorder %s15, 3
    %p106 = por %p104, %p105
    %p108 = scmp.ne.s32.totalorder %s91, %s107
    %p109 = scmp.eq.s32.totalorder %s15, 0
    %p110 = por %p108, %p109
    %p111 = scmp.le.s32.totalorder 1, %s9
    %p112 = scmp.lt.s32.totalorder %s9, 5
    %p113 = pnand %p111, %p112
    %p114 = pneg %p113
    // Predicated region
    $region9: #{dqn_forward.4} parent=5 // pred_check
      _
    $region10: #{dqn_forward.4} parent=5 // pred_check_branch
      %116 = sbr.rel (%p113) target = $region12
    $region11: #{dqn_forward.4} parent=5 // pred_region
      %s117 = ssub.s32 %s9, 1
      // Predicated region
      $region13: #{dqn_forward.4} parent=11 // pred_check
        %p118 = pneg %p56
      $region14: #{dqn_forward.4} parent=11 // pred_check_branch
        %120 = sbr.rel (%p118) target = $region16
      $region15: #{dqn_forward.4} parent=11 // pred_region
        _
      $region16: #{dqn_forward.4} parent=11 // pred_fallthru
        _
      // Predicated region
      $region17: #{dqn_forward.4} parent=11 // pred_check
        %p121 = pneg %p77
      $region18: #{dqn_forward.4} parent=11 // pred_check_branch
        %123 = sbr.rel (%p121) target = $region20
      $region19: #{dqn_forward.4} parent=11 // pred_region
        _
      $region20: #{dqn_forward.4} parent=11 // pred_fallthru
        _
    $region12: #{dqn_forward.4} parent=5 // pred_fallthru
      _
    %p124 = scmp.lt.s32.totalorder %s9, 4
    // Predicated region
    $region21: #{dqn_forward.4} parent=5 // pred_check
      %p125 = pneg %p124
    $region22: #{dqn_forward.4} parent=5 // pred_check_branch
      %127 = sbr.rel (%p125) target = $region24
    $region23: #{dqn_forward.4} parent=5 // pred_region
      // Predicated region
      $region25: #{dqn_forward.4} parent=23 // pred_check
        %p128 = pneg %p29
      $region26: #{dqn_forward.4} parent=23 // pred_check_branch
        %130 = sbr.rel (%p128) target = $region28
      $region27: #{dqn_forward.4} parent=23 // pred_region
        %s131 = smul.u32 25, %s9
        %p132 = scmp.lt.s32.totalorder %s131, 99
        %s133 = scalar_select %p132, %s131, 99
        %s134 = smul.addr %s133, 2
        %s135 = smul.addr %s134, 8
        %s136 = scalar_lea.vmem %s0, %s135
        %s137 = smul.u32 25, %s9
      $region28: #{dqn_forward.4} parent=23 // pred_fallthru
        _
    $region24: #{dqn_forward.4} parent=5 // pred_fallthru
      _
    %p138 = scmp.le.s32.totalorder 1, %s9
    %p139 = scmp.lt.s32.totalorder %s9, 5
    %p140 = pnand %p138, %p139
    %p141 = pneg %p140
    // Predicated region
    $region29: #{dqn_forward.4} parent=5 // pred_check
      _
    $region30: #{dqn_forward.4} parent=5 // pred_check_branch
      %143 = sbr.rel (%p140) target = $region32
    $region31: #{dqn_forward.4} parent=5 // pred_region
      %s144 = ssub.s32 %s9, 1
      %s145 = smul.u32 25, %s14
      %p146 = scmp.lt.s32.totalorder %s145, 99
      %s147 = scalar_select %p146, %s145, 99
      %s148 = smul.addr %s147, 2
      %s149 = smul.addr %s148, 8
      %s150 = scalar_lea.vmem %s0, %s149
      %p151 = pneg %p35
      %p152 = pneg %p32
      %p153 = pneg %p56
      %p154 = pneg %p53
      %p155 = pneg %p77
      %p156 = pneg %p74
      %p157 = pneg %p103
      %p158 = pneg %p100
      %s159 = smul.u32 25, %s14
      %p160 = scmp.lt.s32.totalorder %s159, 99
      %s161 = scalar_select %p160, %s159, 99
      %s162 = smul.addr %s161, 8
      %s163 = scalar_lea.vmem %s3, %s162
      %s164 = smul.u32 25, %s14
      %p165 = scmp.lt.s32.totalorder %s164, 99
      %s166 = scalar_select %p165, %s164, 99
      %s167 = smul.addr %s166, 2
      %s168 = smul.addr %s167, 8
      %s169 = scalar_lea.vmem %s0, %s168
      %s170 = smul.u32 25, %s14
      %s171 = smul.u32 25, %s14
      %p172 = scmp.lt.s32.totalorder %s171, 99
      %s173 = scalar_select %p172, %s171, 99
      %s174 = smul.addr %s173, 8
      %s175 = scalar_lea.vmem %s3, %s174
      %s176 = smul.u32 25, %s14
      %v178 = vld [vmem:[%s169] sm:$0xff]
      %v179 = vld [vmem:[%s169 + $0x8] sm:$0xff]
      %v180 = vld [vmem:[%s169 + $0x10] sm:$0xff]
      %v181 = vld [vmem:[%s169 + $0x18] sm:$0xff]
      %v182 = vld [vmem:[%s169 + $0x20] sm:$0xff]
      %v183 = vld [vmem:[%s169 + $0x28] sm:$0xff]
      %v184 = vld [vmem:[%s169 + $0x30] sm:$0xff]
      %v185 = vld [vmem:[%s169 + $0x38] sm:$0xff]
      %v186 = vld [vmem:[%s169 + $0x40] sm:$0xff]
      %v187 = vld [vmem:[%s169 + $0x48] sm:$0xff]
      %v188 = vld [vmem:[%s169 + $0x50] sm:$0xff]
      %v189 = vld [vmem:[%s169 + $0x58] sm:$0xff]
      %v190 = vld [vmem:[%s169 + $0x60] sm:$0xff]
      %v191 = vld [vmem:[%s169 + $0x68] sm:$0xff]
      %v192 = vld [vmem:[%s169 + $0x70] sm:$0xff]
      %v193 = vld [vmem:[%s169 + $0x78] sm:$0xff]
      %v194 = vld [vmem:[%s169 + $0x80] sm:$0xff]
      %v195 = vld [vmem:[%s169 + $0x88] sm:$0xff]
      %v196 = vld [vmem:[%s169 + $0x90] sm:$0xff]
      %v197 = vld [vmem:[%s169 + $0x98] sm:$0xff]
      %v198 = vld [vmem:[%s169 + $0xa0] sm:$0xff]
      %v199 = vld [vmem:[%s169 + $0xa8] sm:$0xff]
      %v200 = vld [vmem:[%s169 + $0xb0] sm:$0xff]
      %v201 = vld [vmem:[%s169 + $0xb8] sm:$0xff]
      %v202 = vld [vmem:[%s169 + $0xc0] sm:$0xff]
      %v203 = vld [vmem:[%s169 + $0xc8] sm:$0xff]
      %v204 = vld [vmem:[%s169 + $0xd0] sm:$0xff]
      %v205 = vld [vmem:[%s169 + $0xd8] sm:$0xff]
      %v206 = vld [vmem:[%s169 + $0xe0] sm:$0xff]
      %v207 = vld [vmem:[%s169 + $0xe8] sm:$0xff]
      %v208 = vld [vmem:[%s169 + $0xf0] sm:$0xff]
      %v209 = vld [vmem:[%s169 + $0xf8] sm:$0xff]
      %v210 = vld [vmem:[%s169 + $0x100] sm:$0xff]
      %v211 = vld [vmem:[%s169 + $0x108] sm:$0xff]
      %v212 = vld [vmem:[%s169 + $0x110] sm:$0xff]
      %v213 = vld [vmem:[%s169 + $0x118] sm:$0xff]
      %v214 = vld [vmem:[%s169 + $0x120] sm:$0xff]
      %v215 = vld [vmem:[%s169 + $0x128] sm:$0xff]
      %v216 = vld [vmem:[%s169 + $0x130] sm:$0xff]
      %v217 = vld [vmem:[%s169 + $0x138] sm:$0xff]
      %v218 = vld [vmem:[%s169 + $0x140] sm:$0xff]
      %v219 = vld [vmem:[%s169 + $0x148] sm:$0xff]
      %v220 = vld [vmem:[%s169 + $0x150] sm:$0xff]
      %v221 = vld [vmem:[%s169 + $0x158] sm:$0xff]
      %v222 = vld [vmem:[%s169 + $0x160] sm:$0xff]
      %v223 = vld [vmem:[%s169 + $0x168] sm:$0xff]
      %v224 = vld [vmem:[%s169 + $0x170] sm:$0xff]
      %v225 = vld [vmem:[%s169 + $0x178] sm:$0xff]
      %v226 = vld [vmem:[%s169 + $0x180] sm:$0xff]
      %v227 = vld [vmem:[%s169 + $0x188] sm:$0xff]
      %v228 = vpack.c.bf16 %v180, %v178
      %v229 = vpack.c.bf16 %v181, %v179
      %v230 = vpack.c.bf16 %v184, %v182
      %v231 = vpack.c.bf16 %v185, %v183
      %v232 = vpack.c.bf16 %v188, %v186
      %v233 = vpack.c.bf16 %v189, %v187
      %v234 = vpack.c.bf16 %v192, %v190
      %v235 = vpack.c.bf16 %v193, %v191
      %v236 = vpack.c.bf16 %v196, %v194
      %v237 = vpack.c.bf16 %v197, %v195
      %v238 = vpack.c.bf16 %v200, %v198
      %v239 = vpack.c.bf16 %v201, %v199
      %v240 = vpack.c.bf16 %v204, %v202
      %v241 = vpack.c.bf16 %v205, %v203
      %v242 = vpack.c.bf16 %v208, %v206
      %v243 = vpack.c.bf16 %v209, %v207
      %v244 = vpack.c.bf16 %v212, %v210
      %v245 = vpack.c.bf16 %v213, %v211
      %v246 = vpack.c.bf16 %v216, %v214
      %v247 = vpack.c.bf16 %v217, %v215
      %v248 = vpack.c.bf16 %v220, %v218
      %v249 = vpack.c.bf16 %v221, %v219
      %v250 = vpack.c.bf16 %v224, %v222
      %v251 = vpack.c.bf16 %v225, %v223
      %v252 = vpack.c.bf16 %v226, %v226
      %v253 = vpack.c.bf16 %v227, %v227
      %v254 = vld [vmem:[%s1] sm:$0xf]
      %v255 = vld [vmem:[%s1 + $0x4] sm:$0xf]
      %v256 = vld [vmem:[%s1 + $0x8] sm:$0xf]
      %v257 = vld [vmem:[%s1 + $0xc] sm:$0xf]
      %v258 = vld [vmem:[%s1 + $0x10] sm:$0xf]
      %v259 = vld [vmem:[%s1 + $0x14] sm:$0xf]
      %v260 = vld [vmem:[%s1 + $0x18] sm:$0xf]
      %v261 = vld [vmem:[%s1 + $0x1c] sm:$0xf]
      %v262 = vld [vmem:[%s1 + $0x20] sm:$0xf]
      %v263 = vld [vmem:[%s1 + $0x24] sm:$0xf]
      %v264 = vld [vmem:[%s1 + $0x28] sm:$0xf]
      %v265 = vld [vmem:[%s1 + $0x2c] sm:$0xf]
      %v266 = vld [vmem:[%s1 + $0x30] sm:$0xf]
      %v267 = vld [vmem:[%s1 + $0x34] sm:$0xf]
      %v268 = vld [vmem:[%s1 + $0x38] sm:$0xf]
      %v269 = vld [vmem:[%s1 + $0x3c] sm:$0xf]
      %v270 = vld [vmem:[%s1 + $0x40] sm:$0xf]
      %v271 = vld [vmem:[%s1 + $0x44] sm:$0xf]
      %v272 = vld [vmem:[%s1 + $0x48] sm:$0xf]
      %v273 = vld [vmem:[%s1 + $0x4c] sm:$0xf]
      %v274 = vld [vmem:[%s1 + $0x50] sm:$0xf]
      %v275 = vld [vmem:[%s1 + $0x54] sm:$0xf]
      %v276 = vld [vmem:[%s1 + $0x58] sm:$0xf]
      %v277 = vld [vmem:[%s1 + $0x5c] sm:$0xf]
      %v278 = vld [vmem:[%s1 + $0x60] sm:$0xf]
      %v279 = vld [vmem:[%s1 + $0x64] sm:$0xf]
      %v280 = vld [vmem:[%s1 + $0x68] sm:$0xf]
      %v281 = vld [vmem:[%s1 + $0x6c] sm:$0xf]
      %v282 = vld [vmem:[%s1 + $0x70] sm:$0xf]
      %v283 = vld [vmem:[%s1 + $0x74] sm:$0xf]
      %v284 = vld [vmem:[%s1 + $0x78] sm:$0xf]
      %v285 = vld [vmem:[%s1 + $0x7c] sm:$0xf]
      %v286 = vld [vmem:[%s2] sm:$0x1]
      %v288 = vlaneseq
      %v289 = vshrl.u32 %v288, 7
      %v290 = vsub.s32 0, %v289
      %v291 = vrot.slane %v286, %v290
      %v325 = vunpack.c.l.b16 %v254
      %v326 = vunpack.c.l.b16 %v255
      %v327 = vunpack.c.l.b16 %v256
      %v328 = vunpack.c.l.b16 %v257
      %v329 = vunpack.c.l.b16 %v258
      %v330 = vunpack.c.l.b16 %v259
      %v331 = vunpack.c.l.b16 %v260
      %v332 = vunpack.c.l.b16 %v261
      %v333 = vunpack.c.l.b16 %v262
      %v334 = vunpack.c.l.b16 %v263
      %v335 = vunpack.c.l.b16 %v264
      %v336 = vunpack.c.l.b16 %v265
      %v337 = vunpack.c.l.b16 %v266
      %v338 = vunpack.c.l.b16 %v267
      %v339 = vunpack.c.l.b16 %v268
      %v340 = vunpack.c.l.b16 %v269
      %v341 = vunpack.c.l.b16 %v270
      %v342 = vunpack.c.l.b16 %v271
      %v343 = vunpack.c.l.b16 %v272
      %v344 = vunpack.c.l.b16 %v273
      %v345 = vunpack.c.l.b16 %v274
      %v346 = vunpack.c.l.b16 %v275
      %v347 = vunpack.c.l.b16 %v276
      %v348 = vunpack.c.l.b16 %v277
      %v349 = vunpack.c.l.b16 %v278
      %v350 = vunpack.c.l.b16 %v279
      %v351 = vunpack.c.l.b16 %v280
      %v352 = vunpack.c.l.b16 %v281
      %v353 = vunpack.c.l.b16 %v282
      %v354 = vunpack.c.l.b16 %v283
      %v355 = vunpack.c.l.b16 %v284
      %v356 = vunpack.c.l.b16 %v285
      %v357 = vpack.c.b16 %v326, %v325
      %v358 = vpack.c.b16 %v328, %v327
      %v359 = vpack.c.b16 %v330, %v329
      %v360 = vpack.c.b16 %v332, %v331
      %v361 = vpack.c.b16 %v334, %v333
      %v362 = vpack.c.b16 %v336, %v335
      %v363 = vpack.c.b16 %v338, %v337
      %v364 = vpack.c.b16 %v340, %v339
      %v365 = vpack.c.b16 %v342, %v341
      %v366 = vpack.c.b16 %v344, %v343
      %v367 = vpack.c.b16 %v346, %v345
      %v368 = vpack.c.b16 %v348, %v347
      %v369 = vpack.c.b16 %v350, %v349
      %v370 = vpack.c.b16 %v352, %v351
      %v371 = vpack.c.b16 %v354, %v353
      %v372 = vpack.c.b16 %v356, %v355
      %389 = vmatprep.subr.bf16.mxu0 0
      %390 = vmatpush1.bf16.msra.mxu0 %v357
      %391 = vmatprep.subr.bf16.mxu0 0
      %392 = vmatpush1.bf16.msra.mxu0 %v358
      %393 = vmatprep.subr.bf16.mxu0 0
      %394 = vmatpush1.bf16.msra.mxu0 %v359
      %395 = vmatprep.subr.bf16.mxu0 0
      %396 = vmatpush1.bf16.msra.mxu0 %v360
      %397 = vmatprep.subr.bf16.mxu0 0
      %398 = vmatpush1.bf16.msra.mxu0 %v361
      %399 = vmatprep.subr.bf16.mxu0 0
      %400 = vmatpush1.bf16.msra.mxu0 %v362
      %401 = vmatprep.subr.bf16.mxu0 0
      %402 = vmatpush1.bf16.msra.mxu0 %v363
      %403 = vmatprep.subr.bf16.mxu0 0
      %404 = vmatpush1.bf16.msra.mxu0 %v364
      %405 = vmatprep.subr.bf16.mxu0 0
      %406 = vmatpush1.bf16.msra.mxu0 %v365
      %407 = vmatprep.subr.bf16.mxu0 0
      %408 = vmatpush1.bf16.msra.mxu0 %v366
      %409 = vmatprep.subr.bf16.mxu0 0
      %410 = vmatpush1.bf16.msra.mxu0 %v367
      %411 = vmatprep.subr.bf16.mxu0 0
      %412 = vmatpush1.bf16.msra.mxu0 %v368
      %413 = vmatprep.subr.bf16.mxu0 0
      %414 = vmatpush1.bf16.msra.mxu0 %v369
      %415 = vmatprep.subr.bf16.mxu0 0
      %416 = vmatpush1.bf16.msra.mxu0 %v370
      %417 = vmatprep.subr.bf16.mxu0 0
      %418 = vmatpush1.bf16.msra.mxu0 %v371
      %419 = vmatprep.subr.bf16.mxu0 0
      %420 = vmatpush1.bf16.msra.mxu0 %v372
      %421 = vmatprep.mubr.bf16.mxu0 %v229
      %422 = vmatmul.mubr.bf16.gmra.mrb[0].mxu0 %v228
      %v423 = vpop.f32.mrb[0].mxu0
      %v424 = vadd.f32 %v291, %v423
      %v425 = vpop.f32.mrb[0].mxu0
      %v426 = vpop.f32.mrb[0].mxu0
      %v427 = vadd.f32 %v291, %v426
      %v428 = vpop.f32.mrb[0].mxu0
      %429 = vmatprep.mubr.bf16.mxu0 %v231
      %430 = vmatmul.mubr.bf16.gmra.mrb[0].mxu0 %v230
      %v431 = vpop.f32.mrb[0].mxu0
      %v432 = vadd.f32 %v291, %v431
      %v433 = vpop.f32.mrb[0].mxu0
      %v434 = vpop.f32.mrb[0].mxu0
      %v435 = vadd.f32 %v291, %v434
      %v436 = vpop.f32.mrb[0].mxu0
      %437 = vmatprep.mubr.bf16.mxu0 %v233
      %438 = vmatmul.mubr.bf16.gmra.mrb[0].mxu0 %v232
      %v439 = vpop.f32.mrb[0].mxu0
      %v440 = vadd.f32 %v291, %v439
      %v441 = vpop.f32.mrb[0].mxu0
      %v442 = vpop.f32.mrb[0].mxu0
      %v443 = vadd.f32 %v291, %v442
      %v444 = vpop.f32.mrb[0].mxu0
      %445 = vmatprep.mubr.bf16.mxu0 %v235
      %446 = vmatmul.mubr.bf16.gmra.mrb[0].mxu0 %v234
      %v447 = vpop.f32.mrb[0].mxu0
      %v448 = vadd.f32 %v291, %v447
      %v449 = vpop.f32.mrb[0].mxu0
      %v450 = vpop.f32.mrb[0].mxu0
      %v451 = vadd.f32 %v291, %v450
      %v452 = vpop.f32.mrb[0].mxu0
      %453 = vmatprep.mubr.bf16.mxu0 %v237
      %454 = vmatmul.mubr.bf16.gmra.mrb[0].mxu0 %v236
      %v455 = vpop.f32.mrb[0].mxu0
      %v456 = vadd.f32 %v291, %v455
      %v457 = vpop.f32.mrb[0].mxu0
      %v458 = vpop.f32.mrb[0].mxu0
      %v459 = vadd.f32 %v291, %v458
      %v460 = vpop.f32.mrb[0].mxu0
      %461 = vmatprep.mubr.bf16.mxu0 %v239
      %462 = vmatmul.mubr.bf16.gmra.mrb[0].mxu0 %v238
      %v463 = vpop.f32.mrb[0].mxu0
      %v464 = vadd.f32 %v291, %v463
      %v465 = vpop.f32.mrb[0].mxu0
      %v466 = vpop.f32.mrb[0].mxu0
      %v467 = vadd.f32 %v291, %v466
      %v468 = vpop.f32.mrb[0].mxu0
      %469 = vmatprep.mubr.bf16.mxu0 %v241
      %470 = vmatmul.mubr.bf16.gmra.mrb[0].mxu0 %v240
      %v471 = vpop.f32.mrb[0].mxu0
      %v472 = vadd.f32 %v291, %v471
      %v473 = vpop.f32.mrb[0].mxu0
      %v474 = vpop.f32.mrb[0].mxu0
      %v475 = vadd.f32 %v291, %v474
      %v476 = vpop.f32.mrb[0].mxu0
      %477 = vmatprep.mubr.bf16.mxu0 %v243
      %478 = vmatmul.mubr.bf16.gmra.mrb[0].mxu0 %v242
      %v479 = vpop.f32.mrb[0].mxu0
      %v480 = vadd.f32 %v291, %v479
      %v481 = vpop.f32.mrb[0].mxu0
      %v482 = vpop.f32.mrb[0].mxu0
      %v483 = vadd.f32 %v291, %v482
      %v484 = vpop.f32.mrb[0].mxu0
      %485 = vmatprep.mubr.bf16.mxu0 %v245
      %486 = vmatmul.mubr.bf16.gmra.mrb[0].mxu0 %v244
      %v487 = vpop.f32.mrb[0].mxu0
      %v488 = vadd.f32 %v291, %v487
      %v489 = vpop.f32.mrb[0].mxu0
      %v490 = vpop.f32.mrb[0].mxu0
      %v491 = vadd.f32 %v291, %v490
      %v492 = vpop.f32.mrb[0].mxu0
      %493 = vmatprep.mubr.bf16.mxu0 %v247
      %494 = vmatmul.mubr.bf16.gmra.mrb[0].mxu0 %v246
      %v495 = vpop.f32.mrb[0].mxu0
      %v496 = vadd.f32 %v291, %v495
      %v497 = vpop.f32.mrb[0].mxu0
      %v498 = vpop.f32.mrb[0].mxu0
      %v499 = vadd.f32 %v291, %v498
      %v500 = vpop.f32.mrb[0].mxu0
      %501 = vmatprep.mubr.bf16.mxu0 %v249
      %502 = vmatmul.mubr.bf16.gmra.mrb[0].mxu0 %v248
      %v503 = vpop.f32.mrb[0].mxu0
      %v504 = vadd.f32 %v291, %v503
      %v505 = vpop.f32.mrb[0].mxu0
      %v506 = vpop.f32.mrb[0].mxu0
      %v507 = vadd.f32 %v291, %v506
      %v508 = vpop.f32.mrb[0].mxu0
      %509 = vmatprep.mubr.bf16.mxu0 %v251
      %510 = vmatmul.mubr.bf16.gmra.mrb[0].mxu0 %v250
      %v511 = vpop.f32.mrb[0].mxu0
      %v512 = vadd.f32 %v291, %v511
      %v513 = vpop.f32.mrb[0].mxu0
      %v514 = vpop.f32.mrb[0].mxu0
      %v515 = vadd.f32 %v291, %v514
      %v516 = vpop.f32.mrb[0].mxu0
      %517 = vmatprep.mubr.bf16.mxu0 %v253
      %518 = vmatmul.mubr.bf16.gmra.mrb[0].mxu0 %v252
      %v519 = vpop.f32.mrb[0].mxu0
      %v520 = vadd.f32 %v291, %v519
      %v521 = vpop.f32.mrb[0].mxu0
      %v522 = vpop.f32.mrb[0].mxu0
      %v523 = vpop.f32.mrb[0].mxu0
      %524 = vdwg.mxu0
      %v525 = vmax.f32 %v424, 0.0
      %v526 = vmax.f32 %v427, 0.0
      %v527 = vmax.f32 %v432, 0.0
      %v528 = vmax.f32 %v435, 0.0
      %v529 = vmax.f32 %v440, 0.0
      %v530 = vmax.f32 %v443, 0.0
      %v531 = vmax.f32 %v448, 0.0
      %v532 = vmax.f32 %v451, 0.0
      %v533 = vmax.f32 %v456, 0.0
      %v534 = vmax.f32 %v459, 0.0
      %v535 = vmax.f32 %v464, 0.0
      %v536 = vmax.f32 %v467, 0.0
      %v537 = vmax.f32 %v472, 0.0
      %v538 = vmax.f32 %v475, 0.0
      %v539 = vmax.f32 %v480, 0.0
      %v540 = vmax.f32 %v483, 0.0
      %v541 = vmax.f32 %v488, 0.0
      %v542 = vmax.f32 %v491, 0.0
      %v543 = vmax.f32 %v496, 0.0
      %v544 = vmax.f32 %v499, 0.0
      %v545 = vmax.f32 %v504, 0.0
      %v546 = vmax.f32 %v507, 0.0
      %v547 = vmax.f32 %v512, 0.0
      %v548 = vmax.f32 %v515, 0.0
      %v549 = vmax.f32 %v520, 0.0
      %vm550 = vcmask 261120
      %551 = vst.msk [vmem:[%s175] sm:$0xff] %vm550, %v525
      %552 = vst.msk [vmem:[%s175 + $0x8] sm:$0xff] %vm550, %v526
      %553 = vst.msk [vmem:[%s175 + $0x10] sm:$0xff] %vm550, %v527
      %554 = vst.msk [vmem:[%s175 + $0x18] sm:$0xff] %vm550, %v528
      %555 = vst.msk [vmem:[%s175 + $0x20] sm:$0xff] %vm550, %v529
      %556 = vst.msk [vmem:[%s175 + $0x28] sm:$0xff] %vm550, %v530
      %557 = vst.msk [vmem:[%s175 + $0x30] sm:$0xff] %vm550, %v531
      %558 = vst.msk [vmem:[%s175 + $0x38] sm:$0xff] %vm550, %v532
      %559 = vst.msk [vmem:[%s175 + $0x40] sm:$0xff] %vm550, %v533
      %560 = vst.msk [vmem:[%s175 + $0x48] sm:$0xff] %vm550, %v534
      %561 = vst.msk [vmem:[%s175 + $0x50] sm:$0xff] %vm550, %v535
      %562 = vst.msk [vmem:[%s175 + $0x58] sm:$0xff] %vm550, %v536
      %563 = vst.msk [vmem:[%s175 + $0x60] sm:$0xff] %vm550, %v537
      %564 = vst.msk [vmem:[%s175 + $0x68] sm:$0xff] %vm550, %v538
      %565 = vst.msk [vmem:[%s175 + $0x70] sm:$0xff] %vm550, %v539
      %566 = vst.msk [vmem:[%s175 + $0x78] sm:$0xff] %vm550, %v540
      %567 = vst.msk [vmem:[%s175 + $0x80] sm:$0xff] %vm550, %v541
      %568 = vst.msk [vmem:[%s175 + $0x88] sm:$0xff] %vm550, %v542
      %569 = vst.msk [vmem:[%s175 + $0x90] sm:$0xff] %vm550, %v543
      %570 = vst.msk [vmem:[%s175 + $0x98] sm:$0xff] %vm550, %v544
      %571 = vst.msk [vmem:[%s175 + $0xa0] sm:$0xff] %vm550, %v545
      %572 = vst.msk [vmem:[%s175 + $0xa8] sm:$0xff] %vm550, %v546
      %573 = vst.msk [vmem:[%s175 + $0xb0] sm:$0xff] %vm550, %v547
      %574 = vst.msk [vmem:[%s175 + $0xb8] sm:$0xff] %vm550, %v548
      %575 = vst.msk [vmem:[%s175 + $0xc0] sm:$0xff] %vm550, %v549
      %s576 = smul.u32 25, %s14
      %p577 = scmp.lt.s32.totalorder %s576, 99
      %s578 = scalar_select %p577, %s576, 99
      %s579 = smul.addr %s578, 8
      %s580 = scalar_lea.vmem %s3, %s579
      // Predicated region
      $region33: #{dqn_forward.4} parent=31 // pred_check
        %p581 = pneg %p100
      $region34: #{dqn_forward.4} parent=31 // pred_check_branch
        %583 = sbr.rel (%p581) target = $region36
      $region35: #{dqn_forward.4} parent=31 // pred_region
        %s584 = smul.u32 25, %s14
      $region36: #{dqn_forward.4} parent=31 // pred_fallthru
        _
    $region32: #{dqn_forward.4} parent=5 // pred_fallthru
      _
    %p585 = scmp.le.s32.totalorder 2, %s9
    // Predicated region
    $region37: #{dqn_forward.4} parent=5 // pred_check
      %p586 = pneg %p585
    $region38: #{dqn_forward.4} parent=5 // pred_check_branch
      %588 = sbr.rel (%p586) target = $region40
    $region39: #{dqn_forward.4} parent=5 // pred_region
      %s589 = ssub.s32 %s9, 2
      // Predicated region
      $region41: #{dqn_forward.4} parent=39 // pred_check
        %p590 = pneg %p106
      $region42: #{dqn_forward.4} parent=39 // pred_check_branch
        %592 = sbr.rel (%p590) target = $region44
      $region43: #{dqn_forward.4} parent=39 // pred_region
        %s593 = smul.u32 25, %s15
        %p594 = scmp.lt.s32.totalorder %s593, 99
        %s595 = scalar_select %p594, %s593, 99
        %s596 = smul.addr %s595, 8
        %s597 = scalar_lea.vmem %s3, %s596
      $region44: #{dqn_forward.4} parent=39 // pred_fallthru
        _
    $region40: #{dqn_forward.4} parent=5 // pred_fallthru
      _
  $region6: #{dqn_forward.4} parent=0 // loop_footer
    %s13 = sadd.s32 1, %s9
  $region7: #{dqn_forward.4} parent=0 // loop_footer_branch
    %8 = sbr.rel target = $region3
  $region8: #{dqn_forward.4} parent=0 // loop_exit
    _

// kernel: dqn_forward.5
$region0: #{dqn_forward.5}
  #allocation0 [shape = 'u32[]', space=smem, size = 0x4, offset = 0x4, fixed_abs, tag = 'smem constant byte address 0x4 - core index']
  #allocation1 [shape = 'u32[144,128]{1,0:T(1,128)}', space=vmem, size = 0x12000, scoped, tag = 'internal scratch']
  %s0 = inlined_call_operand.vmem [shape: f32[162,512], index: 0, kind: input, shape index: {}]
  %s1 = inlined_call_operand.vmem [shape: bf16[512,64], index: 1, kind: input, shape index: {}]
  %s2 = inlined_call_operand.vmem [shape: f32[1,64], index: 2, kind: input, shape index: {}]
  %s3 = inlined_call_operand.vmem [shape: f32[162,64], index: 3, kind: output, shape index: {}]
  %s4 = sld [smem:[#allocation0]]
  $region22: #{dqn_forward.5} parent=0
    _
  %s6 = ssub.s32 1, %s4
  %s7 = scalar_select 0, %s6, %s4
  // Predicated region
  $region2: #{dqn_forward.5} parent=0 // pred_check
    _
  $region3: #{dqn_forward.5} parent=0 // pred_check_branch
    %9 = sbr.rel (0) target = $region5
  $region4: #{dqn_forward.5} parent=0 // pred_region
    _
  $region5: #{dqn_forward.5} parent=0 // pred_fallthru
    _
  // Predicated region
  $region6: #{dqn_forward.5} parent=0 // pred_check
    _
  $region7: #{dqn_forward.5} parent=0 // pred_check_branch
    %11 = sbr.rel (0) target = $region9
  $region8: #{dqn_forward.5} parent=0 // pred_region
    _
  $region9: #{dqn_forward.5} parent=0 // pred_fallthru
    _
  // Predicated region
  $region10: #{dqn_forward.5} parent=0 // pred_check
    _
  $region11: #{dqn_forward.5} parent=0 // pred_check_branch
    %13 = sbr.rel (0) target = $region13
  $region12: #{dqn_forward.5} parent=0 // pred_region
    _
  $region13: #{dqn_forward.5} parent=0 // pred_fallthru
    _
  %v15 = vld [vmem:[%s0] sm:$0xff]
  %v16 = vld [vmem:[%s0 + $0x8] sm:$0xff]
  %v17 = vld [vmem:[%s0 + $0x10] sm:$0xff]
  %v18 = vld [vmem:[%s0 + $0x18] sm:$0xff]
  %v19 = vld [vmem:[%s0 + $0x20] sm:$0xff]
  %v20 = vld [vmem:[%s0 + $0x28] sm:$0xff]
  %v21 = vld [vmem:[%s0 + $0x30] sm:$0xff]
  %v22 = vld [vmem:[%s0 + $0x38] sm:$0xff]
  %v23 = vld [vmem:[%s0 + $0x40] sm:$0xff]
  %v24 = vld [vmem:[%s0 + $0x48] sm:$0xff]
  %v25 = vld [vmem:[%s0 + $0x50] sm:$0xff]
  %v26 = vld [vmem:[%s0 + $0x58] sm:$0xff]
  %v27 = vld [vmem:[%s0 + $0x60] sm:$0xff]
  %v28 = vld [vmem:[%s0 + $0x68] sm:$0xff]
  %v29 = vld [vmem:[%s0 + $0x70] sm:$0xff]
  %v30 = vld [vmem:[%s0 + $0x78] sm:$0xff]
  %v31 = vld [vmem:[%s0 + $0x80] sm:$0xff]
  %v32 = vld [vmem:[%s0 + $0x88] sm:$0xff]
  %v33 = vld [vmem:[%s0 + $0x90] sm:$0xff]
  %v34 = vld [vmem:[%s0 + $0x98] sm:$0xff]
  %v35 = vld [vmem:[%s0 + $0xa0] sm:$0xff]
  %v36 = vld [vmem:[%s0 + $0xa8] sm:$0xff]
  %v37 = vld [vmem:[%s0 + $0xb0] sm:$0xff]
  %v38 = vld [vmem:[%s0 + $0xb8] sm:$0xff]
  %v39 = vld [vmem:[%s0 + $0xc0] sm:$0xff]
  %v40 = vld [vmem:[%s0 + $0xc8] sm:$0xff]
  %v41 = vld [vmem:[%s0 + $0xd0] sm:$0xff]
  %v42 = vld [vmem:[%s0 + $0xd8] sm:$0xff]
  %v43 = vld [vmem:[%s0 + $0xe0] sm:$0xff]
  %v44 = vld [vmem:[%s0 + $0xe8] sm:$0xff]
  %v45 = vld [vmem:[%s0 + $0xf0] sm:$0xff]
  %v46 = vld [vmem:[%s0 + $0xf8] sm:$0xff]
  %v47 = vld [vmem:[%s0 + $0x100] sm:$0xff]
  %v48 = vld [vmem:[%s0 + $0x108] sm:$0xff]
  %v49 = vld [vmem:[%s0 + $0x110] sm:$0xff]
  %v50 = vld [vmem:[%s0 + $0x118] sm:$0xff]
  %v51 = vld [vmem:[%s0 + $0x120] sm:$0xff]
  %v52 = vld [vmem:[%s0 + $0x128] sm:$0xff]
  %v53 = vld [vmem:[%s0 + $0x130] sm:$0xff]
  %v54 = vld [vmem:[%s0 + $0x138] sm:$0xff]
  %v55 = vld [vmem:[%s0 + $0x140] sm:$0xff]
  %v56 = vld [vmem:[%s0 + $0x148] sm:$0xff]
  %v57 = vld [vmem:[%s0 + $0x150] sm:$0xff]
  %v58 = vld [vmem:[%s0 + $0x158] sm:$0xff]
  %v59 = vld [vmem:[%s0 + $0x160] sm:$0xff]
  %v60 = vld [vmem:[%s0 + $0x168] sm:$0xff]
  %v61 = vld [vmem:[%s0 + $0x170] sm:$0xff]
  %v62 = vld [vmem:[%s0 + $0x178] sm:$0xff]
  %v63 = vld [vmem:[%s0 + $0x180] sm:$0xff]
  %v64 = vld [vmem:[%s0 + $0x188] sm:$0xff]
  %v65 = vld [vmem:[%s0 + $0x190] sm:$0xff]
  %v66 = vld [vmem:[%s0 + $0x198] sm:$0xff]
  %v67 = vld [vmem:[%s0 + $0x1a0] sm:$0xff]
  %v68 = vld [vmem:[%s0 + $0x1a8] sm:$0xff]
  %v69 = vld [vmem:[%s0 + $0x1b0] sm:$0xff]
  %v70 = vld [vmem:[%s0 + $0x1b8] sm:$0xff]
  %v71 = vld [vmem:[%s0 + $0x1c0] sm:$0xff]
  %v72 = vld [vmem:[%s0 + $0x1c8] sm:$0xff]
  %v73 = vld [vmem:[%s0 + $0x1d0] sm:$0xff]
  %v74 = vld [vmem:[%s0 + $0x1d8] sm:$0xff]
  %v75 = vld [vmem:[%s0 + $0x1e0] sm:$0xff]
  %v76 = vld [vmem:[%s0 + $0x1e8] sm:$0xff]
  %v77 = vld [vmem:[%s0 + $0x1f0] sm:$0xff]
  %v78 = vld [vmem:[%s0 + $0x1f8] sm:$0xff]
  %v79 = vld [vmem:[%s0 + $0x200] sm:$0xff]
  %v80 = vld [vmem:[%s0 + $0x208] sm:$0xff]
  %v81 = vld [vmem:[%s0 + $0x210] sm:$0xff]
  %v82 = vld [vmem:[%s0 + $0x218] sm:$0xff]
  %v83 = vld [vmem:[%s0 + $0x220] sm:$0xff]
  %v84 = vld [vmem:[%s0 + $0x228] sm:$0xff]
  %v85 = vld [vmem:[%s0 + $0x230] sm:$0xff]
  %v86 = vld [vmem:[%s0 + $0x238] sm:$0xff]
  %v87 = vld [vmem:[%s0 + $0x240] sm:$0xff]
  %v88 = vld [vmem:[%s0 + $0x248] sm:$0xff]
  %v89 = vld [vmem:[%s0 + $0x250] sm:$0xff]
  %v90 = vld [vmem:[%s0 + $0x258] sm:$0xff]
  %v91 = vld [vmem:[%s0 + $0x260] sm:$0xff]
  %v92 = vld [vmem:[%s0 + $0x268] sm:$0xff]
  %v93 = vld [vmem:[%s0 + $0x270] sm:$0xff]
  %v94 = vld [vmem:[%s0 + $0x278] sm:$0xff]
  %v95 = vld [vmem:[%s0 + $0x280] sm:$0x3]
  %v96 = vld [vmem:[%s0 + $0x288] sm:$0x3]
  %v97 = vld [vmem:[%s0 + $0x290] sm:$0x3]
  %v98 = vld [vmem:[%s0 + $0x298] sm:$0x3]
  %v99 = vpack.c.bf16 %v19, %v15
  %v100 = vpack.c.bf16 %v20, %v16
  %v101 = vpack.c.bf16 %v21, %v17
  %v102 = vpack.c.bf16 %v22, %v18
  %v103 = vpack.c.bf16 %v27, %v23
  %v104 = vpack.c.bf16 %v28, %v24
  %v105 = vpack.c.bf16 %v29, %v25
  %v106 = vpack.c.bf16 %v30, %v26
  %v107 = vpack.c.bf16 %v35, %v31
  %v108 = vpack.c.bf16 %v36, %v32
  %v109 = vpack.c.bf16 %v37, %v33
  %v110 = vpack.c.bf16 %v38, %v34
  %v111 = vpack.c.bf16 %v43, %v39
  %v112 = vpack.c.bf16 %v44, %v40
  %v113 = vpack.c.bf16 %v45, %v41
  %v114 = vpack.c.bf16 %v46, %v42
  %v115 = vpack.c.bf16 %v51, %v47
  %v116 = vpack.c.bf16 %v52, %v48
  %v117 = vpack.c.bf16 %v53, %v49
  %v118 = vpack.c.bf16 %v54, %v50
  %v119 = vpack.c.bf16 %v59, %v55
  %v120 = vpack.c.bf16 %v60, %v56
  %v121 = vpack.c.bf16 %v61, %v57
  %v122 = vpack.c.bf16 %v62, %v58
  %v123 = vpack.c.bf16 %v67, %v63
  %v124 = vpack.c.bf16 %v68, %v64
  %v125 = vpack.c.bf16 %v69, %v65
  %v126 = vpack.c.bf16 %v70, %v66
  %v127 = vpack.c.bf16 %v75, %v71
  %v128 = vpack.c.bf16 %v76, %v72
  %v129 = vpack.c.bf16 %v77, %v73
  %v130 = vpack.c.bf16 %v78, %v74
  %v131 = vpack.c.bf16 %v83, %v79
  %v132 = vpack.c.bf16 %v84, %v80
  %v133 = vpack.c.bf16 %v85, %v81
  %v134 = vpack.c.bf16 %v86, %v82
  %v135 = vpack.c.bf16 %v91, %v87
  %v136 = vpack.c.bf16 %v92, %v88
  %v137 = vpack.c.bf16 %v93, %v89
  %v138 = vpack.c.bf16 %v94, %v90
  %v139 = vpack.c.bf16 %v95, %v95
  %v140 = vpack.c.bf16 %v96, %v96
  %v141 = vpack.c.bf16 %v97, %v97
  %v142 = vpack.c.bf16 %v98, %v98
  %v143 = vld [vmem:[%s1] sm:$0xf]
  %v144 = vld [vmem:[%s1 + $0x4] sm:$0xf]
  %v145 = vld [vmem:[%s1 + $0x8] sm:$0xf]
  %v146 = vld [vmem:[%s1 + $0xc] sm:$0xf]
  %v147 = vld [vmem:[%s1 + $0x10] sm:$0xf]
  %v148 = vld [vmem:[%s1 + $0x14] sm:$0xf]
  %v149 = vld [vmem:[%s1 + $0x18] sm:$0xf]
  %v150 = vld [vmem:[%s1 + $0x1c] sm:$0xf]
  %v151 = vld [vmem:[%s1 + $0x20] sm:$0xf]
  %v152 = vld [vmem:[%s1 + $0x24] sm:$0xf]
  %v153 = vld [vmem:[%s1 + $0x28] sm:$0xf]
  %v154 = vld [vmem:[%s1 + $0x2c] sm:$0xf]
  %v155 = vld [vmem:[%s1 + $0x30] sm:$0xf]
  %v156 = vld [vmem:[%s1 + $0x34] sm:$0xf]
  %v157 = vld [vmem:[%s1 + $0x38] sm:$0xf]
  %v158 = vld [vmem:[%s1 + $0x3c] sm:$0xf]
  %v159 = vld [vmem:[%s1 + $0x40] sm:$0xf]
  %v160 = vld [vmem:[%s1 + $0x44] sm:$0xf]
  %v161 = vld [vmem:[%s1 + $0x48] sm:$0xf]
  %v162 = vld [vmem:[%s1 + $0x4c] sm:$0xf]
  %v163 = vld [vmem:[%s1 + $0x50] sm:$0xf]
  %v164 = vld [vmem:[%s1 + $0x54] sm:$0xf]
  %v165 = vld [vmem:[%s1 + $0x58] sm:$0xf]
  %v166 = vld [vmem:[%s1 + $0x5c] sm:$0xf]
  %v167 = vld [vmem:[%s1 + $0x60] sm:$0xf]
  %v168 = vld [vmem:[%s1 + $0x64] sm:$0xf]
  %v169 = vld [vmem:[%s1 + $0x68] sm:$0xf]
  %v170 = vld [vmem:[%s1 + $0x6c] sm:$0xf]
  %v171 = vld [vmem:[%s1 + $0x70] sm:$0xf]
  %v172 = vld [vmem:[%s1 + $0x74] sm:$0xf]
  %v173 = vld [vmem:[%s1 + $0x78] sm:$0xf]
  %v174 = vld [vmem:[%s1 + $0x7c] sm:$0xf]
  %v175 = vld [vmem:[%s1 + $0x80] sm:$0xf]
  %v176 = vld [vmem:[%s1 + $0x84] sm:$0xf]
  %v177 = vld [vmem:[%s1 + $0x88] sm:$0xf]
  %v178 = vld [vmem:[%s1 + $0x8c] sm:$0xf]
  %v179 = vld [vmem:[%s1 + $0x90] sm:$0xf]
  %v180 = vld [vmem:[%s1 + $0x94] sm:$0xf]
  %v181 = vld [vmem:[%s1 + $0x98] sm:$0xf]
  %v182 = vld [vmem:[%s1 + $0x9c] sm:$0xf]
  %v183 = vld [vmem:[%s1 + $0xa0] sm:$0xf]
  %v184 = vld [vmem:[%s1 + $0xa4] sm:$0xf]
  %v185 = vld [vmem:[%s1 + $0xa8] sm:$0xf]
  %v186 = vld [vmem:[%s1 + $0xac] sm:$0xf]
  %v187 = vld [vmem:[%s1 + $0xb0] sm:$0xf]
  %v188 = vld [vmem:[%s1 + $0xb4] sm:$0xf]
  %v189 = vld [vmem:[%s1 + $0xb8] sm:$0xf]
  %v190 = vld [vmem:[%s1 + $0xbc] sm:$0xf]
  %v191 = vld [vmem:[%s1 + $0xc0] sm:$0xf]
  %v192 = vld [vmem:[%s1 + $0xc4] sm:$0xf]
  %v193 = vld [vmem:[%s1 + $0xc8] sm:$0xf]
  %v194 = vld [vmem:[%s1 + $0xcc] sm:$0xf]
  %v195 = vld [vmem:[%s1 + $0xd0] sm:$0xf]
  %v196 = vld [vmem:[%s1 + $0xd4] sm:$0xf]
  %v197 = vld [vmem:[%s1 + $0xd8] sm:$0xf]
  %v198 = vld [vmem:[%s1 + $0xdc] sm:$0xf]
  %v199 = vld [vmem:[%s1 + $0xe0] sm:$0xf]
  %v200 = vld [vmem:[%s1 + $0xe4] sm:$0xf]
  %v201 = vld [vmem:[%s1 + $0xe8] sm:$0xf]
  %v202 = vld [vmem:[%s1 + $0xec] sm:$0xf]
  %v203 = vld [vmem:[%s1 + $0xf0] sm:$0xf]
  %v204 = vld [vmem:[%s1 + $0xf4] sm:$0xf]
  %v205 = vld [vmem:[%s1 + $0xf8] sm:$0xf]
  %v206 = vld [vmem:[%s1 + $0xfc] sm:$0xf]
  %v207 = vld [vmem:[%s2] sm:$0x1]
  %v209 = vlaneseq
  %v210 = vshrl.u32 %v209, 7
  %v211 = vsub.s32 0, %v210
  %v212 = vrot.slane %v207, %v211
  %v278 = vunpack.c.l.b16 %v143
  %v279 = vunpack.c.l.b16 %v144
  %v280 = vunpack.c.l.b16 %v145
  %v281 = vunpack.c.l.b16 %v146
  %v282 = vunpack.c.l.b16 %v147
  %v283 = vunpack.c.l.b16 %v148
  %v284 = vunpack.c.l.b16 %v149
  %v285 = vunpack.c.l.b16 %v150
  %v286 = vunpack.c.l.b16 %v151
  %v287 = vunpack.c.l.b16 %v152
  %v288 = vunpack.c.l.b16 %v153
  %v289 = vunpack.c.l.b16 %v154
  %v290 = vunpack.c.l.b16 %v155
  %v291 = vunpack.c.l.b16 %v156
  %v292 = vunpack.c.l.b16 %v157
  %v293 = vunpack.c.l.b16 %v158
  %v294 = vunpack.c.l.b16 %v159
  %v295 = vunpack.c.l.b16 %v160
  %v296 = vunpack.c.l.b16 %v161
  %v297 = vunpack.c.l.b16 %v162
  %v298 = vunpack.c.l.b16 %v163
  %v299 = vunpack.c.l.b16 %v164
  %v300 = vunpack.c.l.b16 %v165
  %v301 = vunpack.c.l.b16 %v166
  %v302 = vunpack.c.l.b16 %v167
  %v303 = vunpack.c.l.b16 %v168
  %v304 = vunpack.c.l.b16 %v169
  %v305 = vunpack.c.l.b16 %v170
  %v306 = vunpack.c.l.b16 %v171
  %v307 = vunpack.c.l.b16 %v172
  %v308 = vunpack.c.l.b16 %v173
  %v309 = vunpack.c.l.b16 %v174
  %v310 = vunpack.c.l.b16 %v175
  %v311 = vunpack.c.l.b16 %v176
  %v312 = vunpack.c.l.b16 %v177
  %v313 = vunpack.c.l.b16 %v178
  %v314 = vunpack.c.l.b16 %v179
  %v315 = vunpack.c.l.b16 %v180
  %v316 = vunpack.c.l.b16 %v181
  %v317 = vunpack.c.l.b16 %v182
  %v318 = vunpack.c.l.b16 %v183
  %v319 = vunpack.c.l.b16 %v184
  %v320 = vunpack.c.l.b16 %v185
  %v321 = vunpack.c.l.b16 %v186
  %v322 = vunpack.c.l.b16 %v187
  %v323 = vunpack.c.l.b16 %v188
  %v324 = vunpack.c.l.b16 %v189
  %v325 = vunpack.c.l.b16 %v190
  %v326 = vunpack.c.l.b16 %v191
  %v327 = vunpack.c.l.b16 %v192
  %v328 = vunpack.c.l.b16 %v193
  %v329 = vunpack.c.l.b16 %v194
  %v330 = vunpack.c.l.b16 %v195
  %v331 = vunpack.c.l.b16 %v196
  %v332 = vunpack.c.l.b16 %v197
  %v333 = vunpack.c.l.b16 %v198
  %v334 = vunpack.c.l.b16 %v199
  %v335 = vunpack.c.l.b16 %v200
  %v336 = vunpack.c.l.b16 %v201
  %v337 = vunpack.c.l.b16 %v202
  %v338 = vunpack.c.l.b16 %v203
  %v339 = vunpack.c.l.b16 %v204
  %v340 = vunpack.c.l.b16 %v205
  %v341 = vunpack.c.l.b16 %v206
  %v342 = vpack.c.b16 %v279, %v278
  %v343 = vpack.c.b16 %v281, %v280
  %v344 = vpack.c.b16 %v283, %v282
  %v345 = vpack.c.b16 %v285, %v284
  %v346 = vpack.c.b16 %v287, %v286
  %v347 = vpack.c.b16 %v289, %v288
  %v348 = vpack.c.b16 %v291, %v290
  %v349 = vpack.c.b16 %v293, %v292
  %v350 = vpack.c.b16 %v295, %v294
  %v351 = vpack.c.b16 %v297, %v296
  %v352 = vpack.c.b16 %v299, %v298
  %v353 = vpack.c.b16 %v301, %v300
  %v354 = vpack.c.b16 %v303, %v302
  %v355 = vpack.c.b16 %v305, %v304
  %v356 = vpack.c.b16 %v307, %v306
  %v357 = vpack.c.b16 %v309, %v308
  %v358 = vpack.c.b16 %v311, %v310
  %v359 = vpack.c.b16 %v313, %v312
  %v360 = vpack.c.b16 %v315, %v314
  %v361 = vpack.c.b16 %v317, %v316
  %v362 = vpack.c.b16 %v319, %v318
  %v363 = vpack.c.b16 %v321, %v320
  %v364 = vpack.c.b16 %v323, %v322
  %v365 = vpack.c.b16 %v325, %v324
  %v366 = vpack.c.b16 %v327, %v326
  %v367 = vpack.c.b16 %v329, %v328
  %v368 = vpack.c.b16 %v331, %v330
  %v369 = vpack.c.b16 %v333, %v332
  %v370 = vpack.c.b16 %v335, %v334
  %v371 = vpack.c.b16 %v337, %v336
  %v372 = vpack.c.b16 %v339, %v338
  %v373 = vpack.c.b16 %v341, %v340
  %406 = vmatprep.subr.bf16.mxu0 0
  %407 = vmatpush1.bf16.msra.mxu0 %v342
  %408 = vmatprep.subr.bf16.mxu0 0
  %409 = vmatpush1.bf16.msra.mxu0 %v343
  %410 = vmatprep.subr.bf16.mxu0 0
  %411 = vmatpush1.bf16.msra.mxu0 %v344
  %412 = vmatprep.subr.bf16.mxu0 0
  %413 = vmatpush1.bf16.msra.mxu0 %v345
  %414 = vmatprep.subr.bf16.mxu0 0
  %415 = vmatpush1.bf16.msra.mxu0 %v346
  %416 = vmatprep.subr.bf16.mxu0 0
  %417 = vmatpush1.bf16.msra.mxu0 %v347
  %418 = vmatprep.subr.bf16.mxu0 0
  %419 = vmatpush1.bf16.msra.mxu0 %v348
  %420 = vmatprep.subr.bf16.mxu0 0
  %421 = vmatpush1.bf16.msra.mxu0 %v349
  %422 = vmatprep.subr.bf16.mxu0 0
  %423 = vmatpush1.bf16.msra.mxu0 %v350
  %424 = vmatprep.subr.bf16.mxu0 0
  %425 = vmatpush1.bf16.msra.mxu0 %v351
  %426 = vmatprep.subr.bf16.mxu0 0
  %427 = vmatpush1.bf16.msra.mxu0 %v352
  %428 = vmatprep.subr.bf16.mxu0 0
  %429 = vmatpush1.bf16.msra.mxu0 %v353
  %430 = vmatprep.subr.bf16.mxu0 0
  %431 = vmatpush1.bf16.msra.mxu0 %v354
  %432 = vmatprep.subr.bf16.mxu0 0
  %433 = vmatpush1.bf16.msra.mxu0 %v355
  %434 = vmatprep.subr.bf16.mxu0 0
  %435 = vmatpush1.bf16.msra.mxu0 %v356
  %436 = vmatprep.subr.bf16.mxu0 0
  %437 = vmatpush1.bf16.msra.mxu0 %v357
  %438 = vmatprep.mubr.bf16.mxu0 %v100
  %439 = vmatmul.mubr.bf16.gmra.mrb[0].mxu0 %v99
  %v440 = vpop.f32.mrb[0].mxu0
  %v441 = vadd.f32 %v212, %v440
  %v442 = vpop.f32.mrb[0].mxu0
  %v443 = vpop.f32.mrb[0].mxu0
  %v444 = vadd.f32 %v212, %v443
  %v445 = vpop.f32.mrb[0].mxu0
  %446 = vmatprep.mubr.bf16.mxu0 %v104
  %447 = vmatmul.mubr.bf16.gmra.mrb[0].mxu0 %v103
  %v448 = vpop.f32.mrb[0].mxu0
  %v449 = vadd.f32 %v212, %v448
  %v450 = vpop.f32.mrb[0].mxu0
  %v451 = vpop.f32.mrb[0].mxu0
  %v452 = vadd.f32 %v212, %v451
  %v453 = vpop.f32.mrb[0].mxu0
  %454 = vmatprep.mubr.bf16.mxu0 %v108
  %455 = vmatmul.mubr.bf16.gmra.mrb[0].mxu0 %v107
  %v456 = vpop.f32.mrb[0].mxu0
  %v457 = vadd.f32 %v212, %v456
  %v458 = vpop.f32.mrb[0].mxu0
  %v459 = vpop.f32.mrb[0].mxu0
  %v460 = vadd.f32 %v212, %v459
  %v461 = vpop.f32.mrb[0].mxu0
  %462 = vmatprep.mubr.bf16.mxu0 %v112
  %463 = vmatmul.mubr.bf16.gmra.mrb[0].mxu0 %v111
  %v464 = vpop.f32.mrb[0].mxu0
  %v465 = vadd.f32 %v212, %v464
  %v466 = vpop.f32.mrb[0].mxu0
  %v467 = vpop.f32.mrb[0].mxu0
  %v468 = vadd.f32 %v212, %v467
  %v469 = vpop.f32.mrb[0].mxu0
  %470 = vmatprep.mubr.bf16.mxu0 %v116
  %471 = vmatmul.mubr.bf16.gmra.mrb[0].mxu0 %v115
  %v472 = vpop.f32.mrb[0].mxu0
  %v473 = vadd.f32 %v212, %v472
  %v474 = vpop.f32.mrb[0].mxu0
  %v475 = vpop.f32.mrb[0].mxu0
  %v476 = vadd.f32 %v212, %v475
  %v477 = vpop.f32.mrb[0].mxu0
  %478 = vmatprep.mubr.bf16.mxu0 %v120
  %479 = vmatmul.mubr.bf16.gmra.mrb[0].mxu0 %v119
  %v480 = vpop.f32.mrb[0].mxu0
  %v481 = vadd.f32 %v212, %v480
  %v482 = vpop.f32.mrb[0].mxu0
  %v483 = vpop.f32.mrb[0].mxu0
  %v484 = vadd.f32 %v212, %v483
  %v485 = vpop.f32.mrb[0].mxu0
  %486 = vmatprep.mubr.bf16.mxu0 %v124
  %487 = vmatmul.mubr.bf16.gmra.mrb[0].mxu0 %v123
  %v488 = vpop.f32.mrb[0].mxu0
  %v489 = vadd.f32 %v212, %v488
  %v490 = vpop.f32.mrb[0].mxu0
  %v491 = vpop.f32.mrb[0].mxu0
  %v492 = vadd.f32 %v212, %v491
  %v493 = vpop.f32.mrb[0].mxu0
  %494 = vmatprep.mubr.bf16.mxu0 %v128
  %495 = vmatmul.mubr.bf16.gmra.mrb[0].mxu0 %v127
  %v496 = vpop.f32.mrb[0].mxu0
  %v497 = vadd.f32 %v212, %v496
  %v498 = vpop.f32.mrb[0].mxu0
  %v499 = vpop.f32.mrb[0].mxu0
  %v500 = vadd.f32 %v212, %v499
  %v501 = vpop.f32.mrb[0].mxu0
  %502 = vmatprep.mubr.bf16.mxu0 %v132
  %503 = vmatmul.mubr.bf16.gmra.mrb[0].mxu0 %v131
  %v504 = vpop.f32.mrb[0].mxu0
  %v505 = vadd.f32 %v212, %v504
  %v506 = vpop.f32.mrb[0].mxu0
  %v507 = vpop.f32.mrb[0].mxu0
  %v508 = vadd.f32 %v212, %v507
  %v509 = vpop.f32.mrb[0].mxu0
  %510 = vmatprep.mubr.bf16.mxu0 %v136
  %511 = vmatmul.mubr.bf16.gmra.mrb[0].mxu0 %v135
  %v512 = vpop.f32.mrb[0].mxu0
  %v513 = vadd.f32 %v212, %v512
  %v514 = vpop.f32.mrb[0].mxu0
  %v515 = vpop.f32.mrb[0].mxu0
  %v516 = vadd.f32 %v212, %v515
  %v517 = vpop.f32.mrb[0].mxu0
  %518 = vmatprep.mubr.bf16.mxu0 %v140
  %519 = vmatmul.mubr.bf16.gmra.mrb[0].mxu0 %v139
  %v520 = vpop.f32.mrb[0].mxu0
  %v521 = vadd.f32 %v212, %v520
  %v522 = vpop.f32.mrb[0].mxu0
  %v523 = vpop.f32.mrb[0].mxu0
  %v524 = vpop.f32.mrb[0].mxu0
  %525 = vdwg.mxu0
  %526 = vmatprep.subr.bf16.mxu0 0
  %527 = vmatpush1.bf16.msra.mxu0 %v358
  %528 = vmatprep.subr.bf16.mxu0 0
  %529 = vmatpush1.bf16.msra.mxu0 %v359
  %530 = vmatprep.subr.bf16.mxu0 0
  %531 = vmatpush1.bf16.msra.mxu0 %v360
  %532 = vmatprep.subr.bf16.mxu0 0
  %533 = vmatpush1.bf16.msra.mxu0 %v361
  %534 = vmatprep.subr.bf16.mxu0 0
  %535 = vmatpush1.bf16.msra.mxu0 %v362
  %536 = vmatprep.subr.bf16.mxu0 0
  %537 = vmatpush1.bf16.msra.mxu0 %v363
  %538 = vmatprep.subr.bf16.mxu0 0
  %539 = vmatpush1.bf16.msra.mxu0 %v364
  %540 = vmatprep.subr.bf16.mxu0 0
  %541 = vmatpush1.bf16.msra.mxu0 %v365
  %542 = vmatprep.subr.bf16.mxu0 0
  %543 = vmatpush1.bf16.msra.mxu0 %v366
  %544 = vmatprep.subr.bf16.mxu0 0
  %545 = vmatpush1.bf16.msra.mxu0 %v367
  %546 = vmatprep.subr.bf16.mxu0 0
  %547 = vmatpush1.bf16.msra.mxu0 %v368
  %548 = vmatprep.subr.bf16.mxu0 0
  %549 = vmatpush1.bf16.msra.mxu0 %v369
  %550 = vmatprep.subr.bf16.mxu0 0
  %551 = vmatpush1.bf16.msra.mxu0 %v370
  %552 = vmatprep.subr.bf16.mxu0 0
  %553 = vmatpush1.bf16.msra.mxu0 %v371
  %554 = vmatprep.subr.bf16.mxu0 0
  %555 = vmatpush1.bf16.msra.mxu0 %v372
  %556 = vmatprep.subr.bf16.mxu0 0
  %557 = vmatpush1.bf16.msra.mxu0 %v373
  %558 = vmatprep.mubr.bf16.mxu0 %v102
  %559 = vmatmul.mubr.bf16.gmra.mrb[0].mxu0 %v101
  %v560 = vpop.f32.mrb[0].mxu0
  %v561 = vadd.f32 %v441, %v560
  %v562 = vpop.f32.mrb[0].mxu0
  %v563 = vpop.f32.mrb[0].mxu0
  %v564 = vadd.f32 %v444, %v563
  %v565 = vpop.f32.mrb[0].mxu0
  %566 = vmatprep.mubr.bf16.mxu0 %v106
  %567 = vmatmul.mubr.bf16.gmra.mrb[0].mxu0 %v105
  %v568 = vpop.f32.mrb[0].mxu0
  %v569 = vadd.f32 %v449, %v568
  %v570 = vpop.f32.mrb[0].mxu0
  %v571 = vpop.f32.mrb[0].mxu0
  %v572 = vadd.f32 %v452, %v571
  %v573 = vpop.f32.mrb[0].mxu0
  %574 = vmatprep.mubr.bf16.mxu0 %v110
  %575 = vmatmul.mubr.bf16.gmra.mrb[0].mxu0 %v109
  %v576 = vpop.f32.mrb[0].mxu0
  %v577 = vadd.f32 %v457, %v576
  %v578 = vpop.f32.mrb[0].mxu0
  %v579 = vpop.f32.mrb[0].mxu0
  %v580 = vadd.f32 %v460, %v579
  %v581 = vpop.f32.mrb[0].mxu0
  %582 = vmatprep.mubr.bf16.mxu0 %v114
  %583 = vmatmul.mubr.bf16.gmra.mrb[0].mxu0 %v113
  %v584 = vpop.f32.mrb[0].mxu0
  %v585 = vadd.f32 %v465, %v584
  %v586 = vpop.f32.mrb[0].mxu0
  %v587 = vpop.f32.mrb[0].mxu0
  %v588 = vadd.f32 %v468, %v587
  %v589 = vpop.f32.mrb[0].mxu0
  %590 = vmatprep.mubr.bf16.mxu0 %v118
  %591 = vmatmul.mubr.bf16.gmra.mrb[0].mxu0 %v117
  %v592 = vpop.f32.mrb[0].mxu0
  %v593 = vadd.f32 %v473, %v592
  %v594 = vpop.f32.mrb[0].mxu0
  %v595 = vpop.f32.mrb[0].mxu0
  %v596 = vadd.f32 %v476, %v595
  %v597 = vpop.f32.mrb[0].mxu0
  %598 = vmatprep.mubr.bf16.mxu0 %v122
  %599 = vmatmul.mubr.bf16.gmra.mrb[0].mxu0 %v121
  %v600 = vpop.f32.mrb[0].mxu0
  %v601 = vadd.f32 %v481, %v600
  %v602 = vpop.f32.mrb[0].mxu0
  %v603 = vpop.f32.mrb[0].mxu0
  %v604 = vadd.f32 %v484, %v603
  %v605 = vpop.f32.mrb[0].mxu0
  %606 = vmatprep.mubr.bf16.mxu0 %v126
  %607 = vmatmul.mubr.bf16.gmra.mrb[0].mxu0 %v125
  %v608 = vpop.f32.mrb[0].mxu0
  %v609 = vadd.f32 %v489, %v608
  %v610 = vpop.f32.mrb[0].mxu0
  %v611 = vpop.f32.mrb[0].mxu0
  %v612 = vadd.f32 %v492, %v611
  %v613 = vpop.f32.mrb[0].mxu0
  %614 = vmatprep.mubr.bf16.mxu0 %v130
  %615 = vmatmul.mubr.bf16.gmra.mrb[0].mxu0 %v129
  %v616 = vpop.f32.mrb[0].mxu0
  %v617 = vadd.f32 %v497, %v616
  %v618 = vpop.f32.mrb[0].mxu0
  %v619 = vpop.f32.mrb[0].mxu0
  %v620 = vadd.f32 %v500, %v619
  %v621 = vpop.f32.mrb[0].mxu0
  %622 = vmatprep.mubr.bf16.mxu0 %v134
  %623 = vmatmul.mubr.bf16.gmra.mrb[0].mxu0 %v133
  %v624 = vpop.f32.mrb[0].mxu0
  %v625 = vadd.f32 %v505, %v624
  %v626 = vpop.f32.mrb[0].mxu0
  %v627 = vpop.f32.mrb[0].mxu0
  %v628 = vadd.f32 %v508, %v627
  %v629 = vpop.f32.mrb[0].mxu0
  %630 = vmatprep.mubr.bf16.mxu0 %v138
  %631 = vmatmul.mubr.bf16.gmra.mrb[0].mxu0 %v137
  %v632 = vpop.f32.mrb[0].mxu0
  %v633 = vadd.f32 %v513, %v632
  %v634 = vpop.f32.mrb[0].mxu0
  %v635 = vpop.f32.mrb[0].mxu0
  %v636 = vadd.f32 %v516, %v635
  %v637 = vpop.f32.mrb[0].mxu0
  %638 = vmatprep.mubr.bf16.mxu0 %v142
  %639 = vmatmul.mubr.bf16.gmra.mrb[0].mxu0 %v141
  %v640 = vpop.f32.mrb[0].mxu0
  %v641 = vadd.f32 %v521, %v640
  %v642 = vpop.f32.mrb[0].mxu0
  %v643 = vpop.f32.mrb[0].mxu0
  %v644 = vpop.f32.mrb[0].mxu0
  %645 = vdwg.mxu0
  %v646 = vmax.f32 %v561, 0.0
  %v647 = vmax.f32 %v564, 0.0
  %v648 = vmax.f32 %v569, 0.0
  %v649 = vmax.f32 %v572, 0.0
  %v650 = vmax.f32 %v577, 0.0
  %v651 = vmax.f32 %v580, 0.0
  %v652 = vmax.f32 %v585, 0.0
  %v653 = vmax.f32 %v588, 0.0
  %v654 = vmax.f32 %v593, 0.0
  %v655 = vmax.f32 %v596, 0.0
  %v656 = vmax.f32 %v601, 0.0
  %v657 = vmax.f32 %v604, 0.0
  %v658 = vmax.f32 %v609, 0.0
  %v659 = vmax.f32 %v612, 0.0
  %v660 = vmax.f32 %v617, 0.0
  %v661 = vmax.f32 %v620, 0.0
  %v662 = vmax.f32 %v625, 0.0
  %v663 = vmax.f32 %v628, 0.0
  %v664 = vmax.f32 %v633, 0.0
  %v665 = vmax.f32 %v636, 0.0
  %v666 = vmax.f32 %v641, 0.0
  %vm667 = vcmask 523264
  %668 = vst.msk [vmem:[%s3] sm:$0xff] %vm667, %v646
  %669 = vst.msk [vmem:[%s3 + $0x8] sm:$0xff] %vm667, %v647
  %670 = vst.msk [vmem:[%s3 + $0x10] sm:$0xff] %vm667, %v648
  %671 = vst.msk [vmem:[%s3 + $0x18] sm:$0xff] %vm667, %v649
  %672 = vst.msk [vmem:[%s3 + $0x20] sm:$0xff] %vm667, %v650
  %673 = vst.msk [vmem:[%s3 + $0x28] sm:$0xff] %vm667, %v651
  %674 = vst.msk [vmem:[%s3 + $0x30] sm:$0xff] %vm667, %v652
  %675 = vst.msk [vmem:[%s3 + $0x38] sm:$0xff] %vm667, %v653
  %676 = vst.msk [vmem:[%s3 + $0x40] sm:$0xff] %vm667, %v654
  %677 = vst.msk [vmem:[%s3 + $0x48] sm:$0xff] %vm667, %v655
  %678 = vst.msk [vmem:[%s3 + $0x50] sm:$0xff] %vm667, %v656
  %679 = vst.msk [vmem:[%s3 + $0x58] sm:$0xff] %vm667, %v657
  %680 = vst.msk [vmem:[%s3 + $0x60] sm:$0xff] %vm667, %v658
  %681 = vst.msk [vmem:[%s3 + $0x68] sm:$0xff] %vm667, %v659
  %682 = vst.msk [vmem:[%s3 + $0x70] sm:$0xff] %vm667, %v660
  %683 = vst.msk [vmem:[%s3 + $0x78] sm:$0xff] %vm667, %v661
  %684 = vst.msk [vmem:[%s3 + $0x80] sm:$0xff] %vm667, %v662
  %685 = vst.msk [vmem:[%s3 + $0x88] sm:$0xff] %vm667, %v663
  %686 = vst.msk [vmem:[%s3 + $0x90] sm:$0xff] %vm667, %v664
  %687 = vst.msk [vmem:[%s3 + $0x98] sm:$0xff] %vm667, %v665
  %vm688 = vcmask 517120
  %689 = vst.msk [vmem:[%s3 + $0xa0] sm:$0x3] %vm688, %v666
  // Predicated region
  $region14: #{dqn_forward.5} parent=0 // pred_check
    _
  $region15: #{dqn_forward.5} parent=0 // pred_check_branch
    %691 = sbr.rel (0) target = $region17
  $region16: #{dqn_forward.5} parent=0 // pred_region
    _
  $region17: #{dqn_forward.5} parent=0 // pred_fallthru
    _
  // Predicated region
  $region18: #{dqn_forward.5} parent=0 // pred_check
    _
  $region19: #{dqn_forward.5} parent=0 // pred_check_branch
    %693 = sbr.rel (0) target = $region21
  $region20: #{dqn_forward.5} parent=0 // pred_region
    _
  $region21: #{dqn_forward.5} parent=0 // pred_fallthru
    _

// kernel: dqn_forward.6
$region0: #{dqn_forward.6}
  #allocation0 [shape = 'u32[]', space=smem, size = 0x4, offset = 0x4, fixed_abs, tag = 'smem constant byte address 0x4 - core index']
  #allocation1 [shape = 'u32[144,128]{1,0:T(1,128)}', space=vmem, size = 0x12000, scoped, tag = 'internal scratch']
  %s0 = inlined_call_operand.vmem [shape: f32[98,576], index: 0, kind: input, shape index: {}]
  %s1 = inlined_call_operand.vmem [shape: bf16[576,64], index: 1, kind: input, shape index: {}]
  %s2 = inlined_call_operand.vmem [shape: f32[1,64], index: 2, kind: input, shape index: {}]
  %s3 = inlined_call_operand.vmem [shape: f32[98,64], index: 3, kind: output, shape index: {}]
  %s4 = sld [smem:[#allocation0]]
  $region22: #{dqn_forward.6} parent=0
    _
  %s6 = ssub.s32 1, %s4
  %s7 = scalar_select 0, %s6, %s4
  // Predicated region
  $region2: #{dqn_forward.6} parent=0 // pred_check
    _
  $region3: #{dqn_forward.6} parent=0 // pred_check_branch
    %9 = sbr.rel (0) target = $region5
  $region4: #{dqn_forward.6} parent=0 // pred_region
    _
  $region5: #{dqn_forward.6} parent=0 // pred_fallthru
    _
  // Predicated region
  $region6: #{dqn_forward.6} parent=0 // pred_check
    _
  $region7: #{dqn_forward.6} parent=0 // pred_check_branch
    %11 = sbr.rel (0) target = $region9
  $region8: #{dqn_forward.6} parent=0 // pred_region
    _
  $region9: #{dqn_forward.6} parent=0 // pred_fallthru
    _
  // Predicated region
  $region10: #{dqn_forward.6} parent=0 // pred_check
    _
  $region11: #{dqn_forward.6} parent=0 // pred_check_branch
    %13 = sbr.rel (0) target = $region13
  $region12: #{dqn_forward.6} parent=0 // pred_region
    _
  $region13: #{dqn_forward.6} parent=0 // pred_fallthru
    _
  %v15 = vld [vmem:[%s0] sm:$0xff]
  %v16 = vld [vmem:[%s0 + $0x8] sm:$0xff]
  %v17 = vld [vmem:[%s0 + $0x10] sm:$0xff]
  %v18 = vld [vmem:[%s0 + $0x18] sm:$0xff]
  %v19 = vld [vmem:[%s0 + $0x20] sm:$0xff]
  %v20 = vld [vmem:[%s0 + $0x28] sm:$0xff]
  %v21 = vld [vmem:[%s0 + $0x30] sm:$0xff]
  %v22 = vld [vmem:[%s0 + $0x38] sm:$0xff]
  %v23 = vld [vmem:[%s0 + $0x40] sm:$0xff]
  %v24 = vld [vmem:[%s0 + $0x48] sm:$0xff]
  %v25 = vld [vmem:[%s0 + $0x50] sm:$0xff]
  %v26 = vld [vmem:[%s0 + $0x58] sm:$0xff]
  %v27 = vld [vmem:[%s0 + $0x60] sm:$0xff]
  %v28 = vld [vmem:[%s0 + $0x68] sm:$0xff]
  %v29 = vld [vmem:[%s0 + $0x70] sm:$0xff]
  %v30 = vld [vmem:[%s0 + $0x78] sm:$0xff]
  %v31 = vld [vmem:[%s0 + $0x80] sm:$0xff]
  %v32 = vld [vmem:[%s0 + $0x88] sm:$0xff]
  %v33 = vld [vmem:[%s0 + $0x90] sm:$0xff]
  %v34 = vld [vmem:[%s0 + $0x98] sm:$0xff]
  %v35 = vld [vmem:[%s0 + $0xa0] sm:$0xff]
  %v36 = vld [vmem:[%s0 + $0xa8] sm:$0xff]
  %v37 = vld [vmem:[%s0 + $0xb0] sm:$0xff]
  %v38 = vld [vmem:[%s0 + $0xb8] sm:$0xff]
  %v39 = vld [vmem:[%s0 + $0xc0] sm:$0xff]
  %v40 = vld [vmem:[%s0 + $0xc8] sm:$0xff]
  %v41 = vld [vmem:[%s0 + $0xd0] sm:$0xff]
  %v42 = vld [vmem:[%s0 + $0xd8] sm:$0xff]
  %v43 = vld [vmem:[%s0 + $0xe0] sm:$0xff]
  %v44 = vld [vmem:[%s0 + $0xe8] sm:$0xff]
  %v45 = vld [vmem:[%s0 + $0xf0] sm:$0xff]
  %v46 = vld [vmem:[%s0 + $0xf8] sm:$0xff]
  %v47 = vld [vmem:[%s0 + $0x100] sm:$0xff]
  %v48 = vld [vmem:[%s0 + $0x108] sm:$0xff]
  %v49 = vld [vmem:[%s0 + $0x110] sm:$0xff]
  %v50 = vld [vmem:[%s0 + $0x118] sm:$0xff]
  %v51 = vld [vmem:[%s0 + $0x120] sm:$0xff]
  %v52 = vld [vmem:[%s0 + $0x128] sm:$0xff]
  %v53 = vld [vmem:[%s0 + $0x130] sm:$0xff]
  %v54 = vld [vmem:[%s0 + $0x138] sm:$0xff]
  %v55 = vld [vmem:[%s0 + $0x140] sm:$0xff]
  %v56 = vld [vmem:[%s0 + $0x148] sm:$0xff]
  %v57 = vld [vmem:[%s0 + $0x150] sm:$0xff]
  %v58 = vld [vmem:[%s0 + $0x158] sm:$0xff]
  %v59 = vld [vmem:[%s0 + $0x160] sm:$0xff]
  %v60 = vld [vmem:[%s0 + $0x168] sm:$0xff]
  %v61 = vld [vmem:[%s0 + $0x170] sm:$0xff]
  %v62 = vld [vmem:[%s0 + $0x178] sm:$0xff]
  %v63 = vld [vmem:[%s0 + $0x180] sm:$0xff]
  %v64 = vld [vmem:[%s0 + $0x188] sm:$0xff]
  %v65 = vld [vmem:[%s0 + $0x190] sm:$0xff]
  %v66 = vld [vmem:[%s0 + $0x198] sm:$0xff]
  %v67 = vld [vmem:[%s0 + $0x1a0] sm:$0xff]
  %v68 = vld [vmem:[%s0 + $0x1a8] sm:$0xff]
  %v69 = vld [vmem:[%s0 + $0x1b0] sm:$0xff]
  %v70 = vld [vmem:[%s0 + $0x1b8] sm:$0xff]
  %v71 = vld [vmem:[%s0 + $0x1c0] sm:$0xff]
  %v72 = vld [vmem:[%s0 + $0x1c8] sm:$0xff]
  %v73 = vld [vmem:[%s0 + $0x1d0] sm:$0xff]
  %v74 = vld [vmem:[%s0 + $0x1d8] sm:$0xff]
  %v75 = vld [vmem:[%s0 + $0x1e0] sm:$0x3]
  %v76 = vld [vmem:[%s0 + $0x1e8] sm:$0x3]
  %v77 = vld [vmem:[%s0 + $0x1f0] sm:$0x3]
  %v78 = vld [vmem:[%s0 + $0x1f8] sm:$0x3]
  %v79 = vld [vmem:[%s0 + $0x200] sm:$0x3]
  %v80 = vpack.c.bf16 %v20, %v15
  %v81 = vpack.c.bf16 %v21, %v16
  %v82 = vpack.c.bf16 %v22, %v17
  %v83 = vpack.c.bf16 %v23, %v18
  %v84 = vpack.c.bf16 %v24, %v19
  %v85 = vpack.c.bf16 %v30, %v25
  %v86 = vpack.c.bf16 %v31, %v26
  %v87 = vpack.c.bf16 %v32, %v27
  %v88 = vpack.c.bf16 %v33, %v28
  %v89 = vpack.c.bf16 %v34, %v29
  %v90 = vpack.c.bf16 %v40, %v35
  %v91 = vpack.c.bf16 %v41, %v36
  %v92 = vpack.c.bf16 %v42, %v37
  %v93 = vpack.c.bf16 %v43, %v38
  %v94 = vpack.c.bf16 %v44, %v39
  %v95 = vpack.c.bf16 %v50, %v45
  %v96 = vpack.c.bf16 %v51, %v46
  %v97 = vpack.c.bf16 %v52, %v47
  %v98 = vpack.c.bf16 %v53, %v48
  %v99 = vpack.c.bf16 %v54, %v49
  %v100 = vpack.c.bf16 %v60, %v55
  %v101 = vpack.c.bf16 %v61, %v56
  %v102 = vpack.c.bf16 %v62, %v57
  %v103 = vpack.c.bf16 %v63, %v58
  %v104 = vpack.c.bf16 %v64, %v59
  %v105 = vpack.c.bf16 %v70, %v65
  %v106 = vpack.c.bf16 %v71, %v66
  %v107 = vpack.c.bf16 %v72, %v67
  %v108 = vpack.c.bf16 %v73, %v68
  %v109 = vpack.c.bf16 %v74, %v69
  %v110 = vpack.c.bf16 %v75, %v75
  %v111 = vpack.c.bf16 %v76, %v76
  %v112 = vpack.c.bf16 %v77, %v77
  %v113 = vpack.c.bf16 %v78, %v78
  %v114 = vpack.c.bf16 %v79, %v79
  %v115 = vld [vmem:[%s1] sm:$0xf]
  %v116 = vld [vmem:[%s1 + $0x4] sm:$0xf]
  %v117 = vld [vmem:[%s1 + $0x8] sm:$0xf]
  %v118 = vld [vmem:[%s1 + $0xc] sm:$0xf]
  %v119 = vld [vmem:[%s1 + $0x10] sm:$0xf]
  %v120 = vld [vmem:[%s1 + $0x14] sm:$0xf]
  %v121 = vld [vmem:[%s1 + $0x18] sm:$0xf]
  %v122 = vld [vmem:[%s1 + $0x1c] sm:$0xf]
  %v123 = vld [vmem:[%s1 + $0x20] sm:$0xf]
  %v124 = vld [vmem:[%s1 + $0x24] sm:$0xf]
  %v125 = vld [vmem:[%s1 + $0x28] sm:$0xf]
  %v126 = vld [vmem:[%s1 + $0x2c] sm:$0xf]
  %v127 = vld [vmem:[%s1 + $0x30] sm:$0xf]
  %v128 = vld [vmem:[%s1 + $0x34] sm:$0xf]
  %v129 = vld [vmem:[%s1 + $0x38] sm:$0xf]
  %v130 = vld [vmem:[%s1 + $0x3c] sm:$0xf]
  %v131 = vld [vmem:[%s1 + $0x40] sm:$0xf]
  %v132 = vld [vmem:[%s1 + $0x44] sm:$0xf]
  %v133 = vld [vmem:[%s1 + $0x48] sm:$0xf]
  %v134 = vld [vmem:[%s1 + $0x4c] sm:$0xf]
  %v135 = vld [vmem:[%s1 + $0x50] sm:$0xf]
  %v136 = vld [vmem:[%s1 + $0x54] sm:$0xf]
  %v137 = vld [vmem:[%s1 + $0x58] sm:$0xf]
  %v138 = vld [vmem:[%s1 + $0x5c] sm:$0xf]
  %v139 = vld [vmem:[%s1 + $0x60] sm:$0xf]
  %v140 = vld [vmem:[%s1 + $0x64] sm:$0xf]
  %v141 = vld [vmem:[%s1 + $0x68] sm:$0xf]
  %v142 = vld [vmem:[%s1 + $0x6c] sm:$0xf]
  %v143 = vld [vmem:[%s1 + $0x70] sm:$0xf]
  %v144 = vld [vmem:[%s1 + $0x74] sm:$0xf]
  %v145 = vld [vmem:[%s1 + $0x78] sm:$0xf]
  %v146 = vld [vmem:[%s1 + $0x7c] sm:$0xf]
  %v147 = vld [vmem:[%s1 + $0x80] sm:$0xf]
  %v148 = vld [vmem:[%s1 + $0x84] sm:$0xf]
  %v149 = vld [vmem:[%s1 + $0x88] sm:$0xf]
  %v150 = vld [vmem:[%s1 + $0x8c] sm:$0xf]
  %v151 = vld [vmem:[%s1 + $0x90] sm:$0xf]
  %v152 = vld [vmem:[%s1 + $0x94] sm:$0xf]
  %v153 = vld [vmem:[%s1 + $0x98] sm:$0xf]
  %v154 = vld [vmem:[%s1 + $0x9c] sm:$0xf]
  %v155 = vld [vmem:[%s1 + $0xa0] sm:$0xf]
  %v156 = vld [vmem:[%s1 + $0xa4] sm:$0xf]
  %v157 = vld [vmem:[%s1 + $0xa8] sm:$0xf]
  %v158 = vld [vmem:[%s1 + $0xac] sm:$0xf]
  %v159 = vld [vmem:[%s1 + $0xb0] sm:$0xf]
  %v160 = vld [vmem:[%s1 + $0xb4] sm:$0xf]
  %v161 = vld [vmem:[%s1 + $0xb8] sm:$0xf]
  %v162 = vld [vmem:[%s1 + $0xbc] sm:$0xf]
  %v163 = vld [vmem:[%s1 + $0xc0] sm:$0xf]
  %v164 = vld [vmem:[%s1 + $0xc4] sm:$0xf]
  %v165 = vld [vmem:[%s1 + $0xc8] sm:$0xf]
  %v166 = vld [vmem:[%s1 + $0xcc] sm:$0xf]
  %v167 = vld [vmem:[%s1 + $0xd0] sm:$0xf]
  %v168 = vld [vmem:[%s1 + $0xd4] sm:$0xf]
  %v169 = vld [vmem:[%s1 + $0xd8] sm:$0xf]
  %v170 = vld [vmem:[%s1 + $0xdc] sm:$0xf]
  %v171 = vld [vmem:[%s1 + $0xe0] sm:$0xf]
  %v172 = vld [vmem:[%s1 + $0xe4] sm:$0xf]
  %v173 = vld [vmem:[%s1 + $0xe8] sm:$0xf]
  %v174 = vld [vmem:[%s1 + $0xec] sm:$0xf]
  %v175 = vld [vmem:[%s1 + $0xf0] sm:$0xf]
  %v176 = vld [vmem:[%s1 + $0xf4] sm:$0xf]
  %v177 = vld [vmem:[%s1 + $0xf8] sm:$0xf]
  %v178 = vld [vmem:[%s1 + $0xfc] sm:$0xf]
  %v179 = vld [vmem:[%s1 + $0x100] sm:$0xf]
  %v180 = vld [vmem:[%s1 + $0x104] sm:$0xf]
  %v181 = vld [vmem:[%s1 + $0x108] sm:$0xf]
  %v182 = vld [vmem:[%s1 + $0x10c] sm:$0xf]
  %v183 = vld [vmem:[%s1 + $0x110] sm:$0xf]
  %v184 = vld [vmem:[%s1 + $0x114] sm:$0xf]
  %v185 = vld [vmem:[%s1 + $0x118] sm:$0xf]
  %v186 = vld [vmem:[%s1 + $0x11c] sm:$0xf]
  %v187 = vld [vmem:[%s2] sm:$0x1]
  %v189 = vlaneseq
  %v190 = vshrl.u32 %v189, 7
  %v191 = vsub.s32 0, %v190
  %v192 = vrot.slane %v187, %v191
  %v266 = vunpack.c.l.b16 %v115
  %v267 = vunpack.c.l.b16 %v116
  %v268 = vunpack.c.l.b16 %v117
  %v269 = vunpack.c.l.b16 %v118
  %v270 = vunpack.c.l.b16 %v119
  %v271 = vunpack.c.l.b16 %v120
  %v272 = vunpack.c.l.b16 %v121
  %v273 = vunpack.c.l.b16 %v122
  %v274 = vunpack.c.l.b16 %v123
  %v275 = vunpack.c.l.b16 %v124
  %v276 = vunpack.c.l.b16 %v125
  %v277 = vunpack.c.l.b16 %v126
  %v278 = vunpack.c.l.b16 %v127
  %v279 = vunpack.c.l.b16 %v128
  %v280 = vunpack.c.l.b16 %v129
  %v281 = vunpack.c.l.b16 %v130
  %v282 = vunpack.c.l.b16 %v131
  %v283 = vunpack.c.l.b16 %v132
  %v284 = vunpack.c.l.b16 %v133
  %v285 = vunpack.c.l.b16 %v134
  %v286 = vunpack.c.l.b16 %v135
  %v287 = vunpack.c.l.b16 %v136
  %v288 = vunpack.c.l.b16 %v137
  %v289 = vunpack.c.l.b16 %v138
  %v290 = vunpack.c.l.b16 %v139
  %v291 = vunpack.c.l.b16 %v140
  %v292 = vunpack.c.l.b16 %v141
  %v293 = vunpack.c.l.b16 %v142
  %v294 = vunpack.c.l.b16 %v143
  %v295 = vunpack.c.l.b16 %v144
  %v296 = vunpack.c.l.b16 %v145
  %v297 = vunpack.c.l.b16 %v146
  %v298 = vunpack.c.l.b16 %v147
  %v299 = vunpack.c.l.b16 %v148
  %v300 = vunpack.c.l.b16 %v149
  %v301 = vunpack.c.l.b16 %v150
  %v302 = vunpack.c.l.b16 %v151
  %v303 = vunpack.c.l.b16 %v152
  %v304 = vunpack.c.l.b16 %v153
  %v305 = vunpack.c.l.b16 %v154
  %v306 = vunpack.c.l.b16 %v155
  %v307 = vunpack.c.l.b16 %v156
  %v308 = vunpack.c.l.b16 %v157
  %v309 = vunpack.c.l.b16 %v158
  %v310 = vunpack.c.l.b16 %v159
  %v311 = vunpack.c.l.b16 %v160
  %v312 = vunpack.c.l.b16 %v161
  %v313 = vunpack.c.l.b16 %v162
  %v314 = vunpack.c.l.b16 %v163
  %v315 = vunpack.c.l.b16 %v164
  %v316 = vunpack.c.l.b16 %v165
  %v317 = vunpack.c.l.b16 %v166
  %v318 = vunpack.c.l.b16 %v167
  %v319 = vunpack.c.l.b16 %v168
  %v320 = vunpack.c.l.b16 %v169
  %v321 = vunpack.c.l.b16 %v170
  %v322 = vunpack.c.l.b16 %v171
  %v323 = vunpack.c.l.b16 %v172
  %v324 = vunpack.c.l.b16 %v173
  %v325 = vunpack.c.l.b16 %v174
  %v326 = vunpack.c.l.b16 %v175
  %v327 = vunpack.c.l.b16 %v176
  %v328 = vunpack.c.l.b16 %v177
  %v329 = vunpack.c.l.b16 %v178
  %v330 = vunpack.c.l.b16 %v179
  %v331 = vunpack.c.l.b16 %v180
  %v332 = vunpack.c.l.b16 %v181
  %v333 = vunpack.c.l.b16 %v182
  %v334 = vunpack.c.l.b16 %v183
  %v335 = vunpack.c.l.b16 %v184
  %v336 = vunpack.c.l.b16 %v185
  %v337 = vunpack.c.l.b16 %v186
  %v338 = vpack.c.b16 %v267, %v266
  %v339 = vpack.c.b16 %v269, %v268
  %v340 = vpack.c.b16 %v271, %v270
  %v341 = vpack.c.b16 %v273, %v272
  %v342 = vpack.c.b16 %v275, %v274
  %v343 = vpack.c.b16 %v277, %v276
  %v344 = vpack.c.b16 %v279, %v278
  %v345 = vpack.c.b16 %v281, %v280
  %v346 = vpack.c.b16 %v283, %v282
  %v347 = vpack.c.b16 %v285, %v284
  %v348 = vpack.c.b16 %v287, %v286
  %v349 = vpack.c.b16 %v289, %v288
  %v350 = vpack.c.b16 %v291, %v290
  %v351 = vpack.c.b16 %v293, %v292
  %v352 = vpack.c.b16 %v295, %v294
  %v353 = vpack.c.b16 %v297, %v296
  %v354 = vpack.c.b16 %v299, %v298
  %v355 = vpack.c.b16 %v301, %v300
  %v356 = vpack.c.b16 %v303, %v302
  %v357 = vpack.c.b16 %v305, %v304
  %v358 = vpack.c.b16 %v307, %v306
  %v359 = vpack.c.b16 %v309, %v308
  %v360 = vpack.c.b16 %v311, %v310
  %v361 = vpack.c.b16 %v313, %v312
  %v362 = vpack.c.b16 %v315, %v314
  %v363 = vpack.c.b16 %v317, %v316
  %v364 = vpack.c.b16 %v319, %v318
  %v365 = vpack.c.b16 %v321, %v320
  %v366 = vpack.c.b16 %v323, %v322
  %v367 = vpack.c.b16 %v325, %v324
  %v368 = vpack.c.b16 %v327, %v326
  %v369 = vpack.c.b16 %v329, %v328
  %v370 = vpack.c.b16 %v331, %v330
  %v371 = vpack.c.b16 %v333, %v332
  %v372 = vpack.c.b16 %v335, %v334
  %v373 = vpack.c.b16 %v337, %v336
  %vm410 = vcmask 523264
  %v412 = vsel %vm410, %v84, 0
  %v415 = vsel %vm410, %v89, 0
  %v418 = vsel %vm410, %v94, 0
  %v421 = vsel %vm410, %v99, 0
  %v424 = vsel %vm410, %v104, 0
  %v427 = vsel %vm410, %v109, 0
  %v430 = vsel %vm410, %v114, 0
  %432 = vmatprep.subr.bf16.mxu0 0
  %433 = vmatpush1.bf16.msra.mxu0 %v338
  %434 = vmatprep.subr.bf16.mxu0 0
  %435 = vmatpush1.bf16.msra.mxu0 %v339
  %436 = vmatprep.subr.bf16.mxu0 0
  %437 = vmatpush1.bf16.msra.mxu0 %v340
  %438 = vmatprep.subr.bf16.mxu0 0
  %439 = vmatpush1.bf16.msra.mxu0 %v341
  %440 = vmatprep.subr.bf16.mxu0 0
  %441 = vmatpush1.bf16.msra.mxu0 %v342
  %442 = vmatprep.subr.bf16.mxu0 0
  %443 = vmatpush1.bf16.msra.mxu0 %v343
  %444 = vmatprep.subr.bf16.mxu0 0
  %445 = vmatpush1.bf16.msra.mxu0 %v344
  %446 = vmatprep.subr.bf16.mxu0 0
  %447 = vmatpush1.bf16.msra.mxu0 %v345
  %448 = vmatprep.subr.bf16.mxu0 0
  %449 = vmatpush1.bf16.msra.mxu0 %v346
  %450 = vmatprep.subr.bf16.mxu0 0
  %451 = vmatpush1.bf16.msra.mxu0 %v347
  %452 = vmatprep.subr.bf16.mxu0 0
  %453 = vmatpush1.bf16.msra.mxu0 %v348
  %454 = vmatprep.subr.bf16.mxu0 0
  %455 = vmatpush1.bf16.msra.mxu0 %v349
  %456 = vmatprep.subr.bf16.mxu0 0
  %457 = vmatpush1.bf16.msra.mxu0 %v350
  %458 = vmatprep.subr.bf16.mxu0 0
  %459 = vmatpush1.bf16.msra.mxu0 %v351
  %460 = vmatprep.subr.bf16.mxu0 0
  %461 = vmatpush1.bf16.msra.mxu0 %v352
  %462 = vmatprep.subr.bf16.mxu0 0
  %463 = vmatpush1.bf16.msra.mxu0 %v353
  %464 = vmatprep.mubr.bf16.mxu0 %v81
  %465 = vmatmul.mubr.bf16.gmra.mrb[0].mxu0 %v80
  %v466 = vpop.f32.mrb[0].mxu0
  %v467 = vadd.f32 %v192, %v466
  %v468 = vpop.f32.mrb[0].mxu0
  %v469 = vpop.f32.mrb[0].mxu0
  %v470 = vadd.f32 %v192, %v469
  %v471 = vpop.f32.mrb[0].mxu0
  %472 = vmatprep.mubr.bf16.mxu0 %v86
  %473 = vmatmul.mubr.bf16.gmra.mrb[0].mxu0 %v85
  %v474 = vpop.f32.mrb[0].mxu0
  %v475 = vadd.f32 %v192, %v474
  %v476 = vpop.f32.mrb[0].mxu0
  %v477 = vpop.f32.mrb[0].mxu0
  %v478 = vadd.f32 %v192, %v477
  %v479 = vpop.f32.mrb[0].mxu0
  %480 = vmatprep.mubr.bf16.mxu0 %v91
  %481 = vmatmul.mubr.bf16.gmra.mrb[0].mxu0 %v90
  %v482 = vpop.f32.mrb[0].mxu0
  %v483 = vadd.f32 %v192, %v482
  %v484 = vpop.f32.mrb[0].mxu0
  %v485 = vpop.f32.mrb[0].mxu0
  %v486 = vadd.f32 %v192, %v485
  %v487 = vpop.f32.mrb[0].mxu0
  %488 = vmatprep.mubr.bf16.mxu0 %v96
  %489 = vmatmul.mubr.bf16.gmra.mrb[0].mxu0 %v95
  %v490 = vpop.f32.mrb[0].mxu0
  %v491 = vadd.f32 %v192, %v490
  %v492 = vpop.f32.mrb[0].mxu0
  %v493 = vpop.f32.mrb[0].mxu0
  %v494 = vadd.f32 %v192, %v493
  %v495 = vpop.f32.mrb[0].mxu0
  %496 = vmatprep.mubr.bf16.mxu0 %v101
  %497 = vmatmul.mubr.bf16.gmra.mrb[0].mxu0 %v100
  %v498 = vpop.f32.mrb[0].mxu0
  %v499 = vadd.f32 %v192, %v498
  %v500 = vpop.f32.mrb[0].mxu0
  %v501 = vpop.f32.mrb[0].mxu0
  %v502 = vadd.f32 %v192, %v501
  %v503 = vpop.f32.mrb[0].mxu0
  %504 = vmatprep.mubr.bf16.mxu0 %v106
  %505 = vmatmul.mubr.bf16.gmra.mrb[0].mxu0 %v105
  %v506 = vpop.f32.mrb[0].mxu0
  %v507 = vadd.f32 %v192, %v506
  %v508 = vpop.f32.mrb[0].mxu0
  %v509 = vpop.f32.mrb[0].mxu0
  %v510 = vadd.f32 %v192, %v509
  %v511 = vpop.f32.mrb[0].mxu0
  %512 = vmatprep.mubr.bf16.mxu0 %v111
  %513 = vmatmul.mubr.bf16.gmra.mrb[0].mxu0 %v110
  %v514 = vpop.f32.mrb[0].mxu0
  %v515 = vadd.f32 %v192, %v514
  %v516 = vpop.f32.mrb[0].mxu0
  %v517 = vpop.f32.mrb[0].mxu0
  %v518 = vpop.f32.mrb[0].mxu0
  %519 = vdwg.mxu0
  %520 = vmatprep.subr.bf16.mxu0 0
  %521 = vmatpush1.bf16.msra.mxu0 %v354
  %522 = vmatprep.subr.bf16.mxu0 0
  %523 = vmatpush1.bf16.msra.mxu0 %v355
  %524 = vmatprep.subr.bf16.mxu0 0
  %525 = vmatpush1.bf16.msra.mxu0 %v356
  %526 = vmatprep.subr.bf16.mxu0 0
  %527 = vmatpush1.bf16.msra.mxu0 %v357
  %528 = vmatprep.subr.bf16.mxu0 0
  %529 = vmatpush1.bf16.msra.mxu0 %v358
  %530 = vmatprep.subr.bf16.mxu0 0
  %531 = vmatpush1.bf16.msra.mxu0 %v359
  %532 = vmatprep.subr.bf16.mxu0 0
  %533 = vmatpush1.bf16.msra.mxu0 %v360
  %534 = vmatprep.subr.bf16.mxu0 0
  %535 = vmatpush1.bf16.msra.mxu0 %v361
  %536 = vmatprep.subr.bf16.mxu0 0
  %537 = vmatpush1.bf16.msra.mxu0 %v362
  %538 = vmatprep.subr.bf16.mxu0 0
  %539 = vmatpush1.bf16.msra.mxu0 %v363
  %540 = vmatprep.subr.bf16.mxu0 0
  %541 = vmatpush1.bf16.msra.mxu0 %v364
  %542 = vmatprep.subr.bf16.mxu0 0
  %543 = vmatpush1.bf16.msra.mxu0 %v365
  %544 = vmatprep.subr.bf16.mxu0 0
  %545 = vmatpush1.bf16.msra.mxu0 %v366
  %546 = vmatprep.subr.bf16.mxu0 0
  %547 = vmatpush1.bf16.msra.mxu0 %v367
  %548 = vmatprep.subr.bf16.mxu0 0
  %549 = vmatpush1.bf16.msra.mxu0 %v368
  %550 = vmatprep.subr.bf16.mxu0 0
  %551 = vmatpush1.bf16.msra.mxu0 %v369
  %552 = vmatprep.mubr.bf16.mxu0 %v83
  %553 = vmatmul.mubr.bf16.gmra.mrb[0].mxu0 %v82
  %v554 = vpop.f32.mrb[0].mxu0
  %v555 = vadd.f32 %v467, %v554
  %v556 = vpop.f32.mrb[0].mxu0
  %v557 = vpop.f32.mrb[0].mxu0
  %v558 = vadd.f32 %v470, %v557
  %v559 = vpop.f32.mrb[0].mxu0
  %560 = vmatprep.mubr.bf16.mxu0 %v88
  %561 = vmatmul.mubr.bf16.gmra.mrb[0].mxu0 %v87
  %v562 = vpop.f32.mrb[0].mxu0
  %v563 = vadd.f32 %v475, %v562
  %v564 = vpop.f32.mrb[0].mxu0
  %v565 = vpop.f32.mrb[0].mxu0
  %v566 = vadd.f32 %v478, %v565
  %v567 = vpop.f32.mrb[0].mxu0
  %568 = vmatprep.mubr.bf16.mxu0 %v93
  %569 = vmatmul.mubr.bf16.gmra.mrb[0].mxu0 %v92
  %v570 = vpop.f32.mrb[0].mxu0
  %v571 = vadd.f32 %v483, %v570
  %v572 = vpop.f32.mrb[0].mxu0
  %v573 = vpop.f32.mrb[0].mxu0
  %v574 = vadd.f32 %v486, %v573
  %v575 = vpop.f32.mrb[0].mxu0
  %576 = vmatprep.mubr.bf16.mxu0 %v98
  %577 = vmatmul.mubr.bf16.gmra.mrb[0].mxu0 %v97
  %v578 = vpop.f32.mrb[0].mxu0
  %v579 = vadd.f32 %v491, %v578
  %v580 = vpop.f32.mrb[0].mxu0
  %v581 = vpop.f32.mrb[0].mxu0
  %v582 = vadd.f32 %v494, %v581
  %v583 = vpop.f32.mrb[0].mxu0
  %584 = vmatprep.mubr.bf16.mxu0 %v103
  %585 = vmatmul.mubr.bf16.gmra.mrb[0].mxu0 %v102
  %v586 = vpop.f32.mrb[0].mxu0
  %v587 = vadd.f32 %v499, %v586
  %v588 = vpop.f32.mrb[0].mxu0
  %v589 = vpop.f32.mrb[0].mxu0
  %v590 = vadd.f32 %v502, %v589
  %v591 = vpop.f32.mrb[0].mxu0
  %592 = vmatprep.mubr.bf16.mxu0 %v108
  %593 = vmatmul.mubr.bf16.gmra.mrb[0].mxu0 %v107
  %v594 = vpop.f32.mrb[0].mxu0
  %v595 = vadd.f32 %v507, %v594
  %v596 = vpop.f32.mrb[0].mxu0
  %v597 = vpop.f32.mrb[0].mxu0
  %v598 = vadd.f32 %v510, %v597
  %v599 = vpop.f32.mrb[0].mxu0
  %600 = vmatprep.mubr.bf16.mxu0 %v113
  %601 = vmatmul.mubr.bf16.gmra.mrb[0].mxu0 %v112
  %v602 = vpop.f32.mrb[0].mxu0
  %v603 = vadd.f32 %v515, %v602
  %v604 = vpop.f32.mrb[0].mxu0
  %v605 = vpop.f32.mrb[0].mxu0
  %v606 = vpop.f32.mrb[0].mxu0
  %607 = vdwg.mxu0
  %608 = vmatprep.subr.bf16.mxu0 0
  %609 = vmatpush1.bf16.msra.mxu0 %v370
  %610 = vmatprep.subr.bf16.mxu0 0
  %611 = vmatpush1.bf16.msra.mxu0 %v371
  %612 = vmatprep.subr.bf16.mxu0 0
  %613 = vmatpush1.bf16.msra.mxu0 %v372
  %614 = vmatprep.subr.bf16.mxu0 0
  %615 = vmatpush1.bf16.msra.mxu0 %v373
  %616 = vmatprep.subr.bf16.mxu0 0
  %617 = vmatpush1.bf16.msra.mxu0 0
  %618 = vmatprep.subr.bf16.mxu0 0
  %619 = vmatpush1.bf16.msra.mxu0 0
  %620 = vmatprep.subr.bf16.mxu0 0
  %621 = vmatpush1.bf16.msra.mxu0 0
  %622 = vmatprep.subr.bf16.mxu0 0
  %623 = vmatpush1.bf16.msra.mxu0 0
  %624 = vmatprep.subr.bf16.mxu0 0
  %625 = vmatpush1.bf16.msra.mxu0 0
  %626 = vmatprep.subr.bf16.mxu0 0
  %627 = vmatpush1.bf16.msra.mxu0 0
  %628 = vmatprep.subr.bf16.mxu0 0
  %629 = vmatpush1.bf16.msra.mxu0 0
  %630 = vmatprep.subr.bf16.mxu0 0
  %631 = vmatpush1.bf16.msra.mxu0 0
  %632 = vmatprep.subr.bf16.mxu0 0
  %633 = vmatpush1.bf16.msra.mxu0 0
  %634 = vmatprep.subr.bf16.mxu0 0
  %635 = vmatpush1.bf16.msra.mxu0 0
  %636 = vmatprep.subr.bf16.mxu0 0
  %637 = vmatpush1.bf16.msra.mxu0 0
  %638 = vmatprep.subr.bf16.mxu0 0
  %639 = vmatpush1.bf16.msra.mxu0 0
  %640 = vmatprep.mubr.bf16.mxu0 0
  %641 = vmatmul.mubr.bf16.gmra.mrb[0].mxu0 %v412
  %v642 = vpop.f32.mrb[0].mxu0
  %v643 = vadd.f32 %v555, %v642
  %v644 = vpop.f32.mrb[0].mxu0
  %v645 = vpop.f32.mrb[0].mxu0
  %v646 = vadd.f32 %v558, %v645
  %v647 = vpop.f32.mrb[0].mxu0
  %648 = vmatprep.mubr.bf16.mxu0 0
  %649 = vmatmul.mubr.bf16.gmra.mrb[0].mxu0 %v415
  %v650 = vpop.f32.mrb[0].mxu0
  %v651 = vadd.f32 %v563, %v650
  %v652 = vpop.f32.mrb[0].mxu0
  %v653 = vpop.f32.mrb[0].mxu0
  %v654 = vadd.f32 %v566, %v653
  %v655 = vpop.f32.mrb[0].mxu0
  %656 = vmatprep.mubr.bf16.mxu0 0
  %657 = vmatmul.mubr.bf16.gmra.mrb[0].mxu0 %v418
  %v658 = vpop.f32.mrb[0].mxu0
  %v659 = vadd.f32 %v571, %v658
  %v660 = vpop.f32.mrb[0].mxu0
  %v661 = vpop.f32.mrb[0].mxu0
  %v662 = vadd.f32 %v574, %v661
  %v663 = vpop.f32.mrb[0].mxu0
  %664 = vmatprep.mubr.bf16.mxu0 0
  %665 = vmatmul.mubr.bf16.gmra.mrb[0].mxu0 %v421
  %v666 = vpop.f32.mrb[0].mxu0
  %v667 = vadd.f32 %v579, %v666
  %v668 = vpop.f32.mrb[0].mxu0
  %v669 = vpop.f32.mrb[0].mxu0
  %v670 = vadd.f32 %v582, %v669
  %v671 = vpop.f32.mrb[0].mxu0
  %672 = vmatprep.mubr.bf16.mxu0 0
  %673 = vmatmul.mubr.bf16.gmra.mrb[0].mxu0 %v424
  %v674 = vpop.f32.mrb[0].mxu0
  %v675 = vadd.f32 %v587, %v674
  %v676 = vpop.f32.mrb[0].mxu0
  %v677 = vpop.f32.mrb[0].mxu0
  %v678 = vadd.f32 %v590, %v677
  %v679 = vpop.f32.mrb[0].mxu0
  %680 = vmatprep.mubr.bf16.mxu0 0
  %681 = vmatmul.mubr.bf16.gmra.mrb[0].mxu0 %v427
  %v682 = vpop.f32.mrb[0].mxu0
  %v683 = vadd.f32 %v595, %v682
  %v684 = vpop.f32.mrb[0].mxu0
  %v685 = vpop.f32.mrb[0].mxu0
  %v686 = vadd.f32 %v598, %v685
  %v687 = vpop.f32.mrb[0].mxu0
  %688 = vmatprep.mubr.bf16.mxu0 0
  %689 = vmatmul.mubr.bf16.gmra.mrb[0].mxu0 %v430
  %v690 = vpop.f32.mrb[0].mxu0
  %v691 = vadd.f32 %v603, %v690
  %v692 = vpop.f32.mrb[0].mxu0
  %v693 = vpop.f32.mrb[0].mxu0
  %v694 = vpop.f32.mrb[0].mxu0
  %695 = vdwg.mxu0
  %v696 = vmax.f32 %v643, 0.0
  %v697 = vmax.f32 %v646, 0.0
  %v698 = vmax.f32 %v651, 0.0
  %v699 = vmax.f32 %v654, 0.0
  %v700 = vmax.f32 %v659, 0.0
  %v701 = vmax.f32 %v662, 0.0
  %v702 = vmax.f32 %v667, 0.0
  %v703 = vmax.f32 %v670, 0.0
  %v704 = vmax.f32 %v675, 0.0
  %v705 = vmax.f32 %v678, 0.0
  %v706 = vmax.f32 %v683, 0.0
  %v707 = vmax.f32 %v686, 0.0
  %v708 = vmax.f32 %v691, 0.0
  %709 = vst.msk [vmem:[%s3] sm:$0xff] %vm410, %v696
  %710 = vst.msk [vmem:[%s3 + $0x8] sm:$0xff] %vm410, %v697
  %711 = vst.msk [vmem:[%s3 + $0x10] sm:$0xff] %vm410, %v698
  %712 = vst.msk [vmem:[%s3 + $0x18] sm:$0xff] %vm410, %v699
  %713 = vst.msk [vmem:[%s3 + $0x20] sm:$0xff] %vm410, %v700
  %714 = vst.msk [vmem:[%s3 + $0x28] sm:$0xff] %vm410, %v701
  %715 = vst.msk [vmem:[%s3 + $0x30] sm:$0xff] %vm410, %v702
  %716 = vst.msk [vmem:[%s3 + $0x38] sm:$0xff] %vm410, %v703
  %717 = vst.msk [vmem:[%s3 + $0x40] sm:$0xff] %vm410, %v704
  %718 = vst.msk [vmem:[%s3 + $0x48] sm:$0xff] %vm410, %v705
  %719 = vst.msk [vmem:[%s3 + $0x50] sm:$0xff] %vm410, %v706
  %720 = vst.msk [vmem:[%s3 + $0x58] sm:$0xff] %vm410, %v707
  %vm721 = vcmask 517120
  %722 = vst.msk [vmem:[%s3 + $0x60] sm:$0x3] %vm721, %v708
  // Predicated region
  $region14: #{dqn_forward.6} parent=0 // pred_check
    _
  $region15: #{dqn_forward.6} parent=0 // pred_check_branch
    %724 = sbr.rel (0) target = $region17
  $region16: #{dqn_forward.6} parent=0 // pred_region
    _
  $region17: #{dqn_forward.6} parent=0 // pred_fallthru
    _
  // Predicated region
  $region18: #{dqn_forward.6} parent=0 // pred_check
    _
  $region19: #{dqn_forward.6} parent=0 // pred_check_branch
    %726 = sbr.rel (0) target = $region21
  $region20: #{dqn_forward.6} parent=0 // pred_region
    _
  $region21: #{dqn_forward.6} parent=0 // pred_fallthru
    _

// kernel: dqn_forward.7
$region0: #{dqn_forward.7}
  #allocation0 [shape = 'u32[]', space=smem, size = 0x4, offset = 0x4, fixed_abs, tag = 'smem constant byte address 0x4 - core index']
  #allocation1 [shape = 'u32[144,128]{1,0:T(1,128)}', space=vmem, size = 0x12000, scoped, tag = 'internal scratch']
  #allocation2 [shape = 'f32[2,512]{1,0:T(2,128)}', space=vmem, size = 0x1000, scoped, tag = 'scratch operand']
  %s0 = inlined_call_operand.vmem [shape: f32[2,3200], index: 0, kind: input, shape index: {}]
  %s1 = inlined_call_operand.vmem [shape: bf16[3200,512], index: 1, kind: input, shape index: {}]
  %s2 = inlined_call_operand.vmem [shape: f32[1,512], index: 2, kind: input, shape index: {}]
  %s3 = inlined_call_operand.vmem [shape: bf16[512,128], index: 3, kind: input, shape index: {}]
  %s4 = inlined_call_operand.vmem [shape: f32[1,128], index: 4, kind: input, shape index: {}]
  %s5 = inlined_call_operand.hbm [shape: f32[2,128], index: 5, kind: output, shape index: {}]
  %s6 = sld [smem:[#allocation0]]
  $region61: #{dqn_forward.7} parent=0
    _
  %s8 = ssub.s32 1, %s6
  %s9 = scalar_select 0, %s8, %s6
  $region1: #{dqn_forward.7} parent=0
    #allocation3 [shape = 'u8[1024]{0}', space=vmem, size = 0x400, scoped, tag = 'output window, operand 0, single buffered']
    #allocation4 [shape = 's32[2]{0}', space=sflag, size = 0x8, scoped, tag = 'scoped memory for dqn_forward.7']
    %10 = vsyncpa [#allocation4], 0
    loop: start=0, step=1, limit=7
    $region2: #{dqn_forward.7} parent=1 // loop_pre_header
      _
    $region3: #{dqn_forward.7} parent=1 // loop_header
      %s12 = sphi 0, %s16
      %p13 = scmp.ge.s32.totalorder %s12, 7
      %s22 = sphi 0, %s24
      %s25 = sphi 0, %s22
      %s26 = sphi 0, %s25
      %s42 = sphi 0, %s26
      %s48 = sphi 0, %s50
      %s51 = sphi 0, %s48
      %s52 = sphi 0, %s51
      %s68 = sphi 0, %s52
      %s72 = sphi 0, %s72
      %s74 = sphi 0, %s72
      %s75 = sphi 0, %s74
      %s89 = sphi 0, %s75
      %s93 = sphi 0, %s93
      %s95 = sphi 0, %s93
      %s96 = sphi 0, %s95
      %s110 = sphi 0, %s96
      %s114 = sphi 0, %s114
      %s116 = sphi 0, %s114
      %s117 = sphi 0, %s116
      %s131 = sphi 0, %s117
      %s135 = sphi 0, %s135
      %s137 = sphi 0, %s135
      %s138 = sphi 0, %s137
      %s152 = sphi 0, %s138
    $region4: #{dqn_forward.7} parent=1 // loop_header_branch
      %15 = sbr.rel (%p13) target = $region8
    $region5: #{dqn_forward.7} parent=1 // loop_body
      %s17 = ssub.s32 %s12, 1
      %s18 = ssub.s32 %s12, 2
      %s19 = sadd.s32 %s12, 1
      %s20 = ssub.s32 %s12, %s19
      %p21 = scmp.eq.s32.totalorder %s20, 0
      %s23 = sadd.s32 %s22, 1
      %s24 = scalar_select %p21, %s22, %s23
      %p27 = pneg %p21
      %p28 = scmp.eq.s32.totalorder %s12, 4
      %p29 = por %p27, %p28
      %p30 = scmp.ne.s32.totalorder %s22, %s25
      %p31 = scmp.eq.s32.totalorder %s12, 0
      %p32 = por %p30, %p31
      %p33 = scmp.ne.s32.totalorder %s22, %s25
      %p34 = scmp.eq.s32.totalorder %s17, 4
      %p35 = por %p33, %p34
      %p36 = scmp.ne.s32.totalorder %s25, %s26
      %p37 = scmp.eq.s32.totalorder %s17, 0
      %p38 = por %p36, %p37
      %p39 = scmp.ne.s32.totalorder %s25, %s26
      %p40 = scmp.eq.s32.totalorder %s18, 4
      %p41 = por %p39, %p40
      %p43 = scmp.ne.s32.totalorder %s26, %s42
      %p44 = scmp.eq.s32.totalorder %s18, 0
      %p45 = por %p43, %p44
      %s46 = ssub.s32 %s12, %s19
      %p47 = scmp.eq.s32.totalorder %s46, 0
      %s49 = sadd.s32 %s48, 1
      %s50 = scalar_select %p47, %s48, %s49
      %p53 = pneg %p47
      %p54 = scmp.eq.s32.totalorder %s12, 4
      %p55 = por %p53, %p54
      %p56 = scmp.ne.s32.totalorder %s48, %s51
      %p57 = scmp.eq.s32.totalorder %s12, 0
      %p58 = por %p56, %p57
      %p59 = scmp.ne.s32.totalorder %s48, %s51
      %p60 = scmp.eq.s32.totalorder %s17, 4
      %p61 = por %p59, %p60
      %p62 = scmp.ne.s32.totalorder %s51, %s52
      %p63 = scmp.eq.s32.totalorder %s17, 0
      %p64 = por %p62, %p63
      %p65 = scmp.ne.s32.totalorder %s51, %s52
      %p66 = scmp.eq.s32.totalorder %s18, 4
      %p67 = por %p65, %p66
      %p69 = scmp.ne.s32.totalorder %s52, %s68
      %p70 = scmp.eq.s32.totalorder %s18, 0
      %p71 = por %p69, %p70
      %s73 = sadd.s32 %s72, 1
      %p76 = scmp.eq.s32.totalorder %s12, 4
      %p77 = scmp.ne.s32.totalorder %s72, %s74
      %p78 = scmp.eq.s32.totalorder %s12, 0
      %p79 = por %p77, %p78
      %p80 = scmp.ne.s32.totalorder %s72, %s74
      %p81 = scmp.eq.s32.totalorder %s17, 4
      %p82 = por %p80, %p81
      %p83 = scmp.ne.s32.totalorder %s74, %s75
      %p84 = scmp.eq.s32.totalorder %s17, 0
      %p85 = por %p83, %p84
      %p86 = scmp.ne.s32.totalorder %s74, %s75
      %p87 = scmp.eq.s32.totalorder %s18, 4
      %p88 = por %p86, %p87
      %p90 = scmp.ne.s32.totalorder %s75, %s89
      %p91 = scmp.eq.s32.totalorder %s18, 0
      %p92 = por %p90, %p91
      %s94 = sadd.s32 %s93, 1
      %p97 = scmp.eq.s32.totalorder %s12, 4
      %p98 = scmp.ne.s32.totalorder %s93, %s95
      %p99 = scmp.eq.s32.totalorder %s12, 0
      %p100 = por %p98, %p99
      %p101 = scmp.ne.s32.totalorder %s93, %s95
      %p102 = scmp.eq.s32.totalorder %s17, 4
      %p103 = por %p101, %p102
      %p104 = scmp.ne.s32.totalorder %s95, %s96
      %p105 = scmp.eq.s32.totalorder %s17, 0
      %p106 = por %p104, %p105
      %p107 = scmp.ne.s32.totalorder %s95, %s96
      %p108 = scmp.eq.s32.totalorder %s18, 4
      %p109 = por %p107, %p108
      %p111 = scmp.ne.s32.totalorder %s96, %s110
      %p112 = scmp.eq.s32.totalorder %s18, 0
      %p113 = por %p111, %p112
      %s115 = sadd.s32 %s114, 1
      %p118 = scmp.eq.s32.totalorder %s12, 4
      %p119 = scmp.ne.s32.totalorder %s114, %s116
      %p120 = scmp.eq.s32.totalorder %s12, 0
      %p121 = por %p119, %p120
      %p122 = scmp.ne.s32.totalorder %s114, %s116
      %p123 = scmp.eq.s32.totalorder %s17, 4
      %p124 = por %p122, %p123
      %p125 = scmp.ne.s32.totalorder %s116, %s117
      %p126 = scmp.eq.s32.totalorder %s17, 0
      %p127 = por %p125, %p126
      %p128 = scmp.ne.s32.totalorder %s116, %s117
      %p129 = scmp.eq.s32.totalorder %s18, 4
      %p130 = por %p128, %p129
      %p132 = scmp.ne.s32.totalorder %s117, %s131
      %p133 = scmp.eq.s32.totalorder %s18, 0
      %p134 = por %p132, %p133
      %s136 = sadd.s32 %s135, 1
      %p139 = scmp.eq.s32.totalorder %s12, 4
      %p140 = scmp.ne.s32.totalorder %s135, %s137
      %p141 = scmp.eq.s32.totalorder %s12, 0
      %p142 = por %p140, %p141
      %p143 = scmp.ne.s32.totalorder %s135, %s137
      %p144 = scmp.eq.s32.totalorder %s17, 4
      %p145 = por %p143, %p144
      %p146 = scmp.ne.s32.totalorder %s137, %s138
      %p147 = scmp.eq.s32.totalorder %s17, 0
      %p148 = por %p146, %p147
      %p149 = scmp.ne.s32.totalorder %s137, %s138
      %p150 = scmp.eq.s32.totalorder %s18, 4
      %p151 = por %p149, %p150
      %p153 = scmp.ne.s32.totalorder %s138, %s152
      %p154 = scmp.eq.s32.totalorder %s18, 0
      %p155 = por %p153, %p154
      %p156 = scmp.le.s32.totalorder 1, %s12
      %p157 = scmp.lt.s32.totalorder %s12, 6
      %p158 = pnand %p156, %p157
      %p159 = pneg %p158
      // Predicated region
      $region9: #{dqn_forward.7} parent=5 // pred_check
        _
      $region10: #{dqn_forward.7} parent=5 // pred_check_branch
        %161 = sbr.rel (%p158) target = $region12
      $region11: #{dqn_forward.7} parent=5 // pred_region
        %s162 = ssub.s32 %s12, 1
        // Predicated region
        $region13: #{dqn_forward.7} parent=11 // pred_check
          %p163 = pneg %p85
        $region14: #{dqn_forward.7} parent=11 // pred_check_branch
          %165 = sbr.rel (%p163) target = $region16
        $region15: #{dqn_forward.7} parent=11 // pred_region
          _
        $region16: #{dqn_forward.7} parent=11 // pred_fallthru
          _
        // Predicated region
        $region17: #{dqn_forward.7} parent=11 // pred_check
          %p166 = pneg %p106
        $region18: #{dqn_forward.7} parent=11 // pred_check_branch
          %168 = sbr.rel (%p166) target = $region20
        $region19: #{dqn_forward.7} parent=11 // pred_region
          _
        $region20: #{dqn_forward.7} parent=11 // pred_fallthru
          _
        // Predicated region
        $region21: #{dqn_forward.7} parent=11 // pred_check
          %p169 = pneg %p127
        $region22: #{dqn_forward.7} parent=11 // pred_check_branch
          %171 = sbr.rel (%p169) target = $region24
        $region23: #{dqn_forward.7} parent=11 // pred_region
          _
        $region24: #{dqn_forward.7} parent=11 // pred_fallthru
          _
      $region12: #{dqn_forward.7} parent=5 // pred_fallthru
        _
      %p172 = scmp.lt.s32.totalorder %s12, 5
      // Predicated region
      $region25: #{dqn_forward.7} parent=5 // pred_check
        %p173 = pneg %p172
      $region26: #{dqn_forward.7} parent=5 // pred_check_branch
        %175 = sbr.rel (%p173) target = $region28
      $region27: #{dqn_forward.7} parent=5 // pred_region
        // Predicated region
        $region29: #{dqn_forward.7} parent=27 // pred_check
          %p176 = pneg %p32
        $region30: #{dqn_forward.7} parent=27 // pred_check_branch
          %178 = sbr.rel (%p176) target = $region32
        $region31: #{dqn_forward.7} parent=27 // pred_region
          %s179 = smul.u32 5, %s12
          %p180 = scmp.lt.s32.totalorder %s179, 24
          %s181 = scalar_select %p180, %s179, 24
          %s182 = smul.addr %s181, 2
          %s183 = scalar_lea.vmem %s0, %s182
          %s184 = smul.u32 5, %s12
        $region32: #{dqn_forward.7} parent=27 // pred_fallthru
          _
        // Predicated region
        $region33: #{dqn_forward.7} parent=27 // pred_check
          %p185 = pneg %p58
        $region34: #{dqn_forward.7} parent=27 // pred_check_branch
          %187 = sbr.rel (%p185) target = $region36
        $region35: #{dqn_forward.7} parent=27 // pred_region
          %s188 = smul.u32 80, %s12
          %p189 = scmp.lt.s32.totalorder %s188, 399
          %s190 = scalar_select %p189, %s188, 399
          %s191 = smul.addr %s190, 4
          %s192 = smul.addr %s191, 4
          %s193 = scalar_lea.vmem %s1, %s192
          %s194 = smul.u32 80, %s12
        $region36: #{dqn_forward.7} parent=27 // pred_fallthru
          _
      $region28: #{dqn_forward.7} parent=5 // pred_fallthru
        _
      %p195 = scmp.le.s32.totalorder 1, %s12
      %p196 = scmp.lt.s32.totalorder %s12, 6
      %p197 = pnand %p195, %p196
      %p198 = pneg %p197
      // Predicated region
      $region37: #{dqn_forward.7} parent=5 // pred_check
        _
      $region38: #{dqn_forward.7} parent=5 // pred_check_branch
        %200 = sbr.rel (%p197) target = $region40
      $region39: #{dqn_forward.7} parent=5 // pred_region
        %s201 = ssub.s32 %s12, 1
        %s202 = smul.u32 5, %s17
        %p203 = scmp.lt.s32.totalorder %s202, 24
        %s204 = scalar_select %p203, %s202, 24
        %s205 = smul.addr %s204, 2
        %s206 = scalar_lea.vmem %s0, %s205
        %p207 = pneg %p38
        %p208 = pneg %p35
        %s209 = smul.u32 80, %s17
        %p210 = scmp.lt.s32.totalorder %s209, 399
        %s211 = scalar_select %p210, %s209, 399
        %s212 = smul.addr %s211, 4
        %s213 = smul.addr %s212, 4
        %s214 = scalar_lea.vmem %s1, %s213
        %p215 = pneg %p64
        %p216 = pneg %p61
        %p217 = pneg %p85
        %p218 = pneg %p82
        %p219 = pneg %p106
        %p220 = pneg %p103
        %p221 = pneg %p127
        %p222 = pneg %p124
        %p223 = pneg %p148
        %p224 = pneg %p145
        %s225 = smul.u32 5, %s17
        %p226 = scmp.lt.s32.totalorder %s225, 24
        %s227 = scalar_select %p226, %s225, 24
        %s228 = smul.addr %s227, 2
        %s229 = scalar_lea.vmem %s0, %s228
        %s230 = smul.u32 5, %s17
        %s231 = smul.u32 80, %s17
        %p232 = scmp.lt.s32.totalorder %s231, 399
        %s233 = scalar_select %p232, %s231, 399
        %s234 = smul.addr %s233, 4
        %s235 = smul.addr %s234, 4
        %s236 = scalar_lea.vmem %s1, %s235
        %s237 = smul.u32 80, %s17
        %p239 = scmp.eq.s32.totalorder %s17, 0
        // Predicated region
        $region41: #{dqn_forward.7} parent=39 // pred_check
          %p240 = pneg %p239
        $region42: #{dqn_forward.7} parent=39 // pred_check_branch
          %242 = sbr.rel (%p240) target = $region44
        $region43: #{dqn_forward.7} parent=39 // pred_region
          %243 = vst [vmem:[#allocation2] sm:$0xff] 0.0
        $region44: #{dqn_forward.7} parent=39 // pred_fallthru
          _
        %v244 = vld [vmem:[#allocation2] sm:$0xff]
        %v245 = vld [vmem:[%s229] sm:$0xff]
        %v246 = vld [vmem:[%s229 + $0x8] sm:$0x3]
        %v249 = vcombine.high %v245, %v245
        %v251 = vunpack.c.l.s4 1983009808
        %v252 = vunpack.c.0.s8 %v251
        %v253 = vlaneseq
        %v254 = vshrl.u32 %v253, 7
        %v255 = vsub.s32 %v252, %v254
        %v256 = vrot.slane %v245, %v255
        %v258 = vunpack.c.l.s4 1983009808
        %v259 = vunpack.c.0.s8 %v258
        %v260 = vlaneseq
        %v261 = vshrl.u32 %v260, 7
        %v262 = vsub.s32 %v259, %v261
        %v263 = vrot.slane %v249, %v262
        %v264 = vcombine.high %v256, %v256
        %v265 = vcombine.high %v263, %v263
        %v267 = vunpack.c.l.s4 1983009808
        %v268 = vunpack.c.0.s8 %v267
        %v269 = vlaneseq
        %v270 = vshrl.u32 %v269, 7
        %v271 = vsub.s32 %v268, %v270
        %v272 = vrot.slane %v246, %v271
        %v278 = vpack.c.bf16 %v256, %v256
        %v279 = vpack.c.bf16 %v264, %v264
        %v280 = vpack.c.bf16 %v263, %v263
        %v281 = vpack.c.bf16 %v265, %v265
        %v282 = vpack.c.bf16 %v272, %v272
        %v283 = vld [vmem:[%s236] sm:$0xff]
        %v284 = vld [vmem:[%s236 + $0x8] sm:$0xff]
        %v285 = vld [vmem:[%s236 + $0x10] sm:$0xff]
        %v286 = vld [vmem:[%s236 + $0x18] sm:$0xff]
        %v287 = vld [vmem:[%s236 + $0x20] sm:$0xff]
        %v288 = vld [vmem:[%s236 + $0x28] sm:$0xff]
        %v289 = vld [vmem:[%s236 + $0x30] sm:$0xff]
        %v290 = vld [vmem:[%s236 + $0x38] sm:$0xff]
        %v291 = vld [vmem:[%s236 + $0x40] sm:$0xff]
        %v292 = vld [vmem:[%s236 + $0x48] sm:$0xff]
        %v293 = vld [vmem:[%s236 + $0x50] sm:$0xff]
        %v294 = vld [vmem:[%s236 + $0x58] sm:$0xff]
        %v295 = vld [vmem:[%s236 + $0x60] sm:$0xff]
        %v296 = vld [vmem:[%s236 + $0x68] sm:$0xff]
        %v297 = vld [vmem:[%s236 + $0x70] sm:$0xff]
        %v298 = vld [vmem:[%s236 + $0x78] sm:$0xff]
        %v299 = vld [vmem:[%s236 + $0x80] sm:$0xff]
        %v300 = vld [vmem:[%s236 + $0x88] sm:$0xff]
        %v301 = vld [vmem:[%s236 + $0x90] sm:$0xff]
        %v302 = vld [vmem:[%s236 + $0x98] sm:$0xff]
        %v303 = vld [vmem:[%s236 + $0xa0] sm:$0xff]
        %v304 = vld [vmem:[%s236 + $0xa8] sm:$0xff]
        %v305 = vld [vmem:[%s236 + $0xb0] sm:$0xff]
        %v306 = vld [vmem:[%s236 + $0xb8] sm:$0xff]
        %v307 = vld [vmem:[%s236 + $0xc0] sm:$0xff]
        %v308 = vld [vmem:[%s236 + $0xc8] sm:$0xff]
        %v309 = vld [vmem:[%s236 + $0xd0] sm:$0xff]
        %v310 = vld [vmem:[%s236 + $0xd8] sm:$0xff]
        %v311 = vld [vmem:[%s236 + $0xe0] sm:$0xff]
        %v312 = vld [vmem:[%s236 + $0xe8] sm:$0xff]
        %v313 = vld [vmem:[%s236 + $0xf0] sm:$0xff]
        %v314 = vld [vmem:[%s236 + $0xf8] sm:$0xff]
        %v315 = vld [vmem:[%s236 + $0x100] sm:$0xff]
        %v316 = vld [vmem:[%s236 + $0x108] sm:$0xff]
        %v317 = vld [vmem:[%s236 + $0x110] sm:$0xff]
        %v318 = vld [vmem:[%s236 + $0x118] sm:$0xff]
        %v319 = vld [vmem:[%s236 + $0x120] sm:$0xff]
        %v320 = vld [vmem:[%s236 + $0x128] sm:$0xff]
        %v321 = vld [vmem:[%s236 + $0x130] sm:$0xff]
        %v322 = vld [vmem:[%s236 + $0x138] sm:$0xff]
        %v323 = vld [vmem:[%s236 + $0x140] sm:$0xff]
        %v324 = vld [vmem:[%s236 + $0x148] sm:$0xff]
        %v325 = vld [vmem:[%s236 + $0x150] sm:$0xff]
        %v326 = vld [vmem:[%s236 + $0x158] sm:$0xff]
        %v327 = vld [vmem:[%s236 + $0x160] sm:$0xff]
        %v328 = vld [vmem:[%s236 + $0x168] sm:$0xff]
        %v329 = vld [vmem:[%s236 + $0x170] sm:$0xff]
        %v330 = vld [vmem:[%s236 + $0x178] sm:$0xff]
        %v331 = vld [vmem:[%s236 + $0x180] sm:$0xff]
        %v332 = vld [vmem:[%s236 + $0x188] sm:$0xff]
        %v333 = vld [vmem:[%s236 + $0x190] sm:$0xff]
        %v334 = vld [vmem:[%s236 + $0x198] sm:$0xff]
        %v335 = vld [vmem:[%s236 + $0x1a0] sm:$0xff]
        %v336 = vld [vmem:[%s236 + $0x1a8] sm:$0xff]
        %v337 = vld [vmem:[%s236 + $0x1b0] sm:$0xff]
        %v338 = vld [vmem:[%s236 + $0x1b8] sm:$0xff]
        %v339 = vld [vmem:[%s236 + $0x1c0] sm:$0xff]
        %v340 = vld [vmem:[%s236 + $0x1c8] sm:$0xff]
        %v341 = vld [vmem:[%s236 + $0x1d0] sm:$0xff]
        %v342 = vld [vmem:[%s236 + $0x1d8] sm:$0xff]
        %v343 = vld [vmem:[%s236 + $0x1e0] sm:$0xff]
        %v344 = vld [vmem:[%s236 + $0x1e8] sm:$0xff]
        %v345 = vld [vmem:[%s236 + $0x1f0] sm:$0xff]
        %v346 = vld [vmem:[%s236 + $0x1f8] sm:$0xff]
        %v347 = vld [vmem:[%s236 + $0x200] sm:$0xff]
        %v348 = vld [vmem:[%s236 + $0x208] sm:$0xff]
        %v349 = vld [vmem:[%s236 + $0x210] sm:$0xff]
        %v350 = vld [vmem:[%s236 + $0x218] sm:$0xff]
        %v351 = vld [vmem:[%s236 + $0x220] sm:$0xff]
        %v352 = vld [vmem:[%s236 + $0x228] sm:$0xff]
        %v353 = vld [vmem:[%s236 + $0x230] sm:$0xff]
        %v354 = vld [vmem:[%s236 + $0x238] sm:$0xff]
        %v355 = vld [vmem:[%s236 + $0x240] sm:$0xff]
        %v356 = vld [vmem:[%s236 + $0x248] sm:$0xff]
        %v357 = vld [vmem:[%s236 + $0x250] sm:$0xff]
        %v358 = vld [vmem:[%s236 + $0x258] sm:$0xff]
        %v359 = vld [vmem:[%s236 + $0x260] sm:$0xff]
        %v360 = vld [vmem:[%s236 + $0x268] sm:$0xff]
        %v361 = vld [vmem:[%s236 + $0x270] sm:$0xff]
        %v362 = vld [vmem:[%s236 + $0x278] sm:$0xff]
        %v363 = vld [vmem:[%s236 + $0x280] sm:$0xff]
        %v364 = vld [vmem:[%s236 + $0x288] sm:$0xff]
        %v365 = vld [vmem:[%s236 + $0x290] sm:$0xff]
        %v366 = vld [vmem:[%s236 + $0x298] sm:$0xff]
        %v367 = vld [vmem:[%s236 + $0x2a0] sm:$0xff]
        %v368 = vld [vmem:[%s236 + $0x2a8] sm:$0xff]
        %v369 = vld [vmem:[%s236 + $0x2b0] sm:$0xff]
        %v370 = vld [vmem:[%s236 + $0x2b8] sm:$0xff]
        %v371 = vld [vmem:[%s236 + $0x2c0] sm:$0xff]
        %v372 = vld [vmem:[%s236 + $0x2c8] sm:$0xff]
        %v373 = vld [vmem:[%s236 + $0x2d0] sm:$0xff]
        %v374 = vld [vmem:[%s236 + $0x2d8] sm:$0xff]
        %v375 = vld [vmem:[%s236 + $0x2e0] sm:$0xff]
        %v376 = vld [vmem:[%s236 + $0x2e8] sm:$0xff]
        %v377 = vld [vmem:[%s236 + $0x2f0] sm:$0xff]
        %v378 = vld [vmem:[%s236 + $0x2f8] sm:$0xff]
        %v379 = vld [vmem:[%s236 + $0x300] sm:$0xff]
        %v380 = vld [vmem:[%s236 + $0x308] sm:$0xff]
        %v381 = vld [vmem:[%s236 + $0x310] sm:$0xff]
        %v382 = vld [vmem:[%s236 + $0x318] sm:$0xff]
        %v383 = vld [vmem:[%s236 + $0x320] sm:$0xff]
        %v384 = vld [vmem:[%s236 + $0x328] sm:$0xff]
        %v385 = vld [vmem:[%s236 + $0x330] sm:$0xff]
        %v386 = vld [vmem:[%s236 + $0x338] sm:$0xff]
        %v387 = vld [vmem:[%s236 + $0x340] sm:$0xff]
        %v388 = vld [vmem:[%s236 + $0x348] sm:$0xff]
        %v389 = vld [vmem:[%s236 + $0x350] sm:$0xff]
        %v390 = vld [vmem:[%s236 + $0x358] sm:$0xff]
        %v391 = vld [vmem:[%s236 + $0x360] sm:$0xff]
        %v392 = vld [vmem:[%s236 + $0x368] sm:$0xff]
        %v393 = vld [vmem:[%s236 + $0x370] sm:$0xff]
        %v394 = vld [vmem:[%s236 + $0x378] sm:$0xff]
        %v395 = vld [vmem:[%s236 + $0x380] sm:$0xff]
        %v396 = vld [vmem:[%s236 + $0x388] sm:$0xff]
        %v397 = vld [vmem:[%s236 + $0x390] sm:$0xff]
        %v398 = vld [vmem:[%s236 + $0x398] sm:$0xff]
        %v399 = vld [vmem:[%s236 + $0x3a0] sm:$0xff]
        %v400 = vld [vmem:[%s236 + $0x3a8] sm:$0xff]
        %v401 = vld [vmem:[%s236 + $0x3b0] sm:$0xff]
        %v402 = vld [vmem:[%s236 + $0x3b8] sm:$0xff]
        %v403 = vld [vmem:[%s236 + $0x3c0] sm:$0xff]
        %v404 = vld [vmem:[%s236 + $0x3c8] sm:$0xff]
        %v405 = vld [vmem:[%s236 + $0x3d0] sm:$0xff]
        %v406 = vld [vmem:[%s236 + $0x3d8] sm:$0xff]
        %v407 = vld [vmem:[%s236 + $0x3e0] sm:$0xff]
        %v408 = vld [vmem:[%s236 + $0x3e8] sm:$0xff]
        %v409 = vld [vmem:[%s236 + $0x3f0] sm:$0xff]
        %v410 = vld [vmem:[%s236 + $0x3f8] sm:$0xff]
        %v411 = vld [vmem:[%s236 + $0x400] sm:$0xff]
        %v412 = vld [vmem:[%s236 + $0x408] sm:$0xff]
        %v413 = vld [vmem:[%s236 + $0x410] sm:$0xff]
        %v414 = vld [vmem:[%s236 + $0x418] sm:$0xff]
        %v415 = vld [vmem:[%s236 + $0x420] sm:$0xff]
        %v416 = vld [vmem:[%s236 + $0x428] sm:$0xff]
        %v417 = vld [vmem:[%s236 + $0x430] sm:$0xff]
        %v418 = vld [vmem:[%s236 + $0x438] sm:$0xff]
        %v419 = vld [vmem:[%s236 + $0x440] sm:$0xff]
        %v420 = vld [vmem:[%s236 + $0x448] sm:$0xff]
        %v421 = vld [vmem:[%s236 + $0x450] sm:$0xff]
        %v422 = vld [vmem:[%s236 + $0x458] sm:$0xff]
        %v423 = vld [vmem:[%s236 + $0x460] sm:$0xff]
        %v424 = vld [vmem:[%s236 + $0x468] sm:$0xff]
        %v425 = vld [vmem:[%s236 + $0x470] sm:$0xff]
        %v426 = vld [vmem:[%s236 + $0x478] sm:$0xff]
        %v427 = vld [vmem:[%s236 + $0x480] sm:$0xff]
        %v428 = vld [vmem:[%s236 + $0x488] sm:$0xff]
        %v429 = vld [vmem:[%s236 + $0x490] sm:$0xff]
        %v430 = vld [vmem:[%s236 + $0x498] sm:$0xff]
        %v431 = vld [vmem:[%s236 + $0x4a0] sm:$0xff]
        %v432 = vld [vmem:[%s236 + $0x4a8] sm:$0xff]
        %v433 = vld [vmem:[%s236 + $0x4b0] sm:$0xff]
        %v434 = vld [vmem:[%s236 + $0x4b8] sm:$0xff]
        %v435 = vld [vmem:[%s236 + $0x4c0] sm:$0xff]
        %v436 = vld [vmem:[%s236 + $0x4c8] sm:$0xff]
        %v437 = vld [vmem:[%s236 + $0x4d0] sm:$0xff]
        %v438 = vld [vmem:[%s236 + $0x4d8] sm:$0xff]
        %v439 = vld [vmem:[%s236 + $0x4e0] sm:$0xff]
        %v440 = vld [vmem:[%s236 + $0x4e8] sm:$0xff]
        %v441 = vld [vmem:[%s236 + $0x4f0] sm:$0xff]
        %v442 = vld [vmem:[%s236 + $0x4f8] sm:$0xff]
        %v603 = vunpack.c.l.b16 %v283
        %v604 = vunpack.c.h.b16 %v283
        %v605 = vunpack.c.l.b16 %v284
        %v606 = vunpack.c.h.b16 %v284
        %v607 = vunpack.c.l.b16 %v285
        %v608 = vunpack.c.h.b16 %v285
        %v609 = vunpack.c.l.b16 %v286
        %v610 = vunpack.c.h.b16 %v286
        %v611 = vunpack.c.l.b16 %v287
        %v612 = vunpack.c.h.b16 %v287
        %v613 = vunpack.c.l.b16 %v288
        %v614 = vunpack.c.h.b16 %v288
        %v615 = vunpack.c.l.b16 %v289
        %v616 = vunpack.c.h.b16 %v289
        %v617 = vunpack.c.l.b16 %v290
        %v618 = vunpack.c.h.b16 %v290
        %v619 = vunpack.c.l.b16 %v291
        %v620 = vunpack.c.h.b16 %v291
        %v621 = vunpack.c.l.b16 %v292
        %v622 = vunpack.c.h.b16 %v292
        %v623 = vunpack.c.l.b16 %v293
        %v624 = vunpack.c.h.b16 %v293
        %v625 = vunpack.c.l.b16 %v294
        %v626 = vunpack.c.h.b16 %v294
        %v627 = vunpack.c.l.b16 %v295
        %v628 = vunpack.c.h.b16 %v295
        %v629 = vunpack.c.l.b16 %v296
        %v630 = vunpack.c.h.b16 %v296
        %v631 = vunpack.c.l.b16 %v297
        %v632 = vunpack.c.h.b16 %v297
        %v633 = vunpack.c.l.b16 %v298
        %v634 = vunpack.c.h.b16 %v298
        %v635 = vunpack.c.l.b16 %v299
        %v636 = vunpack.c.h.b16 %v299
        %v637 = vunpack.c.l.b16 %v300
        %v638 = vunpack.c.h.b16 %v300
        %v639 = vunpack.c.l.b16 %v301
        %v640 = vunpack.c.h.b16 %v301
        %v641 = vunpack.c.l.b16 %v302
        %v642 = vunpack.c.h.b16 %v302
        %v643 = vunpack.c.l.b16 %v303
        %v644 = vunpack.c.h.b16 %v303
        %v645 = vunpack.c.l.b16 %v304
        %v646 = vunpack.c.h.b16 %v304
        %v647 = vunpack.c.l.b16 %v305
        %v648 = vunpack.c.h.b16 %v305
        %v649 = vunpack.c.l.b16 %v306
        %v650 = vunpack.c.h.b16 %v306
        %v651 = vunpack.c.l.b16 %v307
        %v652 = vunpack.c.h.b16 %v307
        %v653 = vunpack.c.l.b16 %v308
        %v654 = vunpack.c.h.b16 %v308
        %v655 = vunpack.c.l.b16 %v309
        %v656 = vunpack.c.h.b16 %v309
        %v657 = vunpack.c.l.b16 %v310
        %v658 = vunpack.c.h.b16 %v310
        %v659 = vunpack.c.l.b16 %v311
        %v660 = vunpack.c.h.b16 %v311
        %v661 = vunpack.c.l.b16 %v312
        %v662 = vunpack.c.h.b16 %v312
        %v663 = vunpack.c.l.b16 %v313
        %v664 = vunpack.c.h.b16 %v313
        %v665 = vunpack.c.l.b16 %v314
        %v666 = vunpack.c.h.b16 %v314
        %v667 = vunpack.c.l.b16 %v315
        %v668 = vunpack.c.h.b16 %v315
        %v669 = vunpack.c.l.b16 %v316
        %v670 = vunpack.c.h.b16 %v316
        %v671 = vunpack.c.l.b16 %v317
        %v672 = vunpack.c.h.b16 %v317
        %v673 = vunpack.c.l.b16 %v318
        %v674 = vunpack.c.h.b16 %v318
        %v675 = vunpack.c.l.b16 %v319
        %v676 = vunpack.c.h.b16 %v319
        %v677 = vunpack.c.l.b16 %v320
        %v678 = vunpack.c.h.b16 %v320
        %v679 = vunpack.c.l.b16 %v321
        %v680 = vunpack.c.h.b16 %v321
        %v681 = vunpack.c.l.b16 %v322
        %v682 = vunpack.c.h.b16 %v322
        %v683 = vunpack.c.l.b16 %v323
        %v684 = vunpack.c.h.b16 %v323
        %v685 = vunpack.c.l.b16 %v324
        %v686 = vunpack.c.h.b16 %v324
        %v687 = vunpack.c.l.b16 %v325
        %v688 = vunpack.c.h.b16 %v325
        %v689 = vunpack.c.l.b16 %v326
        %v690 = vunpack.c.h.b16 %v326
        %v691 = vunpack.c.l.b16 %v327
        %v692 = vunpack.c.h.b16 %v327
        %v693 = vunpack.c.l.b16 %v328
        %v694 = vunpack.c.h.b16 %v328
        %v695 = vunpack.c.l.b16 %v329
        %v696 = vunpack.c.h.b16 %v329
        %v697 = vunpack.c.l.b16 %v330
        %v698 = vunpack.c.h.b16 %v330
        %v699 = vunpack.c.l.b16 %v331
        %v700 = vunpack.c.h.b16 %v331
        %v701 = vunpack.c.l.b16 %v332
        %v702 = vunpack.c.h.b16 %v332
        %v703 = vunpack.c.l.b16 %v333
        %v704 = vunpack.c.h.b16 %v333
        %v705 = vunpack.c.l.b16 %v334
        %v706 = vunpack.c.h.b16 %v334
        %v707 = vunpack.c.l.b16 %v335
        %v708 = vunpack.c.h.b16 %v335
        %v709 = vunpack.c.l.b16 %v336
        %v710 = vunpack.c.h.b16 %v336
        %v711 = vunpack.c.l.b16 %v337
        %v712 = vunpack.c.h.b16 %v337
        %v713 = vunpack.c.l.b16 %v338
        %v714 = vunpack.c.h.b16 %v338
        %v715 = vunpack.c.l.b16 %v339
        %v716 = vunpack.c.h.b16 %v339
        %v717 = vunpack.c.l.b16 %v340
        %v718 = vunpack.c.h.b16 %v340
        %v719 = vunpack.c.l.b16 %v341
        %v720 = vunpack.c.h.b16 %v341
        %v721 = vunpack.c.l.b16 %v342
        %v722 = vunpack.c.h.b16 %v342
        %v723 = vunpack.c.l.b16 %v343
        %v724 = vunpack.c.h.b16 %v343
        %v725 = vunpack.c.l.b16 %v344
        %v726 = vunpack.c.h.b16 %v344
        %v727 = vunpack.c.l.b16 %v345
        %v728 = vunpack.c.h.b16 %v345
        %v729 = vunpack.c.l.b16 %v346
        %v730 = vunpack.c.h.b16 %v346
        %v731 = vunpack.c.l.b16 %v347
        %v732 = vunpack.c.h.b16 %v347
        %v733 = vunpack.c.l.b16 %v348
        %v734 = vunpack.c.h.b16 %v348
        %v735 = vunpack.c.l.b16 %v349
        %v736 = vunpack.c.h.b16 %v349
        %v737 = vunpack.c.l.b16 %v350
        %v738 = vunpack.c.h.b16 %v350
        %v739 = vunpack.c.l.b16 %v351
        %v740 = vunpack.c.h.b16 %v351
        %v741 = vunpack.c.l.b16 %v352
        %v742 = vunpack.c.h.b16 %v352
        %v743 = vunpack.c.l.b16 %v353
        %v744 = vunpack.c.h.b16 %v353
        %v745 = vunpack.c.l.b16 %v354
        %v746 = vunpack.c.h.b16 %v354
        %v747 = vunpack.c.l.b16 %v355
        %v748 = vunpack.c.h.b16 %v355
        %v749 = vunpack.c.l.b16 %v356
        %v750 = vunpack.c.h.b16 %v356
        %v751 = vunpack.c.l.b16 %v357
        %v752 = vunpack.c.h.b16 %v357
        %v753 = vunpack.c.l.b16 %v358
        %v754 = vunpack.c.h.b16 %v358
        %v755 = vunpack.c.l.b16 %v359
        %v756 = vunpack.c.h.b16 %v359
        %v757 = vunpack.c.l.b16 %v360
        %v758 = vunpack.c.h.b16 %v360
        %v759 = vunpack.c.l.b16 %v361
        %v760 = vunpack.c.h.b16 %v361
        %v761 = vunpack.c.l.b16 %v362
        %v762 = vunpack.c.h.b16 %v362
        %v763 = vunpack.c.l.b16 %v363
        %v764 = vunpack.c.h.b16 %v363
        %v765 = vunpack.c.l.b16 %v364
        %v766 = vunpack.c.h.b16 %v364
        %v767 = vunpack.c.l.b16 %v365
        %v768 = vunpack.c.h.b16 %v365
        %v769 = vunpack.c.l.b16 %v366
        %v770 = vunpack.c.h.b16 %v366
        %v771 = vunpack.c.l.b16 %v367
        %v772 = vunpack.c.h.b16 %v367
        %v773 = vunpack.c.l.b16 %v368
        %v774 = vunpack.c.h.b16 %v368
        %v775 = vunpack.c.l.b16 %v369
        %v776 = vunpack.c.h.b16 %v369
        %v777 = vunpack.c.l.b16 %v370
        %v778 = vunpack.c.h.b16 %v370
        %v779 = vunpack.c.l.b16 %v371
        %v780 = vunpack.c.h.b16 %v371
        %v781 = vunpack.c.l.b16 %v372
        %v782 = vunpack.c.h.b16 %v372
        %v783 = vunpack.c.l.b16 %v373
        %v784 = vunpack.c.h.b16 %v373
        %v785 = vunpack.c.l.b16 %v374
        %v786 = vunpack.c.h.b16 %v374
        %v787 = vunpack.c.l.b16 %v375
        %v788 = vunpack.c.h.b16 %v375
        %v789 = vunpack.c.l.b16 %v376
        %v790 = vunpack.c.h.b16 %v376
        %v791 = vunpack.c.l.b16 %v377
        %v792 = vunpack.c.h.b16 %v377
        %v793 = vunpack.c.l.b16 %v378
        %v794 = vunpack.c.h.b16 %v378
        %v795 = vunpack.c.l.b16 %v379
        %v796 = vunpack.c.h.b16 %v379
        %v797 = vunpack.c.l.b16 %v380
        %v798 = vunpack.c.h.b16 %v380
        %v799 = vunpack.c.l.b16 %v381
        %v800 = vunpack.c.h.b16 %v381
        %v801 = vunpack.c.l.b16 %v382
        %v802 = vunpack.c.h.b16 %v382
        %v803 = vunpack.c.l.b16 %v383
        %v804 = vunpack.c.h.b16 %v383
        %v805 = vunpack.c.l.b16 %v384
        %v806 = vunpack.c.h.b16 %v384
        %v807 = vunpack.c.l.b16 %v385
        %v808 = vunpack.c.h.b16 %v385
        %v809 = vunpack.c.l.b16 %v386
        %v810 = vunpack.c.h.b16 %v386
        %v811 = vunpack.c.l.b16 %v387
        %v812 = vunpack.c.h.b16 %v387
        %v813 = vunpack.c.l.b16 %v388
        %v814 = vunpack.c.h.b16 %v388
        %v815 = vunpack.c.l.b16 %v389
        %v816 = vunpack.c.h.b16 %v389
        %v817 = vunpack.c.l.b16 %v390
        %v818 = vunpack.c.h.b16 %v390
        %v819 = vunpack.c.l.b16 %v391
        %v820 = vunpack.c.h.b16 %v391
        %v821 = vunpack.c.l.b16 %v392
        %v822 = vunpack.c.h.b16 %v392
        %v823 = vunpack.c.l.b16 %v393
        %v824 = vunpack.c.h.b16 %v393
        %v825 = vunpack.c.l.b16 %v394
        %v826 = vunpack.c.h.b16 %v394
        %v827 = vunpack.c.l.b16 %v395
        %v828 = vunpack.c.h.b16 %v395
        %v829 = vunpack.c.l.b16 %v396
        %v830 = vunpack.c.h.b16 %v396
        %v831 = vunpack.c.l.b16 %v397
        %v832 = vunpack.c.h.b16 %v397
        %v833 = vunpack.c.l.b16 %v398
        %v834 = vunpack.c.h.b16 %v398
        %v835 = vunpack.c.l.b16 %v399
        %v836 = vunpack.c.h.b16 %v399
        %v837 = vunpack.c.l.b16 %v400
        %v838 = vunpack.c.h.b16 %v400
        %v839 = vunpack.c.l.b16 %v401
        %v840 = vunpack.c.h.b16 %v401
        %v841 = vunpack.c.l.b16 %v402
        %v842 = vunpack.c.h.b16 %v402
        %v843 = vunpack.c.l.b16 %v403
        %v844 = vunpack.c.h.b16 %v403
        %v845 = vunpack.c.l.b16 %v404
        %v846 = vunpack.c.h.b16 %v404
        %v847 = vunpack.c.l.b16 %v405
        %v848 = vunpack.c.h.b16 %v405
        %v849 = vunpack.c.l.b16 %v406
        %v850 = vunpack.c.h.b16 %v406
        %v851 = vunpack.c.l.b16 %v407
        %v852 = vunpack.c.h.b16 %v407
        %v853 = vunpack.c.l.b16 %v408
        %v854 = vunpack.c.h.b16 %v408
        %v855 = vunpack.c.l.b16 %v409
        %v856 = vunpack.c.h.b16 %v409
        %v857 = vunpack.c.l.b16 %v410
        %v858 = vunpack.c.h.b16 %v410
        %v859 = vunpack.c.l.b16 %v411
        %v860 = vunpack.c.h.b16 %v411
        %v861 = vunpack.c.l.b16 %v412
        %v862 = vunpack.c.h.b16 %v412
        %v863 = vunpack.c.l.b16 %v413
        %v864 = vunpack.c.h.b16 %v413
        %v865 = vunpack.c.l.b16 %v414
        %v866 = vunpack.c.h.b16 %v414
        %v867 = vunpack.c.l.b16 %v415
        %v868 = vunpack.c.h.b16 %v415
        %v869 = vunpack.c.l.b16 %v416
        %v870 = vunpack.c.h.b16 %v416
        %v871 = vunpack.c.l.b16 %v417
        %v872 = vunpack.c.h.b16 %v417
        %v873 = vunpack.c.l.b16 %v418
        %v874 = vunpack.c.h.b16 %v418
        %v875 = vunpack.c.l.b16 %v419
        %v876 = vunpack.c.h.b16 %v419
        %v877 = vunpack.c.l.b16 %v420
        %v878 = vunpack.c.h.b16 %v420
        %v879 = vunpack.c.l.b16 %v421
        %v880 = vunpack.c.h.b16 %v421
        %v881 = vunpack.c.l.b16 %v422
        %v882 = vunpack.c.h.b16 %v422
        %v883 = vunpack.c.l.b16 %v423
        %v884 = vunpack.c.h.b16 %v423
        %v885 = vunpack.c.l.b16 %v424
        %v886 = vunpack.c.h.b16 %v424
        %v887 = vunpack.c.l.b16 %v425
        %v888 = vunpack.c.h.b16 %v425
        %v889 = vunpack.c.l.b16 %v426
        %v890 = vunpack.c.h.b16 %v426
        %v891 = vunpack.c.l.b16 %v427
        %v892 = vunpack.c.h.b16 %v427
        %v893 = vunpack.c.l.b16 %v428
        %v894 = vunpack.c.h.b16 %v428
        %v895 = vunpack.c.l.b16 %v429
        %v896 = vunpack.c.h.b16 %v429
        %v897 = vunpack.c.l.b16 %v430
        %v898 = vunpack.c.h.b16 %v430
        %v899 = vunpack.c.l.b16 %v431
        %v900 = vunpack.c.h.b16 %v431
        %v901 = vunpack.c.l.b16 %v432
        %v902 = vunpack.c.h.b16 %v432
        %v903 = vunpack.c.l.b16 %v433
        %v904 = vunpack.c.h.b16 %v433
        %v905 = vunpack.c.l.b16 %v434
        %v906 = vunpack.c.h.b16 %v434
        %v907 = vunpack.c.l.b16 %v435
        %v908 = vunpack.c.h.b16 %v435
        %v909 = vunpack.c.l.b16 %v436
        %v910 = vunpack.c.h.b16 %v436
        %v911 = vunpack.c.l.b16 %v437
        %v912 = vunpack.c.h.b16 %v437
        %v913 = vunpack.c.l.b16 %v438
        %v914 = vunpack.c.h.b16 %v438
        %v915 = vunpack.c.l.b16 %v439
        %v916 = vunpack.c.h.b16 %v439
        %v917 = vunpack.c.l.b16 %v440
        %v918 = vunpack.c.h.b16 %v440
        %v919 = vunpack.c.l.b16 %v441
        %v920 = vunpack.c.h.b16 %v441
        %v921 = vunpack.c.l.b16 %v442
        %v922 = vunpack.c.h.b16 %v442
        %v923 = vpack.c.b16 %v607, %v603
        %v924 = vpack.c.b16 %v608, %v604
        %v925 = vpack.c.b16 %v609, %v605
        %v926 = vpack.c.b16 %v610, %v606
        %v927 = vpack.c.b16 %v615, %v611
        %v928 = vpack.c.b16 %v616, %v612
        %v929 = vpack.c.b16 %v617, %v613
        %v930 = vpack.c.b16 %v618, %v614
        %v931 = vpack.c.b16 %v623, %v619
        %v932 = vpack.c.b16 %v624, %v620
        %v933 = vpack.c.b16 %v625, %v621
        %v934 = vpack.c.b16 %v626, %v622
        %v935 = vpack.c.b16 %v631, %v627
        %v936 = vpack.c.b16 %v632, %v628
        %v937 = vpack.c.b16 %v633, %v629
        %v938 = vpack.c.b16 %v634, %v630
        %v939 = vpack.c.b16 %v639, %v635
        %v940 = vpack.c.b16 %v640, %v636
        %v941 = vpack.c.b16 %v641, %v637
        %v942 = vpack.c.b16 %v642, %v638
        %v943 = vpack.c.b16 %v647, %v643
        %v944 = vpack.c.b16 %v648, %v644
        %v945 = vpack.c.b16 %v649, %v645
        %v946 = vpack.c.b16 %v650, %v646
        %v947 = vpack.c.b16 %v655, %v651
        %v948 = vpack.c.b16 %v656, %v652
        %v949 = vpack.c.b16 %v657, %v653
        %v950 = vpack.c.b16 %v658, %v654
        %v951 = vpack.c.b16 %v663, %v659
        %v952 = vpack.c.b16 %v664, %v660
        %v953 = vpack.c.b16 %v665, %v661
        %v954 = vpack.c.b16 %v666, %v662
        %v955 = vpack.c.b16 %v671, %v667
        %v956 = vpack.c.b16 %v672, %v668
        %v957 = vpack.c.b16 %v673, %v669
        %v958 = vpack.c.b16 %v674, %v670
        %v959 = vpack.c.b16 %v679, %v675
        %v960 = vpack.c.b16 %v680, %v676
        %v961 = vpack.c.b16 %v681, %v677
        %v962 = vpack.c.b16 %v682, %v678
        %v963 = vpack.c.b16 %v687, %v683
        %v964 = vpack.c.b16 %v688, %v684
        %v965 = vpack.c.b16 %v689, %v685
        %v966 = vpack.c.b16 %v690, %v686
        %v967 = vpack.c.b16 %v695, %v691
        %v968 = vpack.c.b16 %v696, %v692
        %v969 = vpack.c.b16 %v697, %v693
        %v970 = vpack.c.b16 %v698, %v694
        %v971 = vpack.c.b16 %v703, %v699
        %v972 = vpack.c.b16 %v704, %v700
        %v973 = vpack.c.b16 %v705, %v701
        %v974 = vpack.c.b16 %v706, %v702
        %v975 = vpack.c.b16 %v711, %v707
        %v976 = vpack.c.b16 %v712, %v708
        %v977 = vpack.c.b16 %v713, %v709
        %v978 = vpack.c.b16 %v714, %v710
        %v979 = vpack.c.b16 %v719, %v715
        %v980 = vpack.c.b16 %v720, %v716
        %v981 = vpack.c.b16 %v721, %v717
        %v982 = vpack.c.b16 %v722, %v718
        %v983 = vpack.c.b16 %v727, %v723
        %v984 = vpack.c.b16 %v728, %v724
        %v985 = vpack.c.b16 %v729, %v725
        %v986 = vpack.c.b16 %v730, %v726
        %v987 = vpack.c.b16 %v735, %v731
        %v988 = vpack.c.b16 %v736, %v732
        %v989 = vpack.c.b16 %v737, %v733
        %v990 = vpack.c.b16 %v738, %v734
        %v991 = vpack.c.b16 %v743, %v739
        %v992 = vpack.c.b16 %v744, %v740
        %v993 = vpack.c.b16 %v745, %v741
        %v994 = vpack.c.b16 %v746, %v742
        %v995 = vpack.c.b16 %v751, %v747
        %v996 = vpack.c.b16 %v752, %v748
        %v997 = vpack.c.b16 %v753, %v749
        %v998 = vpack.c.b16 %v754, %v750
        %v999 = vpack.c.b16 %v759, %v755
        %v1000 = vpack.c.b16 %v760, %v756
        %v1001 = vpack.c.b16 %v761, %v757
        %v1002 = vpack.c.b16 %v762, %v758
        %v1003 = vpack.c.b16 %v767, %v763
        %v1004 = vpack.c.b16 %v768, %v764
        %v1005 = vpack.c.b16 %v769, %v765
        %v1006 = vpack.c.b16 %v770, %v766
        %v1007 = vpack.c.b16 %v775, %v771
        %v1008 = vpack.c.b16 %v776, %v772
        %v1009 = vpack.c.b16 %v777, %v773
        %v1010 = vpack.c.b16 %v778, %v774
        %v1011 = vpack.c.b16 %v783, %v779
        %v1012 = vpack.c.b16 %v784, %v780
        %v1013 = vpack.c.b16 %v785, %v781
        %v1014 = vpack.c.b16 %v786, %v782
        %v1015 = vpack.c.b16 %v791, %v787
        %v1016 = vpack.c.b16 %v792, %v788
        %v1017 = vpack.c.b16 %v793, %v789
        %v1018 = vpack.c.b16 %v794, %v790
        %v1019 = vpack.c.b16 %v799, %v795
        %v1020 = vpack.c.b16 %v800, %v796
        %v1021 = vpack.c.b16 %v801, %v797
        %v1022 = vpack.c.b16 %v802, %v798
        %v1023 = vpack.c.b16 %v807, %v803
        %v1024 = vpack.c.b16 %v808, %v804
        %v1025 = vpack.c.b16 %v809, %v805
        %v1026 = vpack.c.b16 %v810, %v806
        %v1027 = vpack.c.b16 %v815, %v811
        %v1028 = vpack.c.b16 %v816, %v812
        %v1029 = vpack.c.b16 %v817, %v813
        %v1030 = vpack.c.b16 %v818, %v814
        %v1031 = vpack.c.b16 %v823, %v819
        %v1032 = vpack.c.b16 %v824, %v820
        %v1033 = vpack.c.b16 %v825, %v821
        %v1034 = vpack.c.b16 %v826, %v822
        %v1035 = vpack.c.b16 %v831, %v827
        %v1036 = vpack.c.b16 %v832, %v828
        %v1037 = vpack.c.b16 %v833, %v829
        %v1038 = vpack.c.b16 %v834, %v830
        %v1039 = vpack.c.b16 %v839, %v835
        %v1040 = vpack.c.b16 %v840, %v836
        %v1041 = vpack.c.b16 %v841, %v837
        %v1042 = vpack.c.b16 %v842, %v838
        %v1043 = vpack.c.b16 %v847, %v843
        %v1044 = vpack.c.b16 %v848, %v844
        %v1045 = vpack.c.b16 %v849, %v845
        %v1046 = vpack.c.b16 %v850, %v846
        %v1047 = vpack.c.b16 %v855, %v851
        %v1048 = vpack.c.b16 %v856, %v852
        %v1049 = vpack.c.b16 %v857, %v853
        %v1050 = vpack.c.b16 %v858, %v854
        %v1051 = vpack.c.b16 %v863, %v859
        %v1052 = vpack.c.b16 %v864, %v860
        %v1053 = vpack.c.b16 %v865, %v861
        %v1054 = vpack.c.b16 %v866, %v862
        %v1055 = vpack.c.b16 %v871, %v867
        %v1056 = vpack.c.b16 %v872, %v868
        %v1057 = vpack.c.b16 %v873, %v869
        %v1058 = vpack.c.b16 %v874, %v870
        %v1059 = vpack.c.b16 %v879, %v875
        %v1060 = vpack.c.b16 %v880, %v876
        %v1061 = vpack.c.b16 %v881, %v877
        %v1062 = vpack.c.b16 %v882, %v878
        %v1063 = vpack.c.b16 %v887, %v883
        %v1064 = vpack.c.b16 %v888, %v884
        %v1065 = vpack.c.b16 %v889, %v885
        %v1066 = vpack.c.b16 %v890, %v886
        %v1067 = vpack.c.b16 %v895, %v891
        %v1068 = vpack.c.b16 %v896, %v892
        %v1069 = vpack.c.b16 %v897, %v893
        %v1070 = vpack.c.b16 %v898, %v894
        %v1071 = vpack.c.b16 %v903, %v899
        %v1072 = vpack.c.b16 %v904, %v900
        %v1073 = vpack.c.b16 %v905, %v901
        %v1074 = vpack.c.b16 %v906, %v902
        %v1075 = vpack.c.b16 %v911, %v907
        %v1076 = vpack.c.b16 %v912, %v908
        %v1077 = vpack.c.b16 %v913, %v909
        %v1078 = vpack.c.b16 %v914, %v910
        %v1079 = vpack.c.b16 %v919, %v915
        %v1080 = vpack.c.b16 %v920, %v916
        %v1081 = vpack.c.b16 %v921, %v917
        %v1082 = vpack.c.b16 %v922, %v918
        %1243 = vmatprep.subr.bf16.mxu0 %v924
        %1244 = vmatpush1.bf16.msra.mxu0 %v923
        %1245 = vmatprep.subr.bf16.mxu0 %v928
        %1246 = vmatpush1.bf16.msra.mxu0 %v927
        %1247 = vmatprep.subr.bf16.mxu0 %v932
        %1248 = vmatpush1.bf16.msra.mxu0 %v931
        %1249 = vmatprep.subr.bf16.mxu0 %v936
        %1250 = vmatpush1.bf16.msra.mxu0 %v935
        %1251 = vmatprep.subr.bf16.mxu0 %v940
        %1252 = vmatpush1.bf16.msra.mxu0 %v939
        %1253 = vmatprep.subr.bf16.mxu0 %v944
        %1254 = vmatpush1.bf16.msra.mxu0 %v943
        %1255 = vmatprep.subr.bf16.mxu0 %v948
        %1256 = vmatpush1.bf16.msra.mxu0 %v947
        %1257 = vmatprep.subr.bf16.mxu0 %v952
        %1258 = vmatpush1.bf16.msra.mxu0 %v951
        %1259 = vmatprep.subr.bf16.mxu0 %v956
        %1260 = vmatpush1.bf16.msra.mxu0 %v955
        %1261 = vmatprep.subr.bf16.mxu0 %v960
        %1262 = vmatpush1.bf16.msra.mxu0 %v959
        %1263 = vmatprep.subr.bf16.mxu0 %v964
        %1264 = vmatpush1.bf16.msra.mxu0 %v963
        %1265 = vmatprep.subr.bf16.mxu0 %v968
        %1266 = vmatpush1.bf16.msra.mxu0 %v967
        %1267 = vmatprep.subr.bf16.mxu0 %v972
        %1268 = vmatpush1.bf16.msra.mxu0 %v971
        %1269 = vmatprep.subr.bf16.mxu0 %v976
        %1270 = vmatpush1.bf16.msra.mxu0 %v975
        %1271 = vmatprep.subr.bf16.mxu0 %v980
        %1272 = vmatpush1.bf16.msra.mxu0 %v979
        %1273 = vmatprep.subr.bf16.mxu0 %v984
        %1274 = vmatpush1.bf16.msra.mxu0 %v983
        %1275 = vmatprep.mubr.bf16.mxu0 %v279
        %1276 = vmatmul.mubr.bf16.gmra.mrb[0].mxu0 %v278
        %v1277 = vpop.f32.mrb[0].mxu0
        %v1278 = vadd.f32 0.0, %v1277
        %v1279 = vpop.f32.mrb[0].mxu0
        %v1280 = vadd.f32 0.0, %v1279
        %v1281 = vpop.f32.mrb[0].mxu0
        %v1282 = vpop.f32.mrb[0].mxu0
        %1283 = vdwg.mxu0
        %1284 = vmatprep.subr.bf16.mxu0 %v988
        %1285 = vmatpush1.bf16.msra.mxu0 %v987
        %1286 = vmatprep.subr.bf16.mxu0 %v992
        %1287 = vmatpush1.bf16.msra.mxu0 %v991
        %1288 = vmatprep.subr.bf16.mxu0 %v996
        %1289 = vmatpush1.bf16.msra.mxu0 %v995
        %1290 = vmatprep.subr.bf16.mxu0 %v1000
        %1291 = vmatpush1.bf16.msra.mxu0 %v999
        %1292 = vmatprep.subr.bf16.mxu0 %v1004
        %1293 = vmatpush1.bf16.msra.mxu0 %v1003
        %1294 = vmatprep.subr.bf16.mxu0 %v1008
        %1295 = vmatpush1.bf16.msra.mxu0 %v1007
        %1296 = vmatprep.subr.bf16.mxu0 %v1012
        %1297 = vmatpush1.bf16.msra.mxu0 %v1011
        %1298 = vmatprep.subr.bf16.mxu0 %v1016
        %1299 = vmatpush1.bf16.msra.mxu0 %v1015
        %1300 = vmatprep.subr.bf16.mxu0 %v1020
        %1301 = vmatpush1.bf16.msra.mxu0 %v1019
        %1302 = vmatprep.subr.bf16.mxu0 %v1024
        %1303 = vmatpush1.bf16.msra.mxu0 %v1023
        %1304 = vmatprep.subr.bf16.mxu0 %v1028
        %1305 = vmatpush1.bf16.msra.mxu0 %v1027
        %1306 = vmatprep.subr.bf16.mxu0 %v1032
        %1307 = vmatpush1.bf16.msra.mxu0 %v1031
        %1308 = vmatprep.subr.bf16.mxu0 %v1036
        %1309 = vmatpush1.bf16.msra.mxu0 %v1035
        %1310 = vmatprep.subr.bf16.mxu0 %v1040
        %1311 = vmatpush1.bf16.msra.mxu0 %v1039
        %1312 = vmatprep.subr.bf16.mxu0 %v1044
        %1313 = vmatpush1.bf16.msra.mxu0 %v1043
        %1314 = vmatprep.subr.bf16.mxu0 %v1048
        %1315 = vmatpush1.bf16.msra.mxu0 %v1047
        %1316 = vmatprep.mubr.bf16.mxu0 %v281
        %1317 = vmatmul.mubr.bf16.gmra.mrb[0].mxu0 %v280
        %v1318 = vpop.f32.mrb[0].mxu0
        %v1319 = vadd.f32 %v1278, %v1318
        %v1320 = vpop.f32.mrb[0].mxu0
        %v1321 = vadd.f32 %v1280, %v1320
        %v1322 = vpop.f32.mrb[0].mxu0
        %v1323 = vpop.f32.mrb[0].mxu0
        %1324 = vdwg.mxu0
        %1325 = vmatprep.subr.bf16.mxu0 %v1052
        %1326 = vmatpush1.bf16.msra.mxu0 %v1051
        %1327 = vmatprep.subr.bf16.mxu0 %v1056
        %1328 = vmatpush1.bf16.msra.mxu0 %v1055
        %1329 = vmatprep.subr.bf16.mxu0 %v1060
        %1330 = vmatpush1.bf16.msra.mxu0 %v1059
        %1331 = vmatprep.subr.bf16.mxu0 %v1064
        %1332 = vmatpush1.bf16.msra.mxu0 %v1063
        %1333 = vmatprep.subr.bf16.mxu0 %v1068
        %1334 = vmatpush1.bf16.msra.mxu0 %v1067
        %1335 = vmatprep.subr.bf16.mxu0 %v1072
        %1336 = vmatpush1.bf16.msra.mxu0 %v1071
        %1337 = vmatprep.subr.bf16.mxu0 %v1076
        %1338 = vmatpush1.bf16.msra.mxu0 %v1075
        %1339 = vmatprep.subr.bf16.mxu0 %v1080
        %1340 = vmatpush1.bf16.msra.mxu0 %v1079
        %1341 = vmatprep.subr.bf16.mxu0 0
        %1342 = vmatpush1.bf16.msra.mxu0 0
        %1343 = vmatprep.subr.bf16.mxu0 0
        %1344 = vmatpush1.bf16.msra.mxu0 0
        %1345 = vmatprep.subr.bf16.mxu0 0
        %1346 = vmatpush1.bf16.msra.mxu0 0
        %1347 = vmatprep.subr.bf16.mxu0 0
        %1348 = vmatpush1.bf16.msra.mxu0 0
        %1349 = vmatprep.subr.bf16.mxu0 0
        %1350 = vmatpush1.bf16.msra.mxu0 0
        %1351 = vmatprep.subr.bf16.mxu0 0
        %1352 = vmatpush1.bf16.msra.mxu0 0
        %1353 = vmatprep.subr.bf16.mxu0 0
        %1354 = vmatpush1.bf16.msra.mxu0 0
        %1355 = vmatprep.subr.bf16.mxu0 0
        %1356 = vmatpush1.bf16.msra.mxu0 0
        %1357 = vmatprep.mubr.bf16.mxu0 0
        %1358 = vmatmul.mubr.bf16.gmra.mrb[0].mxu0 %v282
        %v1359 = vpop.f32.mrb[0].mxu0
        %v1360 = vadd.f32 %v1319, %v1359
        %v1361 = vpop.f32.mrb[0].mxu0
        %v1362 = vadd.f32 %v1321, %v1361
        %v1363 = vpop.f32.mrb[0].mxu0
        %v1364 = vpop.f32.mrb[0].mxu0
        %1365 = vdwg.mxu0
        %1366 = vmatprep.subr.bf16.mxu0 %v926
        %1367 = vmatpush1.bf16.msra.mxu0 %v925
        %1368 = vmatprep.subr.bf16.mxu0 %v930
        %1369 = vmatpush1.bf16.msra.mxu0 %v929
        %1370 = vmatprep.subr.bf16.mxu0 %v934
        %1371 = vmatpush1.bf16.msra.mxu0 %v933
        %1372 = vmatprep.subr.bf16.mxu0 %v938
        %1373 = vmatpush1.bf16.msra.mxu0 %v937
        %1374 = vmatprep.subr.bf16.mxu0 %v942
        %1375 = vmatpush1.bf16.msra.mxu0 %v941
        %1376 = vmatprep.subr.bf16.mxu0 %v946
        %1377 = vmatpush1.bf16.msra.mxu0 %v945
        %1378 = vmatprep.subr.bf16.mxu0 %v950
        %1379 = vmatpush1.bf16.msra.mxu0 %v949
        %1380 = vmatprep.subr.bf16.mxu0 %v954
        %1381 = vmatpush1.bf16.msra.mxu0 %v953
        %1382 = vmatprep.subr.bf16.mxu0 %v958
        %1383 = vmatpush1.bf16.msra.mxu0 %v957
        %1384 = vmatprep.subr.bf16.mxu0 %v962
        %1385 = vmatpush1.bf16.msra.mxu0 %v961
        %1386 = vmatprep.subr.bf16.mxu0 %v966
        %1387 = vmatpush1.bf16.msra.mxu0 %v965
        %1388 = vmatprep.subr.bf16.mxu0 %v970
        %1389 = vmatpush1.bf16.msra.mxu0 %v969
        %1390 = vmatprep.subr.bf16.mxu0 %v974
        %1391 = vmatpush1.bf16.msra.mxu0 %v973
        %1392 = vmatprep.subr.bf16.mxu0 %v978
        %1393 = vmatpush1.bf16.msra.mxu0 %v977
        %1394 = vmatprep.subr.bf16.mxu0 %v982
        %1395 = vmatpush1.bf16.msra.mxu0 %v981
        %1396 = vmatprep.subr.bf16.mxu0 %v986
        %1397 = vmatpush1.bf16.msra.mxu0 %v985
        %1398 = vmatprep.mubr.bf16.mxu0 %v279
        %1399 = vmatmul.mubr.bf16.gmra.mrb[0].mxu0 %v278
        %v1400 = vpop.f32.mrb[0].mxu0
        %v1401 = vadd.f32 0.0, %v1400
        %v1402 = vpop.f32.mrb[0].mxu0
        %v1403 = vadd.f32 0.0, %v1402
        %v1404 = vpop.f32.mrb[0].mxu0
        %v1405 = vpop.f32.mrb[0].mxu0
        %1406 = vdwg.mxu0
        %1407 = vmatprep.subr.bf16.mxu0 %v990
        %1408 = vmatpush1.bf16.msra.mxu0 %v989
        %1409 = vmatprep.subr.bf16.mxu0 %v994
        %1410 = vmatpush1.bf16.msra.mxu0 %v993
        %1411 = vmatprep.subr.bf16.mxu0 %v998
        %1412 = vmatpush1.bf16.msra.mxu0 %v997
        %1413 = vmatprep.subr.bf16.mxu0 %v1002
        %1414 = vmatpush1.bf16.msra.mxu0 %v1001
        %1415 = vmatprep.subr.bf16.mxu0 %v1006
        %1416 = vmatpush1.bf16.msra.mxu0 %v1005
        %1417 = vmatprep.subr.bf16.mxu0 %v1010
        %1418 = vmatpush1.bf16.msra.mxu0 %v1009
        %1419 = vmatprep.subr.bf16.mxu0 %v1014
        %1420 = vmatpush1.bf16.msra.mxu0 %v1013
        %1421 = vmatprep.subr.bf16.mxu0 %v1018
        %1422 = vmatpush1.bf16.msra.mxu0 %v1017
        %1423 = vmatprep.subr.bf16.mxu0 %v1022
        %1424 = vmatpush1.bf16.msra.mxu0 %v1021
        %1425 = vmatprep.subr.bf16.mxu0 %v1026
        %1426 = vmatpush1.bf16.msra.mxu0 %v1025
        %1427 = vmatprep.subr.bf16.mxu0 %v1030
        %1428 = vmatpush1.bf16.msra.mxu0 %v1029
        %1429 = vmatprep.subr.bf16.mxu0 %v1034
        %1430 = vmatpush1.bf16.msra.mxu0 %v1033
        %1431 = vmatprep.subr.bf16.mxu0 %v1038
        %1432 = vmatpush1.bf16.msra.mxu0 %v1037
        %1433 = vmatprep.subr.bf16.mxu0 %v1042
        %1434 = vmatpush1.bf16.msra.mxu0 %v1041
        %1435 = vmatprep.subr.bf16.mxu0 %v1046
        %1436 = vmatpush1.bf16.msra.mxu0 %v1045
        %1437 = vmatprep.subr.bf16.mxu0 %v1050
        %1438 = vmatpush1.bf16.msra.mxu0 %v1049
        %1439 = vmatprep.mubr.bf16.mxu0 %v281
        %1440 = vmatmul.mubr.bf16.gmra.mrb[0].mxu0 %v280
        %v1441 = vpop.f32.mrb[0].mxu0
        %v1442 = vadd.f32 %v1401, %v1441
        %v1443 = vpop.f32.mrb[0].mxu0
        %v1444 = vadd.f32 %v1403, %v1443
        %v1445 = vpop.f32.mrb[0].mxu0
        %v1446 = vpop.f32.mrb[0].mxu0
        %1447 = vdwg.mxu0
        %1448 = vmatprep.subr.bf16.mxu0 %v1054
        %1449 = vmatpush1.bf16.msra.mxu0 %v1053
        %1450 = vmatprep.subr.bf16.mxu0 %v1058
        %1451 = vmatpush1.bf16.msra.mxu0 %v1057
        %1452 = vmatprep.subr.bf16.mxu0 %v1062
        %1453 = vmatpush1.bf16.msra.mxu0 %v1061
        %1454 = vmatprep.subr.bf16.mxu0 %v1066
        %1455 = vmatpush1.bf16.msra.mxu0 %v1065
        %1456 = vmatprep.subr.bf16.mxu0 %v1070
        %1457 = vmatpush1.bf16.msra.mxu0 %v1069
        %1458 = vmatprep.subr.bf16.mxu0 %v1074
        %1459 = vmatpush1.bf16.msra.mxu0 %v1073
        %1460 = vmatprep.subr.bf16.mxu0 %v1078
        %1461 = vmatpush1.bf16.msra.mxu0 %v1077
        %1462 = vmatprep.subr.bf16.mxu0 %v1082
        %1463 = vmatpush1.bf16.msra.mxu0 %v1081
        %1464 = vmatprep.subr.bf16.mxu0 0
        %1465 = vmatpush1.bf16.msra.mxu0 0
        %1466 = vmatprep.subr.bf16.mxu0 0
        %1467 = vmatpush1.bf16.msra.mxu0 0
        %1468 = vmatprep.subr.bf16.mxu0 0
        %1469 = vmatpush1.bf16.msra.mxu0 0
        %1470 = vmatprep.subr.bf16.mxu0 0
        %1471 = vmatpush1.bf16.msra.mxu0 0
        %1472 = vmatprep.subr.bf16.mxu0 0
        %1473 = vmatpush1.bf16.msra.mxu0 0
        %1474 = vmatprep.subr.bf16.mxu0 0
        %1475 = vmatpush1.bf16.msra.mxu0 0
        %1476 = vmatprep.subr.bf16.mxu0 0
        %1477 = vmatpush1.bf16.msra.mxu0 0
        %1478 = vmatprep.subr.bf16.mxu0 0
        %1479 = vmatpush1.bf16.msra.mxu0 0
        %1480 = vmatprep.mubr.bf16.mxu0 0
        %1481 = vmatmul.mubr.bf16.gmra.mrb[0].mxu0 %v282
        %v1482 = vpop.f32.mrb[0].mxu0
        %v1483 = vadd.f32 %v1442, %v1482
        %v1484 = vpop.f32.mrb[0].mxu0
        %v1485 = vadd.f32 %v1444, %v1484
        %v1486 = vpop.f32.mrb[0].mxu0
        %v1487 = vpop.f32.mrb[0].mxu0
        %1488 = vdwg.mxu0
        %v1493 = vcombine.low %v1360, %v1362
        %v1494 = vcombine.low %v1483, %v1485
        %v1496 = vunpack.c.l.s4 1983009808
        %v1497 = vunpack.c.0.s8 %v1496
        %v1498 = vlaneseq
        %v1499 = vshrl.u32 %v1498, 7
        %v1500 = vsub.s32 %v1497, %v1499
        %v1501 = vrot.slane %v1493, %v1500
        %v1503 = vunpack.c.l.s4 1983009808
        %v1504 = vunpack.c.0.s8 %v1503
        %v1505 = vlaneseq
        %v1506 = vshrl.u32 %v1505, 7
        %v1507 = vsub.s32 %v1504, %v1506
        %v1508 = vrot.slane %v1494, %v1507
        %v1509 = vcombine.low %v1501, %v1508
        %v1511 = vadd.f32 %v244, %v1509
        %1512 = vst [vmem:[#allocation2] sm:$0xff] %v1511
        %p1513 = scmp.eq.s32.totalorder %s17, 4
        // Predicated region
        $region45: #{dqn_forward.7} parent=39 // pred_check
          %p1514 = pneg %p1513
        $region46: #{dqn_forward.7} parent=39 // pred_check_branch
          %1516 = sbr.rel (%p1514) target = $region48
        $region47: #{dqn_forward.7} parent=39 // pred_region
          %v1517 = vld [vmem:[#allocation2] sm:$0xff]
          %v1518 = vld [vmem:[%s2] sm:$0xf]
          %v1520 = vlaneseq
          %v1521 = vshrl.u32 %v1520, 7
          %v1522 = vsub.s32 0, %v1521
          %v1523 = vrot.slane %v1518, %v1522
          %v1524 = vlaneseq
          %v1525 = vshrl.u32 %v1524, 7
          %v1526 = vsub.s32 1, %v1525
          %v1527 = vrot.slane %v1518, %v1526
          %v1528 = vlaneseq
          %v1529 = vshrl.u32 %v1528, 7
          %v1530 = vsub.s32 2, %v1529
          %v1531 = vrot.slane %v1518, %v1530
          %v1532 = vlaneseq
          %v1533 = vshrl.u32 %v1532, 7
          %v1534 = vsub.s32 3, %v1533
          %v1535 = vrot.slane %v1518, %v1534
          %v1536 = vcombine.low %v1523, %v1527
          %v1537 = vcombine.low %v1531, %v1535
          %v1539 = vunpack.c.l.s4 1983009808
          %v1540 = vunpack.c.0.s8 %v1539
          %v1541 = vlaneseq
          %v1542 = vshrl.u32 %v1541, 7
          %v1543 = vsub.s32 %v1540, %v1542
          %v1544 = vrot.slane %v1536, %v1543
          %v1546 = vunpack.c.l.s4 1983009808
          %v1547 = vunpack.c.0.s8 %v1546
          %v1548 = vlaneseq
          %v1549 = vshrl.u32 %v1548, 7
          %v1550 = vsub.s32 %v1547, %v1549
          %v1551 = vrot.slane %v1537, %v1550
          %v1552 = vcombine.low %v1544, %v1551
          %v1554 = vadd.f32 %v1517, %v1552
          %v1555 = vmax.f32 %v1554, 0.0
          %v1557 = vcombine.high %v1555, %v1555
          %v1559 = vunpack.c.l.s4 1983009808
          %v1560 = vunpack.c.0.s8 %v1559
          %v1561 = vlaneseq
          %v1562 = vshrl.u32 %v1561, 7
          %v1563 = vsub.s32 %v1560, %v1562
          %v1564 = vrot.slane %v1555, %v1563
          %v1566 = vunpack.c.l.s4 1983009808
          %v1567 = vunpack.c.0.s8 %v1566
          %v1568 = vlaneseq
          %v1569 = vshrl.u32 %v1568, 7
          %v1570 = vsub.s32 %v1567, %v1569
          %v1571 = vrot.slane %v1557, %v1570
          %v1572 = vcombine.high %v1564, %v1564
          %v1573 = vcombine.high %v1571, %v1571
          %v1578 = vpack.c.bf16 %v1564, %v1564
          %v1579 = vpack.c.bf16 %v1572, %v1572
          %v1580 = vpack.c.bf16 %v1571, %v1571
          %v1581 = vpack.c.bf16 %v1573, %v1573
          %v1582 = vld [vmem:[%s3] sm:$0xf]
          %v1583 = vld [vmem:[%s3 + $0x4] sm:$0xf]
          %v1584 = vld [vmem:[%s3 + $0x8] sm:$0xf]
          %v1585 = vld [vmem:[%s3 + $0xc] sm:$0xf]
          %v1586 = vld [vmem:[%s3 + $0x10] sm:$0xf]
          %v1587 = vld [vmem:[%s3 + $0x14] sm:$0xf]
          %v1588 = vld [vmem:[%s3 + $0x18] sm:$0xf]
          %v1589 = vld [vmem:[%s3 + $0x1c] sm:$0xf]
          %v1590 = vld [vmem:[%s3 + $0x20] sm:$0xf]
          %v1591 = vld [vmem:[%s3 + $0x24] sm:$0xf]
          %v1592 = vld [vmem:[%s3 + $0x28] sm:$0xf]
          %v1593 = vld [vmem:[%s3 + $0x2c] sm:$0xf]
          %v1594 = vld [vmem:[%s3 + $0x30] sm:$0xf]
          %v1595 = vld [vmem:[%s3 + $0x34] sm:$0xf]
          %v1596 = vld [vmem:[%s3 + $0x38] sm:$0xf]
          %v1597 = vld [vmem:[%s3 + $0x3c] sm:$0xf]
          %v1598 = vld [vmem:[%s3 + $0x40] sm:$0xf]
          %v1599 = vld [vmem:[%s3 + $0x44] sm:$0xf]
          %v1600 = vld [vmem:[%s3 + $0x48] sm:$0xf]
          %v1601 = vld [vmem:[%s3 + $0x4c] sm:$0xf]
          %v1602 = vld [vmem:[%s3 + $0x50] sm:$0xf]
          %v1603 = vld [vmem:[%s3 + $0x54] sm:$0xf]
          %v1604 = vld [vmem:[%s3 + $0x58] sm:$0xf]
          %v1605 = vld [vmem:[%s3 + $0x5c] sm:$0xf]
          %v1606 = vld [vmem:[%s3 + $0x60] sm:$0xf]
          %v1607 = vld [vmem:[%s3 + $0x64] sm:$0xf]
          %v1608 = vld [vmem:[%s3 + $0x68] sm:$0xf]
          %v1609 = vld [vmem:[%s3 + $0x6c] sm:$0xf]
          %v1610 = vld [vmem:[%s3 + $0x70] sm:$0xf]
          %v1611 = vld [vmem:[%s3 + $0x74] sm:$0xf]
          %v1612 = vld [vmem:[%s3 + $0x78] sm:$0xf]
          %v1613 = vld [vmem:[%s3 + $0x7c] sm:$0xf]
          %v1614 = vld [vmem:[%s3 + $0x80] sm:$0xf]
          %v1615 = vld [vmem:[%s3 + $0x84] sm:$0xf]
          %v1616 = vld [vmem:[%s3 + $0x88] sm:$0xf]
          %v1617 = vld [vmem:[%s3 + $0x8c] sm:$0xf]
          %v1618 = vld [vmem:[%s3 + $0x90] sm:$0xf]
          %v1619 = vld [vmem:[%s3 + $0x94] sm:$0xf]
          %v1620 = vld [vmem:[%s3 + $0x98] sm:$0xf]
          %v1621 = vld [vmem:[%s3 + $0x9c] sm:$0xf]
          %v1622 = vld [vmem:[%s3 + $0xa0] sm:$0xf]
          %v1623 = vld [vmem:[%s3 + $0xa4] sm:$0xf]
          %v1624 = vld [vmem:[%s3 + $0xa8] sm:$0xf]
          %v1625 = vld [vmem:[%s3 + $0xac] sm:$0xf]
          %v1626 = vld [vmem:[%s3 + $0xb0] sm:$0xf]
          %v1627 = vld [vmem:[%s3 + $0xb4] sm:$0xf]
          %v1628 = vld [vmem:[%s3 + $0xb8] sm:$0xf]
          %v1629 = vld [vmem:[%s3 + $0xbc] sm:$0xf]
          %v1630 = vld [vmem:[%s3 + $0xc0] sm:$0xf]
          %v1631 = vld [vmem:[%s3 + $0xc4] sm:$0xf]
          %v1632 = vld [vmem:[%s3 + $0xc8] sm:$0xf]
          %v1633 = vld [vmem:[%s3 + $0xcc] sm:$0xf]
          %v1634 = vld [vmem:[%s3 + $0xd0] sm:$0xf]
          %v1635 = vld [vmem:[%s3 + $0xd4] sm:$0xf]
          %v1636 = vld [vmem:[%s3 + $0xd8] sm:$0xf]
          %v1637 = vld [vmem:[%s3 + $0xdc] sm:$0xf]
          %v1638 = vld [vmem:[%s3 + $0xe0] sm:$0xf]
          %v1639 = vld [vmem:[%s3 + $0xe4] sm:$0xf]
          %v1640 = vld [vmem:[%s3 + $0xe8] sm:$0xf]
          %v1641 = vld [vmem:[%s3 + $0xec] sm:$0xf]
          %v1642 = vld [vmem:[%s3 + $0xf0] sm:$0xf]
          %v1643 = vld [vmem:[%s3 + $0xf4] sm:$0xf]
          %v1644 = vld [vmem:[%s3 + $0xf8] sm:$0xf]
          %v1645 = vld [vmem:[%s3 + $0xfc] sm:$0xf]
          %v1646 = vld [vmem:[%s4] sm:$0x1]
          %v1648 = vlaneseq
          %v1649 = vshrl.u32 %v1648, 7
          %v1650 = vsub.s32 0, %v1649
          %v1651 = vrot.slane %v1646, %v1650
          %v1717 = vunpack.c.l.b16 %v1582
          %v1718 = vunpack.c.l.b16 %v1583
          %v1719 = vunpack.c.l.b16 %v1584
          %v1720 = vunpack.c.l.b16 %v1585
          %v1721 = vunpack.c.l.b16 %v1586
          %v1722 = vunpack.c.l.b16 %v1587
          %v1723 = vunpack.c.l.b16 %v1588
          %v1724 = vunpack.c.l.b16 %v1589
          %v1725 = vunpack.c.l.b16 %v1590
          %v1726 = vunpack.c.l.b16 %v1591
          %v1727 = vunpack.c.l.b16 %v1592
          %v1728 = vunpack.c.l.b16 %v1593
          %v1729 = vunpack.c.l.b16 %v1594
          %v1730 = vunpack.c.l.b16 %v1595
          %v1731 = vunpack.c.l.b16 %v1596
          %v1732 = vunpack.c.l.b16 %v1597
          %v1733 = vunpack.c.l.b16 %v1598
          %v1734 = vunpack.c.l.b16 %v1599
          %v1735 = vunpack.c.l.b16 %v1600
          %v1736 = vunpack.c.l.b16 %v1601
          %v1737 = vunpack.c.l.b16 %v1602
          %v1738 = vunpack.c.l.b16 %v1603
          %v1739 = vunpack.c.l.b16 %v1604
          %v1740 = vunpack.c.l.b16 %v1605
          %v1741 = vunpack.c.l.b16 %v1606
          %v1742 = vunpack.c.l.b16 %v1607
          %v1743 = vunpack.c.l.b16 %v1608
          %v1744 = vunpack.c.l.b16 %v1609
          %v1745 = vunpack.c.l.b16 %v1610
          %v1746 = vunpack.c.l.b16 %v1611
          %v1747 = vunpack.c.l.b16 %v1612
          %v1748 = vunpack.c.l.b16 %v1613
          %v1749 = vunpack.c.l.b16 %v1614
          %v1750 = vunpack.c.l.b16 %v1615
          %v1751 = vunpack.c.l.b16 %v1616
          %v1752 = vunpack.c.l.b16 %v1617
          %v1753 = vunpack.c.l.b16 %v1618
          %v1754 = vunpack.c.l.b16 %v1619
          %v1755 = vunpack.c.l.b16 %v1620
          %v1756 = vunpack.c.l.b16 %v1621
          %v1757 = vunpack.c.l.b16 %v1622
          %v1758 = vunpack.c.l.b16 %v1623
          %v1759 = vunpack.c.l.b16 %v1624
          %v1760 = vunpack.c.l.b16 %v1625
          %v1761 = vunpack.c.l.b16 %v1626
          %v1762 = vunpack.c.l.b16 %v1627
          %v1763 = vunpack.c.l.b16 %v1628
          %v1764 = vunpack.c.l.b16 %v1629
          %v1765 = vunpack.c.l.b16 %v1630
          %v1766 = vunpack.c.l.b16 %v1631
          %v1767 = vunpack.c.l.b16 %v1632
          %v1768 = vunpack.c.l.b16 %v1633
          %v1769 = vunpack.c.l.b16 %v1634
          %v1770 = vunpack.c.l.b16 %v1635
          %v1771 = vunpack.c.l.b16 %v1636
          %v1772 = vunpack.c.l.b16 %v1637
          %v1773 = vunpack.c.l.b16 %v1638
          %v1774 = vunpack.c.l.b16 %v1639
          %v1775 = vunpack.c.l.b16 %v1640
          %v1776 = vunpack.c.l.b16 %v1641
          %v1777 = vunpack.c.l.b16 %v1642
          %v1778 = vunpack.c.l.b16 %v1643
          %v1779 = vunpack.c.l.b16 %v1644
          %v1780 = vunpack.c.l.b16 %v1645
          %v1781 = vpack.c.b16 %v1718, %v1717
          %v1782 = vpack.c.b16 %v1720, %v1719
          %v1783 = vpack.c.b16 %v1722, %v1721
          %v1784 = vpack.c.b16 %v1724, %v1723
          %v1785 = vpack.c.b16 %v1726, %v1725
          %v1786 = vpack.c.b16 %v1728, %v1727
          %v1787 = vpack.c.b16 %v1730, %v1729
          %v1788 = vpack.c.b16 %v1732, %v1731
          %v1789 = vpack.c.b16 %v1734, %v1733
          %v1790 = vpack.c.b16 %v1736, %v1735
          %v1791 = vpack.c.b16 %v1738, %v1737
          %v1792 = vpack.c.b16 %v1740, %v1739
          %v1793 = vpack.c.b16 %v1742, %v1741
          %v1794 = vpack.c.b16 %v1744, %v1743
          %v1795 = vpack.c.b16 %v1746, %v1745
          %v1796 = vpack.c.b16 %v1748, %v1747
          %v1797 = vpack.c.b16 %v1750, %v1749
          %v1798 = vpack.c.b16 %v1752, %v1751
          %v1799 = vpack.c.b16 %v1754, %v1753
          %v1800 = vpack.c.b16 %v1756, %v1755
          %v1801 = vpack.c.b16 %v1758, %v1757
          %v1802 = vpack.c.b16 %v1760, %v1759
          %v1803 = vpack.c.b16 %v1762, %v1761
          %v1804 = vpack.c.b16 %v1764, %v1763
          %v1805 = vpack.c.b16 %v1766, %v1765
          %v1806 = vpack.c.b16 %v1768, %v1767
          %v1807 = vpack.c.b16 %v1770, %v1769
          %v1808 = vpack.c.b16 %v1772, %v1771
          %v1809 = vpack.c.b16 %v1774, %v1773
          %v1810 = vpack.c.b16 %v1776, %v1775
          %v1811 = vpack.c.b16 %v1778, %v1777
          %v1812 = vpack.c.b16 %v1780, %v1779
          %1845 = vmatprep.subr.bf16.mxu0 0
          %1846 = vmatpush1.bf16.msra.mxu0 %v1781
          %1847 = vmatprep.subr.bf16.mxu0 0
          %1848 = vmatpush1.bf16.msra.mxu0 %v1782
          %1849 = vmatprep.subr.bf16.mxu0 0
          %1850 = vmatpush1.bf16.msra.mxu0 %v1783
          %1851 = vmatprep.subr.bf16.mxu0 0
          %1852 = vmatpush1.bf16.msra.mxu0 %v1784
          %1853 = vmatprep.subr.bf16.mxu0 0
          %1854 = vmatpush1.bf16.msra.mxu0 %v1785
          %1855 = vmatprep.subr.bf16.mxu0 0
          %1856 = vmatpush1.bf16.msra.mxu0 %v1786
          %1857 = vmatprep.subr.bf16.mxu0 0
          %1858 = vmatpush1.bf16.msra.mxu0 %v1787
          %1859 = vmatprep.subr.bf16.mxu0 0
          %1860 = vmatpush1.bf16.msra.mxu0 %v1788
          %1861 = vmatprep.subr.bf16.mxu0 0
          %1862 = vmatpush1.bf16.msra.mxu0 %v1789
          %1863 = vmatprep.subr.bf16.mxu0 0
          %1864 = vmatpush1.bf16.msra.mxu0 %v1790
          %1865 = vmatprep.subr.bf16.mxu0 0
          %1866 = vmatpush1.bf16.msra.mxu0 %v1791
          %1867 = vmatprep.subr.bf16.mxu0 0
          %1868 = vmatpush1.bf16.msra.mxu0 %v1792
          %1869 = vmatprep.subr.bf16.mxu0 0
          %1870 = vmatpush1.bf16.msra.mxu0 %v1793
          %1871 = vmatprep.subr.bf16.mxu0 0
          %1872 = vmatpush1.bf16.msra.mxu0 %v1794
          %1873 = vmatprep.subr.bf16.mxu0 0
          %1874 = vmatpush1.bf16.msra.mxu0 %v1795
          %1875 = vmatprep.subr.bf16.mxu0 0
          %1876 = vmatpush1.bf16.msra.mxu0 %v1796
          %1877 = vmatprep.mubr.bf16.mxu0 %v1579
          %1878 = vmatmul.mubr.bf16.gmra.mrb[0].mxu0 %v1578
          %v1879 = vpop.f32.mrb[0].mxu0
          %v1880 = vadd.f32 %v1651, %v1879
          %v1881 = vpop.f32.mrb[0].mxu0
          %v1882 = vpop.f32.mrb[0].mxu0
          %v1883 = vpop.f32.mrb[0].mxu0
          %1884 = vdwg.mxu0
          %1885 = vmatprep.subr.bf16.mxu0 0
          %1886 = vmatpush1.bf16.msra.mxu0 %v1797
          %1887 = vmatprep.subr.bf16.mxu0 0
          %1888 = vmatpush1.bf16.msra.mxu0 %v1798
          %1889 = vmatprep.subr.bf16.mxu0 0
          %1890 = vmatpush1.bf16.msra.mxu0 %v1799
          %1891 = vmatprep.subr.bf16.mxu0 0
          %1892 = vmatpush1.bf16.msra.mxu0 %v1800
          %1893 = vmatprep.subr.bf16.mxu0 0
          %1894 = vmatpush1.bf16.msra.mxu0 %v1801
          %1895 = vmatprep.subr.bf16.mxu0 0
          %1896 = vmatpush1.bf16.msra.mxu0 %v1802
          %1897 = vmatprep.subr.bf16.mxu0 0
          %1898 = vmatpush1.bf16.msra.mxu0 %v1803
          %1899 = vmatprep.subr.bf16.mxu0 0
          %1900 = vmatpush1.bf16.msra.mxu0 %v1804
          %1901 = vmatprep.subr.bf16.mxu0 0
          %1902 = vmatpush1.bf16.msra.mxu0 %v1805
          %1903 = vmatprep.subr.bf16.mxu0 0
          %1904 = vmatpush1.bf16.msra.mxu0 %v1806
          %1905 = vmatprep.subr.bf16.mxu0 0
          %1906 = vmatpush1.bf16.msra.mxu0 %v1807
          %1907 = vmatprep.subr.bf16.mxu0 0
          %1908 = vmatpush1.bf16.msra.mxu0 %v1808
          %1909 = vmatprep.subr.bf16.mxu0 0
          %1910 = vmatpush1.bf16.msra.mxu0 %v1809
          %1911 = vmatprep.subr.bf16.mxu0 0
          %1912 = vmatpush1.bf16.msra.mxu0 %v1810
          %1913 = vmatprep.subr.bf16.mxu0 0
          %1914 = vmatpush1.bf16.msra.mxu0 %v1811
          %1915 = vmatprep.subr.bf16.mxu0 0
          %1916 = vmatpush1.bf16.msra.mxu0 %v1812
          %1917 = vmatprep.mubr.bf16.mxu0 %v1581
          %1918 = vmatmul.mubr.bf16.gmra.mrb[0].mxu0 %v1580
          %v1919 = vpop.f32.mrb[0].mxu0
          %v1920 = vadd.f32 %v1880, %v1919
          %v1921 = vpop.f32.mrb[0].mxu0
          %v1922 = vpop.f32.mrb[0].mxu0
          %v1923 = vpop.f32.mrb[0].mxu0
          %1924 = vdwg.mxu0
          %1925 = vst [vmem:[#allocation3] sm:$0x3] %v1920
        $region48: #{dqn_forward.7} parent=39 // pred_fallthru
          _
        // Predicated region
        $region49: #{dqn_forward.7} parent=39 // pred_check
          %p1926 = pneg %p145
        $region50: #{dqn_forward.7} parent=39 // pred_check_branch
          %1928 = sbr.rel (%p1926) target = $region52
        $region51: #{dqn_forward.7} parent=39 // pred_region
          %s1930 = ssub.s32 32, 32
          %1931 = vsyncadd [#allocation4], %s1930
          %s1933 = sshll.u32 [#allocation3], 4
          %s1934 = int_to_ptr.vmem [resolvable:$true] %s1933
          %1936 = dma.vmem_to_hbm [thread:$0]  %s1934, 32, %s5, [#allocation4]
        $region52: #{dqn_forward.7} parent=39 // pred_fallthru
          _
        // Predicated region
        $region53: #{dqn_forward.7} parent=39 // pred_check
          %p1937 = pneg %p145
        $region54: #{dqn_forward.7} parent=39 // pred_check_branch
          %1939 = sbr.rel (%p1937) target = $region56
        $region55: #{dqn_forward.7} parent=39 // pred_region
          %1940 = dma.done [#allocation4], 32
        $region56: #{dqn_forward.7} parent=39 // pred_fallthru
          _
      $region40: #{dqn_forward.7} parent=5 // pred_fallthru
        _
      %p1941 = scmp.le.s32.totalorder 2, %s12
      // Predicated region
      $region57: #{dqn_forward.7} parent=5 // pred_check
        %p1942 = pneg %p1941
      $region58: #{dqn_forward.7} parent=5 // pred_check_branch
        %1944 = sbr.rel (%p1942) target = $region60
      $region59: #{dqn_forward.7} parent=5 // pred_region
        %s1945 = ssub.s32 %s12, 2
      $region60: #{dqn_forward.7} parent=5 // pred_fallthru
        _
    $region6: #{dqn_forward.7} parent=1 // loop_footer
      %s16 = sadd.s32 1, %s12
    $region7: #{dqn_forward.7} parent=1 // loop_footer_branch
      %11 = sbr.rel target = $region3
    $region8: #{dqn_forward.7} parent=1 // loop_exit
      _
    %1946 = vsyncpa [#allocation4], 1
    %s1947 = scalar_lea.sflag [#allocation4], 1
    %1948 = vsyncpa %s1947, 1

</llo_original>
